<compile_context>
chip_gen: v7x
topology: tpu7x:2x2x1
jax: 0.10.0
libtpu: 0.0.40
codegen_flags: <defaults>
</compile_context>

<pallas_src>
import jax
import jax.numpy as jnp
import numpy as np
from jax import lax
from jax.experimental import pallas as pl
from jax.experimental.pallas import tpu as pltpu

# WIDTH / HEIGHT are imported constants in the original repo; pick values that
# keep the conv arithmetic valid: ((32-11+1)//2 - 5 + 1)//2 = 3.
WIDTH = 32
HEIGHT = 32
FIRST_KERNEL_SIZE = 11
SECOND_KERNEL_SIZE = 5
BATCH = 2

C_IN, C1, C2 = 3, 6, 16
OH1 = HEIGHT - FIRST_KERNEL_SIZE + 1           # 22
OW1 = WIDTH - FIRST_KERNEL_SIZE + 1            # 22
PH1, PW1 = OH1 // 2, OW1 // 2                  # 11, 11
PH2 = (PH1 - SECOND_KERNEL_SIZE + 1) // 2      # 3
PW2 = (PW1 - SECOND_KERNEL_SIZE + 1) // 2      # 3
FC1_IN = C2 * PH2 * PW2                        # 144

FC1_OUT, ROT_IN, ROT_OUT = 120, 9, 3
FC2_OUT, BIL_OUT, N_OUT = 60, 24, 3

# lane-aligned (128) packing widths
CHUNK1 = 128                                   # >= C1 * PW1 = 66 (conv1 pool chunk)
CHUNK2 = 128                                   # >= C2 * PW2 = 48 (conv2 pool chunk)
ROT_PAD = 128
HID = 128                                      # padded width of head/tail stages

W1_ROWS = (FIRST_KERNEL_SIZE + 1) * C_IN * WIDTH      # 1152
W2_ROWS = (SECOND_KERNEL_SIZE + 1) * CHUNK1           # 768
HEAD_ROWS = PH2 * CHUNK2 + ROT_PAD                    # 512
TAIL_FC2_OFF = HEAD_ROWS                              # 512
TAIL_BIL_OFF = TAIL_FC2_OFF + HID                     # 640
TAIL_FIN_OFF = TAIL_BIL_OFF + 3 * HID                 # 1024
TAIL_ROWS = TAIL_FIN_OFF + HID                        # 1152

# static sanity checks for the fused conv+pool (pool-parity) packing
assert CHUNK1 == CHUNK2
assert C1 * PW1 <= CHUNK1 and C2 * PW2 <= CHUNK2
assert HEIGHT >= 2 * PH1 + FIRST_KERNEL_SIZE - 1
assert WIDTH >= 2 * PW1 + FIRST_KERNEL_SIZE - 1
assert PH1 >= 2 * PH2 + SECOND_KERNEL_SIZE - 1
assert PW1 >= 2 * PW2 + SECOND_KERNEL_SIZE - 1
assert FC1_IN == C2 * PH2 * PW2
assert FC1_OUT + ROT_OUT <= HID and ROT_IN <= ROT_PAD


def _vmem_spec():
    return pl.BlockSpec(memory_space=pltpu.MemorySpace.VMEM)


# ---------------------------------------------------------------- kernel -----

def net_kernel(lhs1_ref, rot_ref, convw_ref, tailw_ref, bias_ref, o_ref):
    """Full Net forward for the whole (small) batch, one grid-less call in VMEM."""
    bsz = o_ref.shape[0]

    # ---- conv1 + ReLU + 2x2 max-pool: one batched matmul, 4-way max over
    #      lane-aligned 128-wide pool-parity chunks (pure VPU, no lane rotates).
    y1 = jnp.dot(lhs1_ref[...], convw_ref[0:W1_ROWS, :],
                 preferred_element_type=jnp.float32)
    y1 = jnp.maximum(y1 + bias_ref[0:1, :], 0.0)                       # (PH1*B, 4*CHUNK1)
    p1 = jnp.maximum(jnp.maximum(y1[:, 0:CHUNK1], y1[:, CHUNK1:2 * CHUNK1]),
                     jnp.maximum(y1[:, 2 * CHUNK1:3 * CHUNK1], y1[:, 3 * CHUNK1:4 * CHUNK1]))
    # p1 rows ordered (pool-row-parity, y_half, batch); cols (c1, X) zero-padded to 128.

    # ---- conv2 lhs: 6 contiguous, lane-aligned (PH2*B)-row slices of p1 ----
    n_even = ((PH1 + 1) // 2) * bsz
    starts = [(e // 2) * bsz if e % 2 == 0 else n_even + (e // 2) * bsz
              for e in range(SECOND_KERNEL_SIZE + 1)]
    lhs2 = jnp.concatenate([p1[s:s + PH2 * bsz, :] for s in starts], axis=-1)  # (PH2*B, 768)

    # ---- conv2 + ReLU + 2x2 max-pool (same trick) ----
    y2 = jnp.dot(lhs2, convw_ref[W1_ROWS:W1_ROWS + W2_ROWS, :],
                 preferred_element_type=jnp.float32)
    y2 = jnp.maximum(y2 + bias_ref[1:2, :], 0.0)                       # (PH2*B, 4*CHUNK2)
    p2 = jnp.maximum(jnp.maximum(y2[:, 0:CHUNK2], y2[:, CHUNK2:2 * CHUNK2]),
                     jnp.maximum(y2[:, 2 * CHUNK2:3 * CHUNK2], y2[:, 3 * CHUNK2:4 * CHUNK2]))
    # p2 rows ordered (Y2, batch); cols (c2, X2) zero-padded to 128.

    # ---- flatten to (B, PH2*128) and append the lane-padded rot input ----
    feat = jnp.concatenate([p2[y * bsz:(y + 1) * bsz, :] for y in range(PH2)], axis=-1)
    xin = jnp.concatenate([feat, rot_ref[...]], axis=-1)               # (B, HEAD_ROWS)

    # ---- fused [fc1 | rot] -> fc2 -> bilinear -> final linear ----
    h1r = jnp.maximum(
        jnp.dot(xin, tailw_ref[0:TAIL_FC2_OFF, :], preferred_element_type=jnp.float32)
        + bias_ref[2:3, 0:HID], 0.0)                                   # (B,128): fc1|rot|0
    h2 = jnp.maximum(
        jnp.dot(h1r, tailw_ref[TAIL_FC2_OFF:TAIL_BIL_OFF, :],
                preferred_element_type=jnp.float32) + bias_ref[3:4, 0:HID], 0.0)  # (B,128)
    r = h1r[:, FC1_OUT:FC1_OUT + ROT_OUT]                              # (B, 3)
    outer = jnp.concatenate([r[:, i:i + 1] * h2 for i in range(ROT_OUT)], axis=-1)  # (B, 384)
    bil = jnp.dot(outer, tailw_ref[TAIL_BIL_OFF:TAIL_FIN_OFF, :],
                  preferred_element_type=jnp.float32) + bias_ref[4:5, 0:HID]
    act = jnp.maximum(bil, 0.0)                                        # (B, 128)
    out = (jnp.dot(act, tailw_ref[TAIL_FIN_OFF:TAIL_ROWS, :],
                   preferred_element_type=jnp.float32) + bias_ref[5:6, 0:HID])
    o_ref[...] = out[:, 0:N_OUT]


# --------------------------------------------------------------- wrapper -----

def _build_lhs1(x_img):
    """Wrapper-side im2col for the fused conv1+relu+pool matmul.

    Rows: (pool-row-parity, y_half, batch); cols: (e, ci, w), e = parity + kernel row.
    lhs1[(p, yh, b), (e, ci, w)] = x_img[b, ci, 2*(2*yh + p) + e, w].
    """
    bsz = x_img.shape[0]
    blocks = []
    for par in range(2):
        n_y = (PH1 + 1 - par) // 2
        cols = []
        for e in range(FIRST_KERNEL_SIZE + 1):
            start = 2 * par + e
            sl = x_img[:, :, start:start + 4 * (n_y - 1) + 1:4, :]     # (B, C_IN, n_y, W)
            cols.append(sl.transpose(2, 0, 1, 3).reshape(n_y * bsz, C_IN * WIDTH))
        blocks.append(jnp.concatenate(cols, axis=-1))
    return jnp.concatenate(blocks, axis=0)                             # (PH1*B, 1152)


@jax.jit
def forward_pallas(x_rot, x_img, conv_w, tail_w, bias):
    bsz = x_img.shape[0]
    lhs1 = _build_lhs1(x_img)
    rot_pad = jnp.pad(x_rot.reshape(bsz, ROT_IN), ((0, 0), (0, ROT_PAD - ROT_IN)))
    # TODO(synk): on v7x, a grid=(B,) with dimension_semantics=("parallel",) would shard batch
    # across the two TensorCores; skipped at B=2 (and harmful on single-TC v5e/v6e).
    # TODO(synk): for larger batches, grid over batch tiles with block-constant weight specs
    # (and optionally bf16 weight slabs) so the dominant weight DMA is amortized/pipelined.
    return pl.pallas_call(
        net_kernel,
        out_shape=jax.ShapeDtypeStruct((bsz, N_OUT), jnp.float32),
        in_specs=[_vmem_spec()] * 5,
        out_specs=_vmem_spec(),
    )(lhs1, rot_pad, conv_w, tail_w, bias)


# ----------------------------------------------------- parameter packing -----

def _pack_conv_weight(w, w_in, pw_out, chunk_pad):
    """Pack (Cout, Cin, K, K) conv into a fused conv+relu+2x2-pool matmul weight.

    Rows: (e, ci, w) with e = pool-row-parity + kernel-row (0..K), w in 0..w_in-1.
    Cols: 4 chunks of width chunk_pad (chunk sr = 2*s + r); within-chunk col = co*pw_out + X.
    """
    wnp = np.asarray(w, np.float32)
    cout, cin, k, _ = wnp.shape
    big = np.zeros((k + 1, cin, w_in, 4, cout, pw_out), np.float32)
    blk = [np.transpose(wnp[:, :, dh, :], (1, 2, 0)) for dh in range(k)]    # (cin, dw, cout)
    for s in range(2):
        for r in range(2):
            sr = 2 * s + r
            for X in range(pw_out):
                w0 = 2 * X + r
                for dh in range(k):
                    big[s + dh, :, w0:w0 + k, sr, :, X] = blk[dh]
    big = big.reshape((k + 1) * cin * w_in, 4, cout * pw_out)
    big = np.pad(big, ((0, 0), (0, 0), (0, chunk_pad - cout * pw_out)))
    return big.reshape((k + 1) * cin * w_in, 4 * chunk_pad)


def _pool_bias_row(bias, pw_out, chunk_pad):
    b = np.repeat(np.asarray(bias, np.float32), pw_out)
    b = np.pad(b, (0, chunk_pad - b.size))
    return np.tile(b, 4)


def init_params(key):
    ks = jax.random.split(key, 14)

    def u(k, shape, scale=0.08):
        return jax.random.uniform(k, shape, jnp.float32, -1.0, 1.0) * scale

    # PyTorch-layout parameters
    w1 = u(ks[0], (C1, C_IN, FIRST_KERNEL_SIZE, FIRST_KERNEL_SIZE)); b1 = u(ks[1], (C1,))
    w2 = u(ks[2], (C2, C1, SECOND_KERNEL_SIZE, SECOND_KERNEL_SIZE)); b2 = u(ks[3], (C2,))
    fc1 = u(ks[4], (FC1_OUT, FC1_IN)); fc1_b = u(ks[5], (FC1_OUT,))
    fc2 = u(ks[6], (FC2_OUT, FC1_OUT)); fc2_b = u(ks[7], (FC2_OUT,))
    rot = u(ks[8], (ROT_OUT, ROT_IN)); rot_b = u(ks[9], (ROT_OUT,))
    bil = u(ks[10], (BIL_OUT, ROT_OUT, FC2_OUT)); bil_b = u(ks[11], (BIL_OUT,))
    fin = u(ks[12], (N_OUT, BIL_OUT)); fin_b = u(ks[13], (N_OUT,))

    p = dict(w1=w1, b1=b1, w2=w2, b2=b2, fc1=fc1, fc1_b=fc1_b, fc2=fc2, fc2_b=fc2_b,
             rot=rot, rot_b=rot_b, bil=bil, bil_b=bil_b, fin=fin, fin_b=fin_b)

    # ---- conv weight slab (Toeplitz + pool-parity, 128-lane-aligned chunks) ----
    w1_big = _pack_conv_weight(w1, WIDTH, PW1, CHUNK1)                  # (1152, 512)
    w2_big = _pack_conv_weight(w2, PW1, PW2, CHUNK2)                    # (396, 512)
    # pad each e2 row block from C1*PW1=66 to CHUNK1=128 so lhs2 is built from the
    # 128-wide (zero-padded) p1 directly.
    w2_big = w2_big.reshape(SECOND_KERNEL_SIZE + 1, C1 * PW1, 4 * CHUNK2)
    w2_big = np.pad(w2_big, ((0, 0), (0, CHUNK1 - C1 * PW1), (0, 0)))
    w2_big = w2_big.reshape(W2_ROWS, 4 * CHUNK2)
    p["conv_w"] = jnp.asarray(np.concatenate([w1_big, w2_big], axis=0))  # (1920, 512)

    # ---- head/tail weight slab (all 128-lane wide) ----
    head_w = np.zeros((HEAD_ROWS, HID), np.float32)      # block-diagonal [fc1 | rot]
    fc1_np = np.asarray(fc1, np.float32)
    for y in range(PH2):
        for co in range(C2):
            for x in range(PW2):
                head_w[y * CHUNK2 + co * PW2 + x, :FC1_OUT] = \
                    fc1_np[:, co * PH2 * PW2 + y * PW2 + x]
    head_w[PH2 * CHUNK2:PH2 * CHUNK2 + ROT_IN, FC1_OUT:FC1_OUT + ROT_OUT] = \
        np.asarray(rot, np.float32).T

    fc2_w = np.zeros((HID, HID), np.float32)
    fc2_w[:FC1_OUT, :FC2_OUT] = np.asarray(fc2, np.float32).T

    bil_w = np.zeros((3 * HID, HID), np.float32)
    bil_np = np.asarray(bil, np.float32)
    for i in range(ROT_OUT):
        bil_w[i * HID:i * HID + FC2_OUT, :BIL_OUT] = bil_np[:, i, :].T

    fin_w = np.zeros((HID, HID), np.float32)
    fin_w[:BIL_OUT, :N_OUT] = np.asarray(fin, np.float32).T

    p["tail_w"] = jnp.asarray(np.concatenate([head_w, fc2_w, bil_w, fin_w], axis=0))  # (1152,128)

    # ---- all biases packed into a single (8, 512) tile ----
    bias = np.zeros((8, 4 * CHUNK1), np.float32)
    bias[0] = _pool_bias_row(b1, PW1, CHUNK1)
    bias[1] = _pool_bias_row(b2, PW2, CHUNK2)
    bias[2, :FC1_OUT] = np.asarray(fc1_b)
    bias[2, FC1_OUT:FC1_OUT + ROT_OUT] = np.asarray(rot_b)
    bias[3, :FC2_OUT] = np.asarray(fc2_b)
    bias[4, :BIL_OUT] = np.asarray(bil_b)
    bias[5, :N_OUT] = np.asarray(fin_b)
    p["bias"] = jnp.asarray(bias)
    return p


# --------------------------------------------------------------- reference ---

def forward_reference(x_rot, x_img, p):
    """Pure-JAX reference mirroring the PyTorch forward."""
    bsz = x_img.shape[0]
    dn = ("NCHW", "OIHW", "NCHW")
    y = lax.conv_general_dilated(x_img, p["w1"], (1, 1), "VALID",
                                 dimension_numbers=dn) + p["b1"][None, :, None, None]
    y = jnp.maximum(y, 0.0)
    y = lax.reduce_window(y, -jnp.inf, lax.max, (1, 1, 2, 2), (1, 1, 2, 2), "VALID")
    y = lax.conv_general_dilated(y, p["w2"], (1, 1), "VALID",
                                 dimension_numbers=dn) + p["b2"][None, :, None, None]
    y = jnp.maximum(y, 0.0)
    y = lax.reduce_window(y, -jnp.inf, lax.max, (1, 1, 2, 2), (1, 1, 2, 2), "VALID")
    feat = y.reshape(bsz, -1)
    h1 = jnp.maximum(feat @ p["fc1"].T + p["fc1_b"], 0.0)
    h2 = jnp.maximum(h1 @ p["fc2"].T + p["fc2_b"], 0.0)
    r = jnp.maximum(x_rot.reshape(bsz, ROT_IN) @ p["rot"].T + p["rot_b"], 0.0)
    bil = jnp.einsum("bi,oij,bj->bo", r, p["bil"], h2) + p["bil_b"]
    return jnp.maximum(bil, 0.0) @ p["fin"].T + p["fin_b"]


# --------------------------------------------------------------------- main --

if __name__ == "__main__":
    key = jax.random.PRNGKey(0)
    k_rot, k_img, k_par = jax.random.split(key, 3)
    x_rot = jax.random.normal(k_rot, (BATCH, 3, 3), jnp.float32)
    x_img = jax.random.normal(k_img, (BATCH, C_IN, HEIGHT, WIDTH), jnp.float32)
    params = init_params(k_par)

    out = forward_pallas(x_rot, x_img, params["conv_w"], params["tail_w"], params["bias"])
    out = jax.block_until_ready(out)

    ref = forward_reference(x_rot, x_img, params)
    assert out.shape == (BATCH, N_OUT), out.shape
    assert jnp.allclose(out, ref, rtol=1e-3, atol=1e-3), (out, ref)
    print("KERNEL_OK")
</pallas_src>

<mosaic_0001>
module attributes {stable_mosaic.version = 11 : i64} {
  func.func @net_kernel(%arg0: memref<22x1152xf32, #tpu.memory_space<vmem>>, %arg1: memref<2x128xf32, #tpu.memory_space<vmem>>, %arg2: memref<1920x512xf32, #tpu.memory_space<vmem>>, %arg3: memref<1152x128xf32, #tpu.memory_space<vmem>>, %arg4: memref<8x512xf32, #tpu.memory_space<vmem>>, %arg5: memref<2x3xf32, #tpu.memory_space<vmem>>) attributes {dimension_semantics = [], scalar_prefetch = 0 : i64, scratch_operands = 0 : i64, tpu.core_type = #tpu.core_type<tc>} {
    %c0 = arith.constant 0 : index
    %c0_0 = arith.constant 0 : index
    %0 = vector.load %arg0[%c0, %c0_0] : memref<22x1152xf32, #tpu.memory_space<vmem>>, vector<22x1152xf32>
    %c0_1 = arith.constant 0 : index
    %c0_2 = arith.constant 0 : index
    %1 = vector.load %arg2[%c0_1, %c0_2] : memref<1920x512xf32, #tpu.memory_space<vmem>>, vector<1152x512xf32>
    %cst = arith.constant dense<0.000000e+00> : vector<22x512xf32>
    %2 = tpu.matmul %0, %1, %cst {dimension_numbers = #tpu.dot_dimension_numbers<[1], [0], [0], [1], [0, 0, 1, 1], [], []>} : vector<22x1152xf32>, vector<1152x512xf32>, vector<22x512xf32> -> vector<22x512xf32>
    %c0_3 = arith.constant 0 : index
    %c0_4 = arith.constant 0 : index
    %3 = vector.load %arg4[%c0_3, %c0_4] : memref<8x512xf32, #tpu.memory_space<vmem>>, vector<1x512xf32>
    %4 = vector.broadcast %3 : vector<1x512xf32> to vector<22x512xf32>
    %5 = arith.addf %2, %4 : vector<22x512xf32>
    %cst_5 = arith.constant 0.000000e+00 : f32
    %6 = vector.broadcast %cst_5 : f32 to vector<22x512xf32>
    %7 = arith.maximumf %5, %6 : vector<22x512xf32>
    %8 = vector.extract_strided_slice %7 {offsets = [0, 0], sizes = [22, 128], strides = [1, 1]} : vector<22x512xf32> to vector<22x128xf32>
    %9 = vector.extract_strided_slice %7 {offsets = [0, 128], sizes = [22, 128], strides = [1, 1]} : vector<22x512xf32> to vector<22x128xf32>
    %10 = arith.maximumf %8, %9 : vector<22x128xf32>
    %11 = vector.extract_strided_slice %7 {offsets = [0, 256], sizes = [22, 128], strides = [1, 1]} : vector<22x512xf32> to vector<22x128xf32>
    %12 = vector.extract_strided_slice %7 {offsets = [0, 384], sizes = [22, 128], strides = [1, 1]} : vector<22x512xf32> to vector<22x128xf32>
    %13 = arith.maximumf %11, %12 : vector<22x128xf32>
    %14 = arith.maximumf %10, %13 : vector<22x128xf32>
    %15 = vector.extract_strided_slice %14 {offsets = [0, 0], sizes = [6, 128], strides = [1, 1]} : vector<22x128xf32> to vector<6x128xf32>
    %16 = vector.extract_strided_slice %14 {offsets = [12, 0], sizes = [6, 128], strides = [1, 1]} : vector<22x128xf32> to vector<6x128xf32>
    %17 = vector.extract_strided_slice %14 {offsets = [2, 0], sizes = [6, 128], strides = [1, 1]} : vector<22x128xf32> to vector<6x128xf32>
    %18 = vector.extract_strided_slice %14 {offsets = [14, 0], sizes = [6, 128], strides = [1, 1]} : vector<22x128xf32> to vector<6x128xf32>
    %19 = vector.extract_strided_slice %14 {offsets = [4, 0], sizes = [6, 128], strides = [1, 1]} : vector<22x128xf32> to vector<6x128xf32>
    %20 = vector.extract_strided_slice %14 {offsets = [16, 0], sizes = [6, 128], strides = [1, 1]} : vector<22x128xf32> to vector<6x128xf32>
    %21 = tpu.concatenate %15, %16, %17, %18, %19, %20 in 1 : vector<6x128xf32>, vector<6x128xf32>, vector<6x128xf32>, vector<6x128xf32>, vector<6x128xf32>, vector<6x128xf32> -> vector<6x768xf32>
    %c1152 = arith.constant 1152 : index
    %c0_6 = arith.constant 0 : index
    %22 = vector.load %arg2[%c1152, %c0_6] : memref<1920x512xf32, #tpu.memory_space<vmem>>, vector<768x512xf32>
    %cst_7 = arith.constant dense<0.000000e+00> : vector<6x512xf32>
    %23 = tpu.matmul %21, %22, %cst_7 {dimension_numbers = #tpu.dot_dimension_numbers<[1], [0], [0], [1], [0, 0, 1, 1], [], []>} : vector<6x768xf32>, vector<768x512xf32>, vector<6x512xf32> -> vector<6x512xf32>
    %c1 = arith.constant 1 : index
    %c0_8 = arith.constant 0 : index
    %24 = vector.load %arg4[%c1, %c0_8] : memref<8x512xf32, #tpu.memory_space<vmem>>, vector<1x512xf32>
    %25 = vector.broadcast %24 : vector<1x512xf32> to vector<6x512xf32>
    %26 = arith.addf %23, %25 : vector<6x512xf32>
    %cst_9 = arith.constant 0.000000e+00 : f32
    %27 = vector.broadcast %cst_9 : f32 to vector<6x512xf32>
    %28 = arith.maximumf %26, %27 : vector<6x512xf32>
    %29 = vector.extract_strided_slice %28 {offsets = [0, 0], sizes = [6, 128], strides = [1, 1]} : vector<6x512xf32> to vector<6x128xf32>
    %30 = vector.extract_strided_slice %28 {offsets = [0, 128], sizes = [6, 128], strides = [1, 1]} : vector<6x512xf32> to vector<6x128xf32>
    %31 = arith.maximumf %29, %30 : vector<6x128xf32>
    %32 = vector.extract_strided_slice %28 {offsets = [0, 256], sizes = [6, 128], strides = [1, 1]} : vector<6x512xf32> to vector<6x128xf32>
    %33 = vector.extract_strided_slice %28 {offsets = [0, 384], sizes = [6, 128], strides = [1, 1]} : vector<6x512xf32> to vector<6x128xf32>
    %34 = arith.maximumf %32, %33 : vector<6x128xf32>
    %35 = arith.maximumf %31, %34 : vector<6x128xf32>
    %36 = vector.extract_strided_slice %35 {offsets = [0, 0], sizes = [2, 128], strides = [1, 1]} : vector<6x128xf32> to vector<2x128xf32>
    %37 = vector.extract_strided_slice %35 {offsets = [2, 0], sizes = [2, 128], strides = [1, 1]} : vector<6x128xf32> to vector<2x128xf32>
    %38 = vector.extract_strided_slice %35 {offsets = [4, 0], sizes = [2, 128], strides = [1, 1]} : vector<6x128xf32> to vector<2x128xf32>
    %39 = tpu.concatenate %36, %37, %38 in 1 : vector<2x128xf32>, vector<2x128xf32>, vector<2x128xf32> -> vector<2x384xf32>
    %c0_10 = arith.constant 0 : index
    %c0_11 = arith.constant 0 : index
    %40 = vector.load %arg1[%c0_10, %c0_11] : memref<2x128xf32, #tpu.memory_space<vmem>>, vector<2x128xf32>
    %41 = tpu.concatenate %39, %40 in 1 : vector<2x384xf32>, vector<2x128xf32> -> vector<2x512xf32>
    %c0_12 = arith.constant 0 : index
    %c0_13 = arith.constant 0 : index
    %42 = vector.load %arg3[%c0_12, %c0_13] : memref<1152x128xf32, #tpu.memory_space<vmem>>, vector<512x128xf32>
    %cst_14 = arith.constant dense<0.000000e+00> : vector<2x128xf32>
    %43 = tpu.matmul %41, %42, %cst_14 {dimension_numbers = #tpu.dot_dimension_numbers<[1], [0], [0], [1], [0, 0, 1, 1], [], []>} : vector<2x512xf32>, vector<512x128xf32>, vector<2x128xf32> -> vector<2x128xf32>
    %c2 = arith.constant 2 : index
    %c0_15 = arith.constant 0 : index
    %44 = vector.load %arg4[%c2, %c0_15] : memref<8x512xf32, #tpu.memory_space<vmem>>, vector<1x128xf32>
    %45 = vector.broadcast %44 : vector<1x128xf32> to vector<2x128xf32>
    %46 = arith.addf %43, %45 : vector<2x128xf32>
    %cst_16 = arith.constant 0.000000e+00 : f32
    %47 = vector.broadcast %cst_16 : f32 to vector<2x128xf32>
    %48 = arith.maximumf %46, %47 : vector<2x128xf32>
    %c512 = arith.constant 512 : index
    %c0_17 = arith.constant 0 : index
    %49 = vector.load %arg3[%c512, %c0_17] : memref<1152x128xf32, #tpu.memory_space<vmem>>, vector<128x128xf32>
    %cst_18 = arith.constant dense<0.000000e+00> : vector<2x128xf32>
    %50 = tpu.matmul %48, %49, %cst_18 {dimension_numbers = #tpu.dot_dimension_numbers<[1], [0], [0], [1], [0, 0, 1, 1], [], []>} : vector<2x128xf32>, vector<128x128xf32>, vector<2x128xf32> -> vector<2x128xf32>
    %c3 = arith.constant 3 : index
    %c0_19 = arith.constant 0 : index
    %51 = vector.load %arg4[%c3, %c0_19] : memref<8x512xf32, #tpu.memory_space<vmem>>, vector<1x128xf32>
    %52 = vector.broadcast %51 : vector<1x128xf32> to vector<2x128xf32>
    %53 = arith.addf %50, %52 : vector<2x128xf32>
    %cst_20 = arith.constant 0.000000e+00 : f32
    %54 = vector.broadcast %cst_20 : f32 to vector<2x128xf32>
    %55 = arith.maximumf %53, %54 : vector<2x128xf32>
    %56 = vector.extract_strided_slice %48 {offsets = [0, 120], sizes = [2, 3], strides = [1, 1]} : vector<2x128xf32> to vector<2x3xf32>
    %57 = vector.extract_strided_slice %56 {offsets = [0, 0], sizes = [2, 1], strides = [1, 1]} : vector<2x3xf32> to vector<2x1xf32>
    %58 = vector.broadcast %57 : vector<2x1xf32> to vector<2x128xf32>
    %59 = arith.mulf %58, %55 : vector<2x128xf32>
    %60 = vector.extract_strided_slice %56 {offsets = [0, 1], sizes = [2, 1], strides = [1, 1]} : vector<2x3xf32> to vector<2x1xf32>
    %61 = vector.broadcast %60 : vector<2x1xf32> to vector<2x128xf32>
    %62 = arith.mulf %61, %55 : vector<2x128xf32>
    %63 = vector.extract_strided_slice %56 {offsets = [0, 2], sizes = [2, 1], strides = [1, 1]} : vector<2x3xf32> to vector<2x1xf32>
    %64 = vector.broadcast %63 : vector<2x1xf32> to vector<2x128xf32>
    %65 = arith.mulf %64, %55 : vector<2x128xf32>
    %66 = tpu.concatenate %59, %62, %65 in 1 : vector<2x128xf32>, vector<2x128xf32>, vector<2x128xf32> -> vector<2x384xf32>
    %c640 = arith.constant 640 : index
    %c0_21 = arith.constant 0 : index
    %67 = vector.load %arg3[%c640, %c0_21] : memref<1152x128xf32, #tpu.memory_space<vmem>>, vector<384x128xf32>
    %cst_22 = arith.constant dense<0.000000e+00> : vector<2x128xf32>
    %68 = tpu.matmul %66, %67, %cst_22 {dimension_numbers = #tpu.dot_dimension_numbers<[1], [0], [0], [1], [0, 0, 1, 1], [], []>} : vector<2x384xf32>, vector<384x128xf32>, vector<2x128xf32> -> vector<2x128xf32>
    %c4 = arith.constant 4 : index
    %c0_23 = arith.constant 0 : index
    %69 = vector.load %arg4[%c4, %c0_23] : memref<8x512xf32, #tpu.memory_space<vmem>>, vector<1x128xf32>
    %70 = vector.broadcast %69 : vector<1x128xf32> to vector<2x128xf32>
    %71 = arith.addf %68, %70 : vector<2x128xf32>
    %cst_24 = arith.constant 0.000000e+00 : f32
    %72 = vector.broadcast %cst_24 : f32 to vector<2x128xf32>
    %73 = arith.maximumf %71, %72 : vector<2x128xf32>
    %c1024 = arith.constant 1024 : index
    %c0_25 = arith.constant 0 : index
    %74 = vector.load %arg3[%c1024, %c0_25] : memref<1152x128xf32, #tpu.memory_space<vmem>>, vector<128x128xf32>
    %cst_26 = arith.constant dense<0.000000e+00> : vector<2x128xf32>
    %75 = tpu.matmul %73, %74, %cst_26 {dimension_numbers = #tpu.dot_dimension_numbers<[1], [0], [0], [1], [0, 0, 1, 1], [], []>} : vector<2x128xf32>, vector<128x128xf32>, vector<2x128xf32> -> vector<2x128xf32>
    %c5 = arith.constant 5 : index
    %c0_27 = arith.constant 0 : index
    %76 = vector.load %arg4[%c5, %c0_27] : memref<8x512xf32, #tpu.memory_space<vmem>>, vector<1x128xf32>
    %77 = vector.broadcast %76 : vector<1x128xf32> to vector<2x128xf32>
    %78 = arith.addf %75, %77 : vector<2x128xf32>
    %79 = vector.extract_strided_slice %78 {offsets = [0, 0], sizes = [2, 3], strides = [1, 1]} : vector<2x128xf32> to vector<2x3xf32>
    %c0_28 = arith.constant 0 : index
    %c0_29 = arith.constant 0 : index
    %80 = vector.load %arg5[%c0_28, %c0_29] : memref<2x3xf32, #tpu.memory_space<vmem>>, vector<2x3xf32>
    tpu.vector_store %arg5[%c0_28, %c0_29], %79 {strides = array<i32>} : memref<2x3xf32, #tpu.memory_space<vmem>>, vector<2x3xf32>,
    return
  }
}

</mosaic_0001>

<llo_original>
// kernel: forward_pallas.1
$region0: #{forward_pallas.1}
  #allocation0 [shape = 'u32[]', space=smem, size = 0x4, offset = 0x4, fixed_abs, tag = 'smem constant byte address 0x4 - core index']
  #allocation1 [shape = 'u32[144,128]{1,0:T(1,128)}', space=vmem, size = 0x12000, scoped, tag = 'internal scratch']
  %s0 = inlined_call_operand.vmem [shape: f32[22,1152], index: 0, kind: input, shape index: {}]
  %s1 = inlined_call_operand.vmem [shape: f32[2,128], index: 1, kind: input, shape index: {}]
  %s2 = inlined_call_operand.hbm [shape: f32[1920,512], index: 2, kind: input, shape index: {}]
  %s3 = inlined_call_operand.vmem [shape: f32[1152,128], index: 3, kind: input, shape index: {}]
  %s4 = inlined_call_operand.hbm [shape: f32[8,512], index: 4, kind: input, shape index: {}]
  %s5 = inlined_call_operand.hbm [shape: f32[2,3], index: 5, kind: output, shape index: {}]
  %s6 = sld [smem:[#allocation0]]
  $region38: #{forward_pallas.1} parent=0
    _
  %s8 = ssub.s32 1, %s6
  %s9 = scalar_select 0, %s8, %s6
  $region1: #{forward_pallas.1} parent=0
    #allocation2 [shape = 'u8[3932160]{0}', space=vmem, size = 0x3c0000, scoped, tag = 'input window, operand 2, single buffered']
    #allocation3 [shape = 's32[1]{0}', space=sflag, size = 0x4, scoped, tag = 'scoped memory for forward_pallas.1']
    #allocation4 [shape = 's32[1]{0}', space=sflag, size = 0x4, scoped, tag = 'scoped memory for forward_pallas.1']
    #allocation5 [shape = 'u8[16384]{0}', space=vmem, size = 0x4000, scoped, tag = 'input window, operand 4, single buffered']
    #allocation6 [shape = 's32[1]{0}', space=sflag, size = 0x4, scoped, tag = 'scoped memory for forward_pallas.1']
    #allocation7 [shape = 'u8[1024]{0}', space=vmem, size = 0x400, scoped, tag = 'output window, operand 0, single buffered']
    %10 = vsyncpa [#allocation3], 0
    %11 = vsyncpa [#allocation6], 0
    %12 = vsyncpa [#allocation4], 0
    // Predicated region
    $region2: #{forward_pallas.1} parent=1 // pred_check
      _
    $region3: #{forward_pallas.1} parent=1 // pred_check_branch
      %14 = sbr.rel (0) target = $region5
    $region4: #{forward_pallas.1} parent=1 // pred_region
      _
    $region5: #{forward_pallas.1} parent=1 // pred_fallthru
      _
    // Predicated region
    $region6: #{forward_pallas.1} parent=1 // pred_check
      _
    $region7: #{forward_pallas.1} parent=1 // pred_check_branch
      %16 = sbr.rel (0) target = $region9
    $region8: #{forward_pallas.1} parent=1 // pred_region
      _
    $region9: #{forward_pallas.1} parent=1 // pred_fallthru
      _
    // Predicated region
    $region10: #{forward_pallas.1} parent=1 // pred_check
      _
    $region11: #{forward_pallas.1} parent=1 // pred_check_branch
      %18 = sbr.rel (0) target = $region13
    $region12: #{forward_pallas.1} parent=1 // pred_region
      %s20 = ssub.s32 122880, 122880
      %21 = vsyncadd [#allocation3], %s20
      %s22 = sshll.u32 [#allocation2], 4
      %s23 = int_to_ptr.vmem [resolvable:$true] %s22
      %28 = dma.hbm_to_vmem [thread:$0]  %s2, 122880, %s23, [#allocation3], 512, 512, 32
    $region13: #{forward_pallas.1} parent=1 // pred_fallthru
      _
    // Predicated region
    $region14: #{forward_pallas.1} parent=1 // pred_check
      _
    $region15: #{forward_pallas.1} parent=1 // pred_check_branch
      %30 = sbr.rel (0) target = $region17
    $region16: #{forward_pallas.1} parent=1 // pred_region
      _
    $region17: #{forward_pallas.1} parent=1 // pred_fallthru
      _
    // Predicated region
    $region18: #{forward_pallas.1} parent=1 // pred_check
      _
    $region19: #{forward_pallas.1} parent=1 // pred_check_branch
      %32 = sbr.rel (0) target = $region21
    $region20: #{forward_pallas.1} parent=1 // pred_region
      %s34 = ssub.s32 512, 512
      %35 = vsyncadd [#allocation6], %s34
      %s37 = sshll.u32 [#allocation5], 4
      %s38 = int_to_ptr.vmem [resolvable:$true] %s37
      %40 = dma.hbm_to_vmem [thread:$0]  %s4, 512, %s38, [#allocation6]
    $region21: #{forward_pallas.1} parent=1 // pred_fallthru
      _
    // Predicated region
    $region22: #{forward_pallas.1} parent=1 // pred_check
      _
    $region23: #{forward_pallas.1} parent=1 // pred_check_branch
      %42 = sbr.rel (0) target = $region25
    $region24: #{forward_pallas.1} parent=1 // pred_region
      %43 = dma.done [#allocation3], 122880
    $region25: #{forward_pallas.1} parent=1 // pred_fallthru
      _
    // Predicated region
    $region26: #{forward_pallas.1} parent=1 // pred_check
      _
    $region27: #{forward_pallas.1} parent=1 // pred_check_branch
      %45 = sbr.rel (0) target = $region29
    $region28: #{forward_pallas.1} parent=1 // pred_region
      %46 = dma.done [#allocation6], 512
    $region29: #{forward_pallas.1} parent=1 // pred_fallthru
      _
    %v47 = vld [vmem:[%s0] sm:$0xff]
    %v48 = vld [vmem:[%s0 + $0x8] sm:$0xff]
    %v49 = vld [vmem:[%s0 + $0x10] sm:$0xff]
    %v50 = vld [vmem:[%s0 + $0x18] sm:$0xff]
    %v51 = vld [vmem:[%s0 + $0x20] sm:$0xff]
    %v52 = vld [vmem:[%s0 + $0x28] sm:$0xff]
    %v53 = vld [vmem:[%s0 + $0x30] sm:$0xff]
    %v54 = vld [vmem:[%s0 + $0x38] sm:$0xff]
    %v55 = vld [vmem:[%s0 + $0x40] sm:$0xff]
    %v56 = vld [vmem:[%s0 + $0x48] sm:$0xff]
    %v57 = vld [vmem:[%s0 + $0x50] sm:$0xff]
    %v58 = vld [vmem:[%s0 + $0x58] sm:$0xff]
    %v59 = vld [vmem:[%s0 + $0x60] sm:$0xff]
    %v60 = vld [vmem:[%s0 + $0x68] sm:$0xff]
    %v61 = vld [vmem:[%s0 + $0x70] sm:$0xff]
    %v62 = vld [vmem:[%s0 + $0x78] sm:$0xff]
    %v63 = vld [vmem:[%s0 + $0x80] sm:$0xff]
    %v64 = vld [vmem:[%s0 + $0x88] sm:$0xff]
    %v65 = vld [vmem:[%s0 + $0x90] sm:$0x3f]
    %v66 = vld [vmem:[%s0 + $0x98] sm:$0x3f]
    %v67 = vld [vmem:[%s0 + $0xa0] sm:$0x3f]
    %v68 = vld [vmem:[%s0 + $0xa8] sm:$0x3f]
    %v69 = vld [vmem:[%s0 + $0xb0] sm:$0x3f]
    %v70 = vld [vmem:[%s0 + $0xb8] sm:$0x3f]
    %v71 = vld [vmem:[%s0 + $0xc0] sm:$0x3f]
    %v72 = vld [vmem:[%s0 + $0xc8] sm:$0x3f]
    %v73 = vld [vmem:[%s0 + $0xd0] sm:$0x3f]
    %v74 = vld [vmem:[#allocation2] sm:$0xff]
    %v75 = vld [vmem:[#allocation2 + $0x8] sm:$0xff]
    %v76 = vld [vmem:[#allocation2 + $0x10] sm:$0xff]
    %v77 = vld [vmem:[#allocation2 + $0x18] sm:$0xff]
    %v78 = vld [vmem:[#allocation2 + $0x20] sm:$0xff]
    %v79 = vld [vmem:[#allocation2 + $0x28] sm:$0xff]
    %v80 = vld [vmem:[#allocation2 + $0x30] sm:$0xff]
    %v81 = vld [vmem:[#allocation2 + $0x38] sm:$0xff]
    %v82 = vld [vmem:[#allocation2 + $0x40] sm:$0xff]
    %v83 = vld [vmem:[#allocation2 + $0x48] sm:$0xff]
    %v84 = vld [vmem:[#allocation2 + $0x50] sm:$0xff]
    %v85 = vld [vmem:[#allocation2 + $0x58] sm:$0xff]
    %v86 = vld [vmem:[#allocation2 + $0x60] sm:$0xff]
    %v87 = vld [vmem:[#allocation2 + $0x68] sm:$0xff]
    %v88 = vld [vmem:[#allocation2 + $0x70] sm:$0xff]
    %v89 = vld [vmem:[#allocation2 + $0x78] sm:$0xff]
    %v90 = vld [vmem:[#allocation2 + $0x80] sm:$0xff]
    %v91 = vld [vmem:[#allocation2 + $0x88] sm:$0xff]
    %v92 = vld [vmem:[#allocation2 + $0x90] sm:$0xff]
    %v93 = vld [vmem:[#allocation2 + $0x98] sm:$0xff]
    %v94 = vld [vmem:[#allocation2 + $0xa0] sm:$0xff]
    %v95 = vld [vmem:[#allocation2 + $0xa8] sm:$0xff]
    %v96 = vld [vmem:[#allocation2 + $0xb0] sm:$0xff]
    %v97 = vld [vmem:[#allocation2 + $0xb8] sm:$0xff]
    %v98 = vld [vmem:[#allocation2 + $0xc0] sm:$0xff]
    %v99 = vld [vmem:[#allocation2 + $0xc8] sm:$0xff]
    %v100 = vld [vmem:[#allocation2 + $0xd0] sm:$0xff]
    %v101 = vld [vmem:[#allocation2 + $0xd8] sm:$0xff]
    %v102 = vld [vmem:[#allocation2 + $0xe0] sm:$0xff]
    %v103 = vld [vmem:[#allocation2 + $0xe8] sm:$0xff]
    %v104 = vld [vmem:[#allocation2 + $0xf0] sm:$0xff]
    %v105 = vld [vmem:[#allocation2 + $0xf8] sm:$0xff]
    %v106 = vld [vmem:[#allocation2 + $0x100] sm:$0xff]
    %v107 = vld [vmem:[#allocation2 + $0x108] sm:$0xff]
    %v108 = vld [vmem:[#allocation2 + $0x110] sm:$0xff]
    %v109 = vld [vmem:[#allocation2 + $0x118] sm:$0xff]
    %v110 = vld [vmem:[#allocation2 + $0x120] sm:$0xff]
    %v111 = vld [vmem:[#allocation2 + $0x128] sm:$0xff]
    %v112 = vld [vmem:[#allocation2 + $0x130] sm:$0xff]
    %v113 = vld [vmem:[#allocation2 + $0x138] sm:$0xff]
    %v114 = vld [vmem:[#allocation2 + $0x140] sm:$0xff]
    %v115 = vld [vmem:[#allocation2 + $0x148] sm:$0xff]
    %v116 = vld [vmem:[#allocation2 + $0x150] sm:$0xff]
    %v117 = vld [vmem:[#allocation2 + $0x158] sm:$0xff]
    %v118 = vld [vmem:[#allocation2 + $0x160] sm:$0xff]
    %v119 = vld [vmem:[#allocation2 + $0x168] sm:$0xff]
    %v120 = vld [vmem:[#allocation2 + $0x170] sm:$0xff]
    %v121 = vld [vmem:[#allocation2 + $0x178] sm:$0xff]
    %v122 = vld [vmem:[#allocation2 + $0x180] sm:$0xff]
    %v123 = vld [vmem:[#allocation2 + $0x188] sm:$0xff]
    %v124 = vld [vmem:[#allocation2 + $0x190] sm:$0xff]
    %v125 = vld [vmem:[#allocation2 + $0x198] sm:$0xff]
    %v126 = vld [vmem:[#allocation2 + $0x1a0] sm:$0xff]
    %v127 = vld [vmem:[#allocation2 + $0x1a8] sm:$0xff]
    %v128 = vld [vmem:[#allocation2 + $0x1b0] sm:$0xff]
    %v129 = vld [vmem:[#allocation2 + $0x1b8] sm:$0xff]
    %v130 = vld [vmem:[#allocation2 + $0x1c0] sm:$0xff]
    %v131 = vld [vmem:[#allocation2 + $0x1c8] sm:$0xff]
    %v132 = vld [vmem:[#allocation2 + $0x1d0] sm:$0xff]
    %v133 = vld [vmem:[#allocation2 + $0x1d8] sm:$0xff]
    %v134 = vld [vmem:[#allocation2 + $0x1e0] sm:$0xff]
    %v135 = vld [vmem:[#allocation2 + $0x1e8] sm:$0xff]
    %v136 = vld [vmem:[#allocation2 + $0x1f0] sm:$0xff]
    %v137 = vld [vmem:[#allocation2 + $0x1f8] sm:$0xff]
    %v138 = vld [vmem:[#allocation2 + $0x200] sm:$0xff]
    %v139 = vld [vmem:[#allocation2 + $0x208] sm:$0xff]
    %v140 = vld [vmem:[#allocation2 + $0x210] sm:$0xff]
    %v141 = vld [vmem:[#allocation2 + $0x218] sm:$0xff]
    %v142 = vld [vmem:[#allocation2 + $0x220] sm:$0xff]
    %v143 = vld [vmem:[#allocation2 + $0x228] sm:$0xff]
    %v144 = vld [vmem:[#allocation2 + $0x230] sm:$0xff]
    %v145 = vld [vmem:[#allocation2 + $0x238] sm:$0xff]
    %v146 = vld [vmem:[#allocation2 + $0x240] sm:$0xff]
    %v147 = vld [vmem:[#allocation2 + $0x248] sm:$0xff]
    %v148 = vld [vmem:[#allocation2 + $0x250] sm:$0xff]
    %v149 = vld [vmem:[#allocation2 + $0x258] sm:$0xff]
    %v150 = vld [vmem:[#allocation2 + $0x260] sm:$0xff]
    %v151 = vld [vmem:[#allocation2 + $0x268] sm:$0xff]
    %v152 = vld [vmem:[#allocation2 + $0x270] sm:$0xff]
    %v153 = vld [vmem:[#allocation2 + $0x278] sm:$0xff]
    %v154 = vld [vmem:[#allocation2 + $0x280] sm:$0xff]
    %v155 = vld [vmem:[#allocation2 + $0x288] sm:$0xff]
    %v156 = vld [vmem:[#allocation2 + $0x290] sm:$0xff]
    %v157 = vld [vmem:[#allocation2 + $0x298] sm:$0xff]
    %v158 = vld [vmem:[#allocation2 + $0x2a0] sm:$0xff]
    %v159 = vld [vmem:[#allocation2 + $0x2a8] sm:$0xff]
    %v160 = vld [vmem:[#allocation2 + $0x2b0] sm:$0xff]
    %v161 = vld [vmem:[#allocation2 + $0x2b8] sm:$0xff]
    %v162 = vld [vmem:[#allocation2 + $0x2c0] sm:$0xff]
    %v163 = vld [vmem:[#allocation2 + $0x2c8] sm:$0xff]
    %v164 = vld [vmem:[#allocation2 + $0x2d0] sm:$0xff]
    %v165 = vld [vmem:[#allocation2 + $0x2d8] sm:$0xff]
    %v166 = vld [vmem:[#allocation2 + $0x2e0] sm:$0xff]
    %v167 = vld [vmem:[#allocation2 + $0x2e8] sm:$0xff]
    %v168 = vld [vmem:[#allocation2 + $0x2f0] sm:$0xff]
    %v169 = vld [vmem:[#allocation2 + $0x2f8] sm:$0xff]
    %v170 = vld [vmem:[#allocation2 + $0x300] sm:$0xff]
    %v171 = vld [vmem:[#allocation2 + $0x308] sm:$0xff]
    %v172 = vld [vmem:[#allocation2 + $0x310] sm:$0xff]
    %v173 = vld [vmem:[#allocation2 + $0x318] sm:$0xff]
    %v174 = vld [vmem:[#allocation2 + $0x320] sm:$0xff]
    %v175 = vld [vmem:[#allocation2 + $0x328] sm:$0xff]
    %v176 = vld [vmem:[#allocation2 + $0x330] sm:$0xff]
    %v177 = vld [vmem:[#allocation2 + $0x338] sm:$0xff]
    %v178 = vld [vmem:[#allocation2 + $0x340] sm:$0xff]
    %v179 = vld [vmem:[#allocation2 + $0x348] sm:$0xff]
    %v180 = vld [vmem:[#allocation2 + $0x350] sm:$0xff]
    %v181 = vld [vmem:[#allocation2 + $0x358] sm:$0xff]
    %v182 = vld [vmem:[#allocation2 + $0x360] sm:$0xff]
    %v183 = vld [vmem:[#allocation2 + $0x368] sm:$0xff]
    %v184 = vld [vmem:[#allocation2 + $0x370] sm:$0xff]
    %v185 = vld [vmem:[#allocation2 + $0x378] sm:$0xff]
    %v186 = vld [vmem:[#allocation2 + $0x380] sm:$0xff]
    %v187 = vld [vmem:[#allocation2 + $0x388] sm:$0xff]
    %v188 = vld [vmem:[#allocation2 + $0x390] sm:$0xff]
    %v189 = vld [vmem:[#allocation2 + $0x398] sm:$0xff]
    %v190 = vld [vmem:[#allocation2 + $0x3a0] sm:$0xff]
    %v191 = vld [vmem:[#allocation2 + $0x3a8] sm:$0xff]
    %v192 = vld [vmem:[#allocation2 + $0x3b0] sm:$0xff]
    %v193 = vld [vmem:[#allocation2 + $0x3b8] sm:$0xff]
    %v194 = vld [vmem:[#allocation2 + $0x3c0] sm:$0xff]
    %v195 = vld [vmem:[#allocation2 + $0x3c8] sm:$0xff]
    %v196 = vld [vmem:[#allocation2 + $0x3d0] sm:$0xff]
    %v197 = vld [vmem:[#allocation2 + $0x3d8] sm:$0xff]
    %v198 = vld [vmem:[#allocation2 + $0x3e0] sm:$0xff]
    %v199 = vld [vmem:[#allocation2 + $0x3e8] sm:$0xff]
    %v200 = vld [vmem:[#allocation2 + $0x3f0] sm:$0xff]
    %v201 = vld [vmem:[#allocation2 + $0x3f8] sm:$0xff]
    %v202 = vld [vmem:[#allocation2 + $0x400] sm:$0xff]
    %v203 = vld [vmem:[#allocation2 + $0x408] sm:$0xff]
    %v204 = vld [vmem:[#allocation2 + $0x410] sm:$0xff]
    %v205 = vld [vmem:[#allocation2 + $0x418] sm:$0xff]
    %v206 = vld [vmem:[#allocation2 + $0x420] sm:$0xff]
    %v207 = vld [vmem:[#allocation2 + $0x428] sm:$0xff]
    %v208 = vld [vmem:[#allocation2 + $0x430] sm:$0xff]
    %v209 = vld [vmem:[#allocation2 + $0x438] sm:$0xff]
    %v210 = vld [vmem:[#allocation2 + $0x440] sm:$0xff]
    %v211 = vld [vmem:[#allocation2 + $0x448] sm:$0xff]
    %v212 = vld [vmem:[#allocation2 + $0x450] sm:$0xff]
    %v213 = vld [vmem:[#allocation2 + $0x458] sm:$0xff]
    %v214 = vld [vmem:[#allocation2 + $0x460] sm:$0xff]
    %v215 = vld [vmem:[#allocation2 + $0x468] sm:$0xff]
    %v216 = vld [vmem:[#allocation2 + $0x470] sm:$0xff]
    %v217 = vld [vmem:[#allocation2 + $0x478] sm:$0xff]
    %v218 = vld [vmem:[#allocation2 + $0x480] sm:$0xff]
    %v219 = vld [vmem:[#allocation2 + $0x488] sm:$0xff]
    %v220 = vld [vmem:[#allocation2 + $0x490] sm:$0xff]
    %v221 = vld [vmem:[#allocation2 + $0x498] sm:$0xff]
    %v222 = vld [vmem:[#allocation2 + $0x4a0] sm:$0xff]
    %v223 = vld [vmem:[#allocation2 + $0x4a8] sm:$0xff]
    %v224 = vld [vmem:[#allocation2 + $0x4b0] sm:$0xff]
    %v225 = vld [vmem:[#allocation2 + $0x4b8] sm:$0xff]
    %v226 = vld [vmem:[#allocation2 + $0x4c0] sm:$0xff]
    %v227 = vld [vmem:[#allocation2 + $0x4c8] sm:$0xff]
    %v228 = vld [vmem:[#allocation2 + $0x4d0] sm:$0xff]
    %v229 = vld [vmem:[#allocation2 + $0x4d8] sm:$0xff]
    %v230 = vld [vmem:[#allocation2 + $0x4e0] sm:$0xff]
    %v231 = vld [vmem:[#allocation2 + $0x4e8] sm:$0xff]
    %v232 = vld [vmem:[#allocation2 + $0x4f0] sm:$0xff]
    %v233 = vld [vmem:[#allocation2 + $0x4f8] sm:$0xff]
    %v234 = vld [vmem:[#allocation2 + $0x500] sm:$0xff]
    %v235 = vld [vmem:[#allocation2 + $0x508] sm:$0xff]
    %v236 = vld [vmem:[#allocation2 + $0x510] sm:$0xff]
    %v237 = vld [vmem:[#allocation2 + $0x518] sm:$0xff]
    %v238 = vld [vmem:[#allocation2 + $0x520] sm:$0xff]
    %v239 = vld [vmem:[#allocation2 + $0x528] sm:$0xff]
    %v240 = vld [vmem:[#allocation2 + $0x530] sm:$0xff]
    %v241 = vld [vmem:[#allocation2 + $0x538] sm:$0xff]
    %v242 = vld [vmem:[#allocation2 + $0x540] sm:$0xff]
    %v243 = vld [vmem:[#allocation2 + $0x548] sm:$0xff]
    %v244 = vld [vmem:[#allocation2 + $0x550] sm:$0xff]
    %v245 = vld [vmem:[#allocation2 + $0x558] sm:$0xff]
    %v246 = vld [vmem:[#allocation2 + $0x560] sm:$0xff]
    %v247 = vld [vmem:[#allocation2 + $0x568] sm:$0xff]
    %v248 = vld [vmem:[#allocation2 + $0x570] sm:$0xff]
    %v249 = vld [vmem:[#allocation2 + $0x578] sm:$0xff]
    %v250 = vld [vmem:[#allocation2 + $0x580] sm:$0xff]
    %v251 = vld [vmem:[#allocation2 + $0x588] sm:$0xff]
    %v252 = vld [vmem:[#allocation2 + $0x590] sm:$0xff]
    %v253 = vld [vmem:[#allocation2 + $0x598] sm:$0xff]
    %v254 = vld [vmem:[#allocation2 + $0x5a0] sm:$0xff]
    %v255 = vld [vmem:[#allocation2 + $0x5a8] sm:$0xff]
    %v256 = vld [vmem:[#allocation2 + $0x5b0] sm:$0xff]
    %v257 = vld [vmem:[#allocation2 + $0x5b8] sm:$0xff]
    %v258 = vld [vmem:[#allocation2 + $0x5c0] sm:$0xff]
    %v259 = vld [vmem:[#allocation2 + $0x5c8] sm:$0xff]
    %v260 = vld [vmem:[#allocation2 + $0x5d0] sm:$0xff]
    %v261 = vld [vmem:[#allocation2 + $0x5d8] sm:$0xff]
    %v262 = vld [vmem:[#allocation2 + $0x5e0] sm:$0xff]
    %v263 = vld [vmem:[#allocation2 + $0x5e8] sm:$0xff]
    %v264 = vld [vmem:[#allocation2 + $0x5f0] sm:$0xff]
    %v265 = vld [vmem:[#allocation2 + $0x5f8] sm:$0xff]
    %v266 = vld [vmem:[#allocation2 + $0x600] sm:$0xff]
    %v267 = vld [vmem:[#allocation2 + $0x608] sm:$0xff]
    %v268 = vld [vmem:[#allocation2 + $0x610] sm:$0xff]
    %v269 = vld [vmem:[#allocation2 + $0x618] sm:$0xff]
    %v270 = vld [vmem:[#allocation2 + $0x620] sm:$0xff]
    %v271 = vld [vmem:[#allocation2 + $0x628] sm:$0xff]
    %v272 = vld [vmem:[#allocation2 + $0x630] sm:$0xff]
    %v273 = vld [vmem:[#allocation2 + $0x638] sm:$0xff]
    %v274 = vld [vmem:[#allocation2 + $0x640] sm:$0xff]
    %v275 = vld [vmem:[#allocation2 + $0x648] sm:$0xff]
    %v276 = vld [vmem:[#allocation2 + $0x650] sm:$0xff]
    %v277 = vld [vmem:[#allocation2 + $0x658] sm:$0xff]
    %v278 = vld [vmem:[#allocation2 + $0x660] sm:$0xff]
    %v279 = vld [vmem:[#allocation2 + $0x668] sm:$0xff]
    %v280 = vld [vmem:[#allocation2 + $0x670] sm:$0xff]
    %v281 = vld [vmem:[#allocation2 + $0x678] sm:$0xff]
    %v282 = vld [vmem:[#allocation2 + $0x680] sm:$0xff]
    %v283 = vld [vmem:[#allocation2 + $0x688] sm:$0xff]
    %v284 = vld [vmem:[#allocation2 + $0x690] sm:$0xff]
    %v285 = vld [vmem:[#allocation2 + $0x698] sm:$0xff]
    %v286 = vld [vmem:[#allocation2 + $0x6a0] sm:$0xff]
    %v287 = vld [vmem:[#allocation2 + $0x6a8] sm:$0xff]
    %v288 = vld [vmem:[#allocation2 + $0x6b0] sm:$0xff]
    %v289 = vld [vmem:[#allocation2 + $0x6b8] sm:$0xff]
    %v290 = vld [vmem:[#allocation2 + $0x6c0] sm:$0xff]
    %v291 = vld [vmem:[#allocation2 + $0x6c8] sm:$0xff]
    %v292 = vld [vmem:[#allocation2 + $0x6d0] sm:$0xff]
    %v293 = vld [vmem:[#allocation2 + $0x6d8] sm:$0xff]
    %v294 = vld [vmem:[#allocation2 + $0x6e0] sm:$0xff]
    %v295 = vld [vmem:[#allocation2 + $0x6e8] sm:$0xff]
    %v296 = vld [vmem:[#allocation2 + $0x6f0] sm:$0xff]
    %v297 = vld [vmem:[#allocation2 + $0x6f8] sm:$0xff]
    %v298 = vld [vmem:[#allocation2 + $0x700] sm:$0xff]
    %v299 = vld [vmem:[#allocation2 + $0x708] sm:$0xff]
    %v300 = vld [vmem:[#allocation2 + $0x710] sm:$0xff]
    %v301 = vld [vmem:[#allocation2 + $0x718] sm:$0xff]
    %v302 = vld [vmem:[#allocation2 + $0x720] sm:$0xff]
    %v303 = vld [vmem:[#allocation2 + $0x728] sm:$0xff]
    %v304 = vld [vmem:[#allocation2 + $0x730] sm:$0xff]
    %v305 = vld [vmem:[#allocation2 + $0x738] sm:$0xff]
    %v306 = vld [vmem:[#allocation2 + $0x740] sm:$0xff]
    %v307 = vld [vmem:[#allocation2 + $0x748] sm:$0xff]
    %v308 = vld [vmem:[#allocation2 + $0x750] sm:$0xff]
    %v309 = vld [vmem:[#allocation2 + $0x758] sm:$0xff]
    %v310 = vld [vmem:[#allocation2 + $0x760] sm:$0xff]
    %v311 = vld [vmem:[#allocation2 + $0x768] sm:$0xff]
    %v312 = vld [vmem:[#allocation2 + $0x770] sm:$0xff]
    %v313 = vld [vmem:[#allocation2 + $0x778] sm:$0xff]
    %v314 = vld [vmem:[#allocation2 + $0x780] sm:$0xff]
    %v315 = vld [vmem:[#allocation2 + $0x788] sm:$0xff]
    %v316 = vld [vmem:[#allocation2 + $0x790] sm:$0xff]
    %v317 = vld [vmem:[#allocation2 + $0x798] sm:$0xff]
    %v318 = vld [vmem:[#allocation2 + $0x7a0] sm:$0xff]
    %v319 = vld [vmem:[#allocation2 + $0x7a8] sm:$0xff]
    %v320 = vld [vmem:[#allocation2 + $0x7b0] sm:$0xff]
    %v321 = vld [vmem:[#allocation2 + $0x7b8] sm:$0xff]
    %v322 = vld [vmem:[#allocation2 + $0x7c0] sm:$0xff]
    %v323 = vld [vmem:[#allocation2 + $0x7c8] sm:$0xff]
    %v324 = vld [vmem:[#allocation2 + $0x7d0] sm:$0xff]
    %v325 = vld [vmem:[#allocation2 + $0x7d8] sm:$0xff]
    %v326 = vld [vmem:[#allocation2 + $0x7e0] sm:$0xff]
    %v327 = vld [vmem:[#allocation2 + $0x7e8] sm:$0xff]
    %v328 = vld [vmem:[#allocation2 + $0x7f0] sm:$0xff]
    %v329 = vld [vmem:[#allocation2 + $0x7f8] sm:$0xff]
    %v330 = vld [vmem:[#allocation2 + $0x800] sm:$0xff]
    %v331 = vld [vmem:[#allocation2 + $0x808] sm:$0xff]
    %v332 = vld [vmem:[#allocation2 + $0x810] sm:$0xff]
    %v333 = vld [vmem:[#allocation2 + $0x818] sm:$0xff]
    %v334 = vld [vmem:[#allocation2 + $0x820] sm:$0xff]
    %v335 = vld [vmem:[#allocation2 + $0x828] sm:$0xff]
    %v336 = vld [vmem:[#allocation2 + $0x830] sm:$0xff]
    %v337 = vld [vmem:[#allocation2 + $0x838] sm:$0xff]
    %v338 = vld [vmem:[#allocation2 + $0x840] sm:$0xff]
    %v339 = vld [vmem:[#allocation2 + $0x848] sm:$0xff]
    %v340 = vld [vmem:[#allocation2 + $0x850] sm:$0xff]
    %v341 = vld [vmem:[#allocation2 + $0x858] sm:$0xff]
    %v342 = vld [vmem:[#allocation2 + $0x860] sm:$0xff]
    %v343 = vld [vmem:[#allocation2 + $0x868] sm:$0xff]
    %v344 = vld [vmem:[#allocation2 + $0x870] sm:$0xff]
    %v345 = vld [vmem:[#allocation2 + $0x878] sm:$0xff]
    %v346 = vld [vmem:[#allocation2 + $0x880] sm:$0xff]
    %v347 = vld [vmem:[#allocation2 + $0x888] sm:$0xff]
    %v348 = vld [vmem:[#allocation2 + $0x890] sm:$0xff]
    %v349 = vld [vmem:[#allocation2 + $0x898] sm:$0xff]
    %v350 = vld [vmem:[#allocation2 + $0x8a0] sm:$0xff]
    %v351 = vld [vmem:[#allocation2 + $0x8a8] sm:$0xff]
    %v352 = vld [vmem:[#allocation2 + $0x8b0] sm:$0xff]
    %v353 = vld [vmem:[#allocation2 + $0x8b8] sm:$0xff]
    %v354 = vld [vmem:[#allocation2 + $0x8c0] sm:$0xff]
    %v355 = vld [vmem:[#allocation2 + $0x8c8] sm:$0xff]
    %v356 = vld [vmem:[#allocation2 + $0x8d0] sm:$0xff]
    %v357 = vld [vmem:[#allocation2 + $0x8d8] sm:$0xff]
    %v358 = vld [vmem:[#allocation2 + $0x8e0] sm:$0xff]
    %v359 = vld [vmem:[#allocation2 + $0x8e8] sm:$0xff]
    %v360 = vld [vmem:[#allocation2 + $0x8f0] sm:$0xff]
    %v361 = vld [vmem:[#allocation2 + $0x8f8] sm:$0xff]
    %v362 = vld [vmem:[#allocation2 + $0x900] sm:$0xff]
    %v363 = vld [vmem:[#allocation2 + $0x908] sm:$0xff]
    %v364 = vld [vmem:[#allocation2 + $0x910] sm:$0xff]
    %v365 = vld [vmem:[#allocation2 + $0x918] sm:$0xff]
    %v366 = vld [vmem:[#allocation2 + $0x920] sm:$0xff]
    %v367 = vld [vmem:[#allocation2 + $0x928] sm:$0xff]
    %v368 = vld [vmem:[#allocation2 + $0x930] sm:$0xff]
    %v369 = vld [vmem:[#allocation2 + $0x938] sm:$0xff]
    %v370 = vld [vmem:[#allocation2 + $0x940] sm:$0xff]
    %v371 = vld [vmem:[#allocation2 + $0x948] sm:$0xff]
    %v372 = vld [vmem:[#allocation2 + $0x950] sm:$0xff]
    %v373 = vld [vmem:[#allocation2 + $0x958] sm:$0xff]
    %v374 = vld [vmem:[#allocation2 + $0x960] sm:$0xff]
    %v375 = vld [vmem:[#allocation2 + $0x968] sm:$0xff]
    %v376 = vld [vmem:[#allocation2 + $0x970] sm:$0xff]
    %v377 = vld [vmem:[#allocation2 + $0x978] sm:$0xff]
    %v378 = vld [vmem:[#allocation2 + $0x980] sm:$0xff]
    %v379 = vld [vmem:[#allocation2 + $0x988] sm:$0xff]
    %v380 = vld [vmem:[#allocation2 + $0x990] sm:$0xff]
    %v381 = vld [vmem:[#allocation2 + $0x998] sm:$0xff]
    %v382 = vld [vmem:[#allocation2 + $0x9a0] sm:$0xff]
    %v383 = vld [vmem:[#allocation2 + $0x9a8] sm:$0xff]
    %v384 = vld [vmem:[#allocation2 + $0x9b0] sm:$0xff]
    %v385 = vld [vmem:[#allocation2 + $0x9b8] sm:$0xff]
    %v386 = vld [vmem:[#allocation2 + $0x9c0] sm:$0xff]
    %v387 = vld [vmem:[#allocation2 + $0x9c8] sm:$0xff]
    %v388 = vld [vmem:[#allocation2 + $0x9d0] sm:$0xff]
    %v389 = vld [vmem:[#allocation2 + $0x9d8] sm:$0xff]
    %v390 = vld [vmem:[#allocation2 + $0x9e0] sm:$0xff]
    %v391 = vld [vmem:[#allocation2 + $0x9e8] sm:$0xff]
    %v392 = vld [vmem:[#allocation2 + $0x9f0] sm:$0xff]
    %v393 = vld [vmem:[#allocation2 + $0x9f8] sm:$0xff]
    %v394 = vld [vmem:[#allocation2 + $0xa00] sm:$0xff]
    %v395 = vld [vmem:[#allocation2 + $0xa08] sm:$0xff]
    %v396 = vld [vmem:[#allocation2 + $0xa10] sm:$0xff]
    %v397 = vld [vmem:[#allocation2 + $0xa18] sm:$0xff]
    %v398 = vld [vmem:[#allocation2 + $0xa20] sm:$0xff]
    %v399 = vld [vmem:[#allocation2 + $0xa28] sm:$0xff]
    %v400 = vld [vmem:[#allocation2 + $0xa30] sm:$0xff]
    %v401 = vld [vmem:[#allocation2 + $0xa38] sm:$0xff]
    %v402 = vld [vmem:[#allocation2 + $0xa40] sm:$0xff]
    %v403 = vld [vmem:[#allocation2 + $0xa48] sm:$0xff]
    %v404 = vld [vmem:[#allocation2 + $0xa50] sm:$0xff]
    %v405 = vld [vmem:[#allocation2 + $0xa58] sm:$0xff]
    %v406 = vld [vmem:[#allocation2 + $0xa60] sm:$0xff]
    %v407 = vld [vmem:[#allocation2 + $0xa68] sm:$0xff]
    %v408 = vld [vmem:[#allocation2 + $0xa70] sm:$0xff]
    %v409 = vld [vmem:[#allocation2 + $0xa78] sm:$0xff]
    %v410 = vld [vmem:[#allocation2 + $0xa80] sm:$0xff]
    %v411 = vld [vmem:[#allocation2 + $0xa88] sm:$0xff]
    %v412 = vld [vmem:[#allocation2 + $0xa90] sm:$0xff]
    %v413 = vld [vmem:[#allocation2 + $0xa98] sm:$0xff]
    %v414 = vld [vmem:[#allocation2 + $0xaa0] sm:$0xff]
    %v415 = vld [vmem:[#allocation2 + $0xaa8] sm:$0xff]
    %v416 = vld [vmem:[#allocation2 + $0xab0] sm:$0xff]
    %v417 = vld [vmem:[#allocation2 + $0xab8] sm:$0xff]
    %v418 = vld [vmem:[#allocation2 + $0xac0] sm:$0xff]
    %v419 = vld [vmem:[#allocation2 + $0xac8] sm:$0xff]
    %v420 = vld [vmem:[#allocation2 + $0xad0] sm:$0xff]
    %v421 = vld [vmem:[#allocation2 + $0xad8] sm:$0xff]
    %v422 = vld [vmem:[#allocation2 + $0xae0] sm:$0xff]
    %v423 = vld [vmem:[#allocation2 + $0xae8] sm:$0xff]
    %v424 = vld [vmem:[#allocation2 + $0xaf0] sm:$0xff]
    %v425 = vld [vmem:[#allocation2 + $0xaf8] sm:$0xff]
    %v426 = vld [vmem:[#allocation2 + $0xb00] sm:$0xff]
    %v427 = vld [vmem:[#allocation2 + $0xb08] sm:$0xff]
    %v428 = vld [vmem:[#allocation2 + $0xb10] sm:$0xff]
    %v429 = vld [vmem:[#allocation2 + $0xb18] sm:$0xff]
    %v430 = vld [vmem:[#allocation2 + $0xb20] sm:$0xff]
    %v431 = vld [vmem:[#allocation2 + $0xb28] sm:$0xff]
    %v432 = vld [vmem:[#allocation2 + $0xb30] sm:$0xff]
    %v433 = vld [vmem:[#allocation2 + $0xb38] sm:$0xff]
    %v434 = vld [vmem:[#allocation2 + $0xb40] sm:$0xff]
    %v435 = vld [vmem:[#allocation2 + $0xb48] sm:$0xff]
    %v436 = vld [vmem:[#allocation2 + $0xb50] sm:$0xff]
    %v437 = vld [vmem:[#allocation2 + $0xb58] sm:$0xff]
    %v438 = vld [vmem:[#allocation2 + $0xb60] sm:$0xff]
    %v439 = vld [vmem:[#allocation2 + $0xb68] sm:$0xff]
    %v440 = vld [vmem:[#allocation2 + $0xb70] sm:$0xff]
    %v441 = vld [vmem:[#allocation2 + $0xb78] sm:$0xff]
    %v442 = vld [vmem:[#allocation2 + $0xb80] sm:$0xff]
    %v443 = vld [vmem:[#allocation2 + $0xb88] sm:$0xff]
    %v444 = vld [vmem:[#allocation2 + $0xb90] sm:$0xff]
    %v445 = vld [vmem:[#allocation2 + $0xb98] sm:$0xff]
    %v446 = vld [vmem:[#allocation2 + $0xba0] sm:$0xff]
    %v447 = vld [vmem:[#allocation2 + $0xba8] sm:$0xff]
    %v448 = vld [vmem:[#allocation2 + $0xbb0] sm:$0xff]
    %v449 = vld [vmem:[#allocation2 + $0xbb8] sm:$0xff]
    %v450 = vld [vmem:[#allocation2 + $0xbc0] sm:$0xff]
    %v451 = vld [vmem:[#allocation2 + $0xbc8] sm:$0xff]
    %v452 = vld [vmem:[#allocation2 + $0xbd0] sm:$0xff]
    %v453 = vld [vmem:[#allocation2 + $0xbd8] sm:$0xff]
    %v454 = vld [vmem:[#allocation2 + $0xbe0] sm:$0xff]
    %v455 = vld [vmem:[#allocation2 + $0xbe8] sm:$0xff]
    %v456 = vld [vmem:[#allocation2 + $0xbf0] sm:$0xff]
    %v457 = vld [vmem:[#allocation2 + $0xbf8] sm:$0xff]
    %v458 = vld [vmem:[#allocation2 + $0xc00] sm:$0xff]
    %v459 = vld [vmem:[#allocation2 + $0xc08] sm:$0xff]
    %v460 = vld [vmem:[#allocation2 + $0xc10] sm:$0xff]
    %v461 = vld [vmem:[#allocation2 + $0xc18] sm:$0xff]
    %v462 = vld [vmem:[#allocation2 + $0xc20] sm:$0xff]
    %v463 = vld [vmem:[#allocation2 + $0xc28] sm:$0xff]
    %v464 = vld [vmem:[#allocation2 + $0xc30] sm:$0xff]
    %v465 = vld [vmem:[#allocation2 + $0xc38] sm:$0xff]
    %v466 = vld [vmem:[#allocation2 + $0xc40] sm:$0xff]
    %v467 = vld [vmem:[#allocation2 + $0xc48] sm:$0xff]
    %v468 = vld [vmem:[#allocation2 + $0xc50] sm:$0xff]
    %v469 = vld [vmem:[#allocation2 + $0xc58] sm:$0xff]
    %v470 = vld [vmem:[#allocation2 + $0xc60] sm:$0xff]
    %v471 = vld [vmem:[#allocation2 + $0xc68] sm:$0xff]
    %v472 = vld [vmem:[#allocation2 + $0xc70] sm:$0xff]
    %v473 = vld [vmem:[#allocation2 + $0xc78] sm:$0xff]
    %v474 = vld [vmem:[#allocation2 + $0xc80] sm:$0xff]
    %v475 = vld [vmem:[#allocation2 + $0xc88] sm:$0xff]
    %v476 = vld [vmem:[#allocation2 + $0xc90] sm:$0xff]
    %v477 = vld [vmem:[#allocation2 + $0xc98] sm:$0xff]
    %v478 = vld [vmem:[#allocation2 + $0xca0] sm:$0xff]
    %v479 = vld [vmem:[#allocation2 + $0xca8] sm:$0xff]
    %v480 = vld [vmem:[#allocation2 + $0xcb0] sm:$0xff]
    %v481 = vld [vmem:[#allocation2 + $0xcb8] sm:$0xff]
    %v482 = vld [vmem:[#allocation2 + $0xcc0] sm:$0xff]
    %v483 = vld [vmem:[#allocation2 + $0xcc8] sm:$0xff]
    %v484 = vld [vmem:[#allocation2 + $0xcd0] sm:$0xff]
    %v485 = vld [vmem:[#allocation2 + $0xcd8] sm:$0xff]
    %v486 = vld [vmem:[#allocation2 + $0xce0] sm:$0xff]
    %v487 = vld [vmem:[#allocation2 + $0xce8] sm:$0xff]
    %v488 = vld [vmem:[#allocation2 + $0xcf0] sm:$0xff]
    %v489 = vld [vmem:[#allocation2 + $0xcf8] sm:$0xff]
    %v490 = vld [vmem:[#allocation2 + $0xd00] sm:$0xff]
    %v491 = vld [vmem:[#allocation2 + $0xd08] sm:$0xff]
    %v492 = vld [vmem:[#allocation2 + $0xd10] sm:$0xff]
    %v493 = vld [vmem:[#allocation2 + $0xd18] sm:$0xff]
    %v494 = vld [vmem:[#allocation2 + $0xd20] sm:$0xff]
    %v495 = vld [vmem:[#allocation2 + $0xd28] sm:$0xff]
    %v496 = vld [vmem:[#allocation2 + $0xd30] sm:$0xff]
    %v497 = vld [vmem:[#allocation2 + $0xd38] sm:$0xff]
    %v498 = vld [vmem:[#allocation2 + $0xd40] sm:$0xff]
    %v499 = vld [vmem:[#allocation2 + $0xd48] sm:$0xff]
    %v500 = vld [vmem:[#allocation2 + $0xd50] sm:$0xff]
    %v501 = vld [vmem:[#allocation2 + $0xd58] sm:$0xff]
    %v502 = vld [vmem:[#allocation2 + $0xd60] sm:$0xff]
    %v503 = vld [vmem:[#allocation2 + $0xd68] sm:$0xff]
    %v504 = vld [vmem:[#allocation2 + $0xd70] sm:$0xff]
    %v505 = vld [vmem:[#allocation2 + $0xd78] sm:$0xff]
    %v506 = vld [vmem:[#allocation2 + $0xd80] sm:$0xff]
    %v507 = vld [vmem:[#allocation2 + $0xd88] sm:$0xff]
    %v508 = vld [vmem:[#allocation2 + $0xd90] sm:$0xff]
    %v509 = vld [vmem:[#allocation2 + $0xd98] sm:$0xff]
    %v510 = vld [vmem:[#allocation2 + $0xda0] sm:$0xff]
    %v511 = vld [vmem:[#allocation2 + $0xda8] sm:$0xff]
    %v512 = vld [vmem:[#allocation2 + $0xdb0] sm:$0xff]
    %v513 = vld [vmem:[#allocation2 + $0xdb8] sm:$0xff]
    %v514 = vld [vmem:[#allocation2 + $0xdc0] sm:$0xff]
    %v515 = vld [vmem:[#allocation2 + $0xdc8] sm:$0xff]
    %v516 = vld [vmem:[#allocation2 + $0xdd0] sm:$0xff]
    %v517 = vld [vmem:[#allocation2 + $0xdd8] sm:$0xff]
    %v518 = vld [vmem:[#allocation2 + $0xde0] sm:$0xff]
    %v519 = vld [vmem:[#allocation2 + $0xde8] sm:$0xff]
    %v520 = vld [vmem:[#allocation2 + $0xdf0] sm:$0xff]
    %v521 = vld [vmem:[#allocation2 + $0xdf8] sm:$0xff]
    %v522 = vld [vmem:[#allocation2 + $0xe00] sm:$0xff]
    %v523 = vld [vmem:[#allocation2 + $0xe08] sm:$0xff]
    %v524 = vld [vmem:[#allocation2 + $0xe10] sm:$0xff]
    %v525 = vld [vmem:[#allocation2 + $0xe18] sm:$0xff]
    %v526 = vld [vmem:[#allocation2 + $0xe20] sm:$0xff]
    %v527 = vld [vmem:[#allocation2 + $0xe28] sm:$0xff]
    %v528 = vld [vmem:[#allocation2 + $0xe30] sm:$0xff]
    %v529 = vld [vmem:[#allocation2 + $0xe38] sm:$0xff]
    %v530 = vld [vmem:[#allocation2 + $0xe40] sm:$0xff]
    %v531 = vld [vmem:[#allocation2 + $0xe48] sm:$0xff]
    %v532 = vld [vmem:[#allocation2 + $0xe50] sm:$0xff]
    %v533 = vld [vmem:[#allocation2 + $0xe58] sm:$0xff]
    %v534 = vld [vmem:[#allocation2 + $0xe60] sm:$0xff]
    %v535 = vld [vmem:[#allocation2 + $0xe68] sm:$0xff]
    %v536 = vld [vmem:[#allocation2 + $0xe70] sm:$0xff]
    %v537 = vld [vmem:[#allocation2 + $0xe78] sm:$0xff]
    %v538 = vld [vmem:[#allocation2 + $0xe80] sm:$0xff]
    %v539 = vld [vmem:[#allocation2 + $0xe88] sm:$0xff]
    %v540 = vld [vmem:[#allocation2 + $0xe90] sm:$0xff]
    %v541 = vld [vmem:[#allocation2 + $0xe98] sm:$0xff]
    %v542 = vld [vmem:[#allocation2 + $0xea0] sm:$0xff]
    %v543 = vld [vmem:[#allocation2 + $0xea8] sm:$0xff]
    %v544 = vld [vmem:[#allocation2 + $0xeb0] sm:$0xff]
    %v545 = vld [vmem:[#allocation2 + $0xeb8] sm:$0xff]
    %v546 = vld [vmem:[#allocation2 + $0xec0] sm:$0xff]
    %v547 = vld [vmem:[#allocation2 + $0xec8] sm:$0xff]
    %v548 = vld [vmem:[#allocation2 + $0xed0] sm:$0xff]
    %v549 = vld [vmem:[#allocation2 + $0xed8] sm:$0xff]
    %v550 = vld [vmem:[#allocation2 + $0xee0] sm:$0xff]
    %v551 = vld [vmem:[#allocation2 + $0xee8] sm:$0xff]
    %v552 = vld [vmem:[#allocation2 + $0xef0] sm:$0xff]
    %v553 = vld [vmem:[#allocation2 + $0xef8] sm:$0xff]
    %v554 = vld [vmem:[#allocation2 + $0xf00] sm:$0xff]
    %v555 = vld [vmem:[#allocation2 + $0xf08] sm:$0xff]
    %v556 = vld [vmem:[#allocation2 + $0xf10] sm:$0xff]
    %v557 = vld [vmem:[#allocation2 + $0xf18] sm:$0xff]
    %v558 = vld [vmem:[#allocation2 + $0xf20] sm:$0xff]
    %v559 = vld [vmem:[#allocation2 + $0xf28] sm:$0xff]
    %v560 = vld [vmem:[#allocation2 + $0xf30] sm:$0xff]
    %v561 = vld [vmem:[#allocation2 + $0xf38] sm:$0xff]
    %v562 = vld [vmem:[#allocation2 + $0xf40] sm:$0xff]
    %v563 = vld [vmem:[#allocation2 + $0xf48] sm:$0xff]
    %v564 = vld [vmem:[#allocation2 + $0xf50] sm:$0xff]
    %v565 = vld [vmem:[#allocation2 + $0xf58] sm:$0xff]
    %v566 = vld [vmem:[#allocation2 + $0xf60] sm:$0xff]
    %v567 = vld [vmem:[#allocation2 + $0xf68] sm:$0xff]
    %v568 = vld [vmem:[#allocation2 + $0xf70] sm:$0xff]
    %v569 = vld [vmem:[#allocation2 + $0xf78] sm:$0xff]
    %v570 = vld [vmem:[#allocation2 + $0xf80] sm:$0xff]
    %v571 = vld [vmem:[#allocation2 + $0xf88] sm:$0xff]
    %v572 = vld [vmem:[#allocation2 + $0xf90] sm:$0xff]
    %v573 = vld [vmem:[#allocation2 + $0xf98] sm:$0xff]
    %v574 = vld [vmem:[#allocation2 + $0xfa0] sm:$0xff]
    %v575 = vld [vmem:[#allocation2 + $0xfa8] sm:$0xff]
    %v576 = vld [vmem:[#allocation2 + $0xfb0] sm:$0xff]
    %v577 = vld [vmem:[#allocation2 + $0xfb8] sm:$0xff]
    %v578 = vld [vmem:[#allocation2 + $0xfc0] sm:$0xff]
    %v579 = vld [vmem:[#allocation2 + $0xfc8] sm:$0xff]
    %v580 = vld [vmem:[#allocation2 + $0xfd0] sm:$0xff]
    %v581 = vld [vmem:[#allocation2 + $0xfd8] sm:$0xff]
    %v582 = vld [vmem:[#allocation2 + $0xfe0] sm:$0xff]
    %v583 = vld [vmem:[#allocation2 + $0xfe8] sm:$0xff]
    %v584 = vld [vmem:[#allocation2 + $0xff0] sm:$0xff]
    %v585 = vld [vmem:[#allocation2 + $0xff8] sm:$0xff]
    %v586 = vld [vmem:[#allocation2 + $0x1000] sm:$0xff]
    %v587 = vld [vmem:[#allocation2 + $0x1008] sm:$0xff]
    %v588 = vld [vmem:[#allocation2 + $0x1010] sm:$0xff]
    %v589 = vld [vmem:[#allocation2 + $0x1018] sm:$0xff]
    %v590 = vld [vmem:[#allocation2 + $0x1020] sm:$0xff]
    %v591 = vld [vmem:[#allocation2 + $0x1028] sm:$0xff]
    %v592 = vld [vmem:[#allocation2 + $0x1030] sm:$0xff]
    %v593 = vld [vmem:[#allocation2 + $0x1038] sm:$0xff]
    %v594 = vld [vmem:[#allocation2 + $0x1040] sm:$0xff]
    %v595 = vld [vmem:[#allocation2 + $0x1048] sm:$0xff]
    %v596 = vld [vmem:[#allocation2 + $0x1050] sm:$0xff]
    %v597 = vld [vmem:[#allocation2 + $0x1058] sm:$0xff]
    %v598 = vld [vmem:[#allocation2 + $0x1060] sm:$0xff]
    %v599 = vld [vmem:[#allocation2 + $0x1068] sm:$0xff]
    %v600 = vld [vmem:[#allocation2 + $0x1070] sm:$0xff]
    %v601 = vld [vmem:[#allocation2 + $0x1078] sm:$0xff]
    %v602 = vld [vmem:[#allocation2 + $0x1080] sm:$0xff]
    %v603 = vld [vmem:[#allocation2 + $0x1088] sm:$0xff]
    %v604 = vld [vmem:[#allocation2 + $0x1090] sm:$0xff]
    %v605 = vld [vmem:[#allocation2 + $0x1098] sm:$0xff]
    %v606 = vld [vmem:[#allocation2 + $0x10a0] sm:$0xff]
    %v607 = vld [vmem:[#allocation2 + $0x10a8] sm:$0xff]
    %v608 = vld [vmem:[#allocation2 + $0x10b0] sm:$0xff]
    %v609 = vld [vmem:[#allocation2 + $0x10b8] sm:$0xff]
    %v610 = vld [vmem:[#allocation2 + $0x10c0] sm:$0xff]
    %v611 = vld [vmem:[#allocation2 + $0x10c8] sm:$0xff]
    %v612 = vld [vmem:[#allocation2 + $0x10d0] sm:$0xff]
    %v613 = vld [vmem:[#allocation2 + $0x10d8] sm:$0xff]
    %v614 = vld [vmem:[#allocation2 + $0x10e0] sm:$0xff]
    %v615 = vld [vmem:[#allocation2 + $0x10e8] sm:$0xff]
    %v616 = vld [vmem:[#allocation2 + $0x10f0] sm:$0xff]
    %v617 = vld [vmem:[#allocation2 + $0x10f8] sm:$0xff]
    %v618 = vld [vmem:[#allocation2 + $0x1100] sm:$0xff]
    %v619 = vld [vmem:[#allocation2 + $0x1108] sm:$0xff]
    %v620 = vld [vmem:[#allocation2 + $0x1110] sm:$0xff]
    %v621 = vld [vmem:[#allocation2 + $0x1118] sm:$0xff]
    %v622 = vld [vmem:[#allocation2 + $0x1120] sm:$0xff]
    %v623 = vld [vmem:[#allocation2 + $0x1128] sm:$0xff]
    %v624 = vld [vmem:[#allocation2 + $0x1130] sm:$0xff]
    %v625 = vld [vmem:[#allocation2 + $0x1138] sm:$0xff]
    %v626 = vld [vmem:[#allocation2 + $0x1140] sm:$0xff]
    %v627 = vld [vmem:[#allocation2 + $0x1148] sm:$0xff]
    %v628 = vld [vmem:[#allocation2 + $0x1150] sm:$0xff]
    %v629 = vld [vmem:[#allocation2 + $0x1158] sm:$0xff]
    %v630 = vld [vmem:[#allocation2 + $0x1160] sm:$0xff]
    %v631 = vld [vmem:[#allocation2 + $0x1168] sm:$0xff]
    %v632 = vld [vmem:[#allocation2 + $0x1170] sm:$0xff]
    %v633 = vld [vmem:[#allocation2 + $0x1178] sm:$0xff]
    %v634 = vld [vmem:[#allocation2 + $0x1180] sm:$0xff]
    %v635 = vld [vmem:[#allocation2 + $0x1188] sm:$0xff]
    %v636 = vld [vmem:[#allocation2 + $0x1190] sm:$0xff]
    %v637 = vld [vmem:[#allocation2 + $0x1198] sm:$0xff]
    %v638 = vld [vmem:[#allocation2 + $0x11a0] sm:$0xff]
    %v639 = vld [vmem:[#allocation2 + $0x11a8] sm:$0xff]
    %v640 = vld [vmem:[#allocation2 + $0x11b0] sm:$0xff]
    %v641 = vld [vmem:[#allocation2 + $0x11b8] sm:$0xff]
    %v642 = vld [vmem:[#allocation2 + $0x11c0] sm:$0xff]
    %v643 = vld [vmem:[#allocation2 + $0x11c8] sm:$0xff]
    %v644 = vld [vmem:[#allocation2 + $0x11d0] sm:$0xff]
    %v645 = vld [vmem:[#allocation2 + $0x11d8] sm:$0xff]
    %v646 = vld [vmem:[#allocation2 + $0x11e0] sm:$0xff]
    %v647 = vld [vmem:[#allocation2 + $0x11e8] sm:$0xff]
    %v648 = vld [vmem:[#allocation2 + $0x11f0] sm:$0xff]
    %v649 = vld [vmem:[#allocation2 + $0x11f8] sm:$0xff]
    %v650 = vld [vmem:[#allocation5] ss:$8 sm:$0xf]
    %v652 = vlaneseq
    %v653 = vshrl.u32 %v652, 7
    %v654 = vsub.s32 0, %v653
    %v655 = vrot.slane %v650, %v654
    %v656 = vlaneseq
    %v657 = vshrl.u32 %v656, 7
    %v658 = vsub.s32 1, %v657
    %v659 = vrot.slane %v650, %v658
    %v660 = vlaneseq
    %v661 = vshrl.u32 %v660, 7
    %v662 = vsub.s32 2, %v661
    %v663 = vrot.slane %v650, %v662
    %v664 = vlaneseq
    %v665 = vshrl.u32 %v664, 7
    %v666 = vsub.s32 3, %v665
    %v667 = vrot.slane %v650, %v666
    %672 = vmatprep.subr.mxu0 %v75
    %673 = vmatpush1.msra.mxu0 %v74
    %674 = vmatprep.subr.mxu0 %v79
    %675 = vmatpush1.msra.mxu0 %v78
    %676 = vmatprep.subr.mxu0 %v83
    %677 = vmatpush1.msra.mxu0 %v82
    %678 = vmatprep.subr.mxu0 %v87
    %679 = vmatpush1.msra.mxu0 %v86
    %680 = vmatprep.subr.mxu0 %v91
    %681 = vmatpush1.msra.mxu0 %v90
    %682 = vmatprep.subr.mxu0 %v95
    %683 = vmatpush1.msra.mxu0 %v94
    %684 = vmatprep.subr.mxu0 %v99
    %685 = vmatpush1.msra.mxu0 %v98
    %686 = vmatprep.subr.mxu0 %v103
    %687 = vmatpush1.msra.mxu0 %v102
    %688 = vmatprep.subr.mxu0 %v107
    %689 = vmatpush1.msra.mxu0 %v106
    %690 = vmatprep.subr.mxu0 %v111
    %691 = vmatpush1.msra.mxu0 %v110
    %692 = vmatprep.subr.mxu0 %v115
    %693 = vmatpush1.msra.mxu0 %v114
    %694 = vmatprep.subr.mxu0 %v119
    %695 = vmatpush1.msra.mxu0 %v118
    %696 = vmatprep.subr.mxu0 %v123
    %697 = vmatpush1.msra.mxu0 %v122
    %698 = vmatprep.subr.mxu0 %v127
    %699 = vmatpush1.msra.mxu0 %v126
    %700 = vmatprep.subr.mxu0 %v131
    %701 = vmatpush1.msra.mxu0 %v130
    %702 = vmatprep.subr.mxu0 %v135
    %703 = vmatpush1.msra.mxu0 %v134
    %704 = vmatprep.subr.mxu0 %v139
    %705 = vmatpush1.msra.mxu0 %v138
    %706 = vmatprep.subr.mxu0 %v143
    %707 = vmatpush1.msra.mxu0 %v142
    %708 = vmatprep.subr.mxu0 %v147
    %709 = vmatpush1.msra.mxu0 %v146
    %710 = vmatprep.subr.mxu0 %v151
    %711 = vmatpush1.msra.mxu0 %v150
    %712 = vmatprep.subr.mxu0 %v155
    %713 = vmatpush1.msra.mxu0 %v154
    %714 = vmatprep.subr.mxu0 %v159
    %715 = vmatpush1.msra.mxu0 %v158
    %716 = vmatprep.subr.mxu0 %v163
    %717 = vmatpush1.msra.mxu0 %v162
    %718 = vmatprep.subr.mxu0 %v167
    %719 = vmatpush1.msra.mxu0 %v166
    %720 = vmatprep.subr.mxu0 %v171
    %721 = vmatpush1.msra.mxu0 %v170
    %722 = vmatprep.subr.mxu0 %v175
    %723 = vmatpush1.msra.mxu0 %v174
    %724 = vmatprep.subr.mxu0 %v179
    %725 = vmatpush1.msra.mxu0 %v178
    %726 = vmatprep.subr.mxu0 %v183
    %727 = vmatpush1.msra.mxu0 %v182
    %728 = vmatprep.subr.mxu0 %v187
    %729 = vmatpush1.msra.mxu0 %v186
    %730 = vmatprep.subr.mxu0 %v191
    %731 = vmatpush1.msra.mxu0 %v190
    %732 = vmatprep.subr.mxu0 %v195
    %733 = vmatpush1.msra.mxu0 %v194
    %734 = vmatprep.subr.mxu0 %v199
    %735 = vmatpush1.msra.mxu0 %v198
    %736 = vmatprep.mubr.f32.mxu0 %v48
    %737 = vmatmul.mubr.f32.gmra.mrb[0].mxu0 %v47
    %v738 = vpop.f32.mrb[0].mxu0
    %v739 = vadd.f32 %v655, %v738
    %v740 = vpop.f32.mrb[0].mxu0
    %v741 = vadd.f32 %v659, %v740
    %742 = vmatprep.mubr.f32.mxu0 %v57
    %743 = vmatmul.mubr.f32.gmra.mrb[0].mxu0 %v56
    %v744 = vpop.f32.mrb[0].mxu0
    %v745 = vadd.f32 %v655, %v744
    %v746 = vpop.f32.mrb[0].mxu0
    %v747 = vadd.f32 %v659, %v746
    %748 = vmatprep.mubr.f32.mxu0 %v66
    %749 = vmatmul.mubr.f32.gmra.mrb[0].mxu0 %v65
    %v750 = vpop.f32.mrb[0].mxu0
    %v751 = vadd.f32 %v655, %v750
    %v752 = vpop.f32.mrb[0].mxu0
    %v753 = vadd.f32 %v659, %v752
    %754 = vdwg.mxu0
    %755 = vmatprep.subr.mxu0 %v203
    %756 = vmatpush1.msra.mxu0 %v202
    %757 = vmatprep.subr.mxu0 %v207
    %758 = vmatpush1.msra.mxu0 %v206
    %759 = vmatprep.subr.mxu0 %v211
    %760 = vmatpush1.msra.mxu0 %v210
    %761 = vmatprep.subr.mxu0 %v215
    %762 = vmatpush1.msra.mxu0 %v214
    %763 = vmatprep.subr.mxu0 %v219
    %764 = vmatpush1.msra.mxu0 %v218
    %765 = vmatprep.subr.mxu0 %v223
    %766 = vmatpush1.msra.mxu0 %v222
    %767 = vmatprep.subr.mxu0 %v227
    %768 = vmatpush1.msra.mxu0 %v226
    %769 = vmatprep.subr.mxu0 %v231
    %770 = vmatpush1.msra.mxu0 %v230
    %771 = vmatprep.subr.mxu0 %v235
    %772 = vmatpush1.msra.mxu0 %v234
    %773 = vmatprep.subr.mxu0 %v239
    %774 = vmatpush1.msra.mxu0 %v238
    %775 = vmatprep.subr.mxu0 %v243
    %776 = vmatpush1.msra.mxu0 %v242
    %777 = vmatprep.subr.mxu0 %v247
    %778 = vmatpush1.msra.mxu0 %v246
    %779 = vmatprep.subr.mxu0 %v251
    %780 = vmatpush1.msra.mxu0 %v250
    %781 = vmatprep.subr.mxu0 %v255
    %782 = vmatpush1.msra.mxu0 %v254
    %783 = vmatprep.subr.mxu0 %v259
    %784 = vmatpush1.msra.mxu0 %v258
    %785 = vmatprep.subr.mxu0 %v263
    %786 = vmatpush1.msra.mxu0 %v262
    %787 = vmatprep.subr.mxu0 %v267
    %788 = vmatpush1.msra.mxu0 %v266
    %789 = vmatprep.subr.mxu0 %v271
    %790 = vmatpush1.msra.mxu0 %v270
    %791 = vmatprep.subr.mxu0 %v275
    %792 = vmatpush1.msra.mxu0 %v274
    %793 = vmatprep.subr.mxu0 %v279
    %794 = vmatpush1.msra.mxu0 %v278
    %795 = vmatprep.subr.mxu0 %v283
    %796 = vmatpush1.msra.mxu0 %v282
    %797 = vmatprep.subr.mxu0 %v287
    %798 = vmatpush1.msra.mxu0 %v286
    %799 = vmatprep.subr.mxu0 %v291
    %800 = vmatpush1.msra.mxu0 %v290
    %801 = vmatprep.subr.mxu0 %v295
    %802 = vmatpush1.msra.mxu0 %v294
    %803 = vmatprep.subr.mxu0 %v299
    %804 = vmatpush1.msra.mxu0 %v298
    %805 = vmatprep.subr.mxu0 %v303
    %806 = vmatpush1.msra.mxu0 %v302
    %807 = vmatprep.subr.mxu0 %v307
    %808 = vmatpush1.msra.mxu0 %v306
    %809 = vmatprep.subr.mxu0 %v311
    %810 = vmatpush1.msra.mxu0 %v310
    %811 = vmatprep.subr.mxu0 %v315
    %812 = vmatpush1.msra.mxu0 %v314
    %813 = vmatprep.subr.mxu0 %v319
    %814 = vmatpush1.msra.mxu0 %v318
    %815 = vmatprep.subr.mxu0 %v323
    %816 = vmatpush1.msra.mxu0 %v322
    %817 = vmatprep.subr.mxu0 %v327
    %818 = vmatpush1.msra.mxu0 %v326
    %819 = vmatprep.mubr.f32.mxu0 %v50
    %820 = vmatmul.mubr.f32.gmra.mrb[0].mxu0 %v49
    %v821 = vpop.f32.mrb[0].mxu0
    %v822 = vadd.f32 %v739, %v821
    %v823 = vpop.f32.mrb[0].mxu0
    %v824 = vadd.f32 %v741, %v823
    %825 = vmatprep.mubr.f32.mxu0 %v59
    %826 = vmatmul.mubr.f32.gmra.mrb[0].mxu0 %v58
    %v827 = vpop.f32.mrb[0].mxu0
    %v828 = vadd.f32 %v745, %v827
    %v829 = vpop.f32.mrb[0].mxu0
    %v830 = vadd.f32 %v747, %v829
    %831 = vmatprep.mubr.f32.mxu0 %v68
    %832 = vmatmul.mubr.f32.gmra.mrb[0].mxu0 %v67
    %v833 = vpop.f32.mrb[0].mxu0
    %v834 = vadd.f32 %v751, %v833
    %v835 = vpop.f32.mrb[0].mxu0
    %v836 = vadd.f32 %v753, %v835
    %837 = vdwg.mxu0
    %838 = vmatprep.subr.mxu0 %v331
    %839 = vmatpush1.msra.mxu0 %v330
    %840 = vmatprep.subr.mxu0 %v335
    %841 = vmatpush1.msra.mxu0 %v334
    %842 = vmatprep.subr.mxu0 %v339
    %843 = vmatpush1.msra.mxu0 %v338
    %844 = vmatprep.subr.mxu0 %v343
    %845 = vmatpush1.msra.mxu0 %v342
    %846 = vmatprep.subr.mxu0 %v347
    %847 = vmatpush1.msra.mxu0 %v346
    %848 = vmatprep.subr.mxu0 %v351
    %849 = vmatpush1.msra.mxu0 %v350
    %850 = vmatprep.subr.mxu0 %v355
    %851 = vmatpush1.msra.mxu0 %v354
    %852 = vmatprep.subr.mxu0 %v359
    %853 = vmatpush1.msra.mxu0 %v358
    %854 = vmatprep.subr.mxu0 %v363
    %855 = vmatpush1.msra.mxu0 %v362
    %856 = vmatprep.subr.mxu0 %v367
    %857 = vmatpush1.msra.mxu0 %v366
    %858 = vmatprep.subr.mxu0 %v371
    %859 = vmatpush1.msra.mxu0 %v370
    %860 = vmatprep.subr.mxu0 %v375
    %861 = vmatpush1.msra.mxu0 %v374
    %862 = vmatprep.subr.mxu0 %v379
    %863 = vmatpush1.msra.mxu0 %v378
    %864 = vmatprep.subr.mxu0 %v383
    %865 = vmatpush1.msra.mxu0 %v382
    %866 = vmatprep.subr.mxu0 %v387
    %867 = vmatpush1.msra.mxu0 %v386
    %868 = vmatprep.subr.mxu0 %v391
    %869 = vmatpush1.msra.mxu0 %v390
    %870 = vmatprep.subr.mxu0 %v395
    %871 = vmatpush1.msra.mxu0 %v394
    %872 = vmatprep.subr.mxu0 %v399
    %873 = vmatpush1.msra.mxu0 %v398
    %874 = vmatprep.subr.mxu0 %v403
    %875 = vmatpush1.msra.mxu0 %v402
    %876 = vmatprep.subr.mxu0 %v407
    %877 = vmatpush1.msra.mxu0 %v406
    %878 = vmatprep.subr.mxu0 %v411
    %879 = vmatpush1.msra.mxu0 %v410
    %880 = vmatprep.subr.mxu0 %v415
    %881 = vmatpush1.msra.mxu0 %v414
    %882 = vmatprep.subr.mxu0 %v419
    %883 = vmatpush1.msra.mxu0 %v418
    %884 = vmatprep.subr.mxu0 %v423
    %885 = vmatpush1.msra.mxu0 %v422
    %886 = vmatprep.subr.mxu0 %v427
    %887 = vmatpush1.msra.mxu0 %v426
    %888 = vmatprep.subr.mxu0 %v431
    %889 = vmatpush1.msra.mxu0 %v430
    %890 = vmatprep.subr.mxu0 %v435
    %891 = vmatpush1.msra.mxu0 %v434
    %892 = vmatprep.subr.mxu0 %v439
    %893 = vmatpush1.msra.mxu0 %v438
    %894 = vmatprep.subr.mxu0 %v443
    %895 = vmatpush1.msra.mxu0 %v442
    %896 = vmatprep.subr.mxu0 %v447
    %897 = vmatpush1.msra.mxu0 %v446
    %898 = vmatprep.subr.mxu0 %v451
    %899 = vmatpush1.msra.mxu0 %v450
    %900 = vmatprep.subr.mxu0 %v455
    %901 = vmatpush1.msra.mxu0 %v454
    %902 = vmatprep.mubr.f32.mxu0 %v52
    %903 = vmatmul.mubr.f32.gmra.mrb[0].mxu0 %v51
    %v904 = vpop.f32.mrb[0].mxu0
    %v905 = vadd.f32 %v822, %v904
    %v906 = vpop.f32.mrb[0].mxu0
    %v907 = vadd.f32 %v824, %v906
    %908 = vmatprep.mubr.f32.mxu0 %v61
    %909 = vmatmul.mubr.f32.gmra.mrb[0].mxu0 %v60
    %v910 = vpop.f32.mrb[0].mxu0
    %v911 = vadd.f32 %v828, %v910
    %v912 = vpop.f32.mrb[0].mxu0
    %v913 = vadd.f32 %v830, %v912
    %914 = vmatprep.mubr.f32.mxu0 %v70
    %915 = vmatmul.mubr.f32.gmra.mrb[0].mxu0 %v69
    %v916 = vpop.f32.mrb[0].mxu0
    %v917 = vadd.f32 %v834, %v916
    %v918 = vpop.f32.mrb[0].mxu0
    %v919 = vadd.f32 %v836, %v918
    %920 = vdwg.mxu0
    %921 = vmatprep.subr.mxu0 %v459
    %922 = vmatpush1.msra.mxu0 %v458
    %923 = vmatprep.subr.mxu0 %v463
    %924 = vmatpush1.msra.mxu0 %v462
    %925 = vmatprep.subr.mxu0 %v467
    %926 = vmatpush1.msra.mxu0 %v466
    %927 = vmatprep.subr.mxu0 %v471
    %928 = vmatpush1.msra.mxu0 %v470
    %929 = vmatprep.subr.mxu0 %v475
    %930 = vmatpush1.msra.mxu0 %v474
    %931 = vmatprep.subr.mxu0 %v479
    %932 = vmatpush1.msra.mxu0 %v478
    %933 = vmatprep.subr.mxu0 %v483
    %934 = vmatpush1.msra.mxu0 %v482
    %935 = vmatprep.subr.mxu0 %v487
    %936 = vmatpush1.msra.mxu0 %v486
    %937 = vmatprep.subr.mxu0 %v491
    %938 = vmatpush1.msra.mxu0 %v490
    %939 = vmatprep.subr.mxu0 %v495
    %940 = vmatpush1.msra.mxu0 %v494
    %941 = vmatprep.subr.mxu0 %v499
    %942 = vmatpush1.msra.mxu0 %v498
    %943 = vmatprep.subr.mxu0 %v503
    %944 = vmatpush1.msra.mxu0 %v502
    %945 = vmatprep.subr.mxu0 %v507
    %946 = vmatpush1.msra.mxu0 %v506
    %947 = vmatprep.subr.mxu0 %v511
    %948 = vmatpush1.msra.mxu0 %v510
    %949 = vmatprep.subr.mxu0 %v515
    %950 = vmatpush1.msra.mxu0 %v514
    %951 = vmatprep.subr.mxu0 %v519
    %952 = vmatpush1.msra.mxu0 %v518
    %953 = vmatprep.subr.mxu0 %v523
    %954 = vmatpush1.msra.mxu0 %v522
    %955 = vmatprep.subr.mxu0 %v527
    %956 = vmatpush1.msra.mxu0 %v526
    %957 = vmatprep.subr.mxu0 %v531
    %958 = vmatpush1.msra.mxu0 %v530
    %959 = vmatprep.subr.mxu0 %v535
    %960 = vmatpush1.msra.mxu0 %v534
    %961 = vmatprep.subr.mxu0 %v539
    %962 = vmatpush1.msra.mxu0 %v538
    %963 = vmatprep.subr.mxu0 %v543
    %964 = vmatpush1.msra.mxu0 %v542
    %965 = vmatprep.subr.mxu0 %v547
    %966 = vmatpush1.msra.mxu0 %v546
    %967 = vmatprep.subr.mxu0 %v551
    %968 = vmatpush1.msra.mxu0 %v550
    %969 = vmatprep.subr.mxu0 %v555
    %970 = vmatpush1.msra.mxu0 %v554
    %971 = vmatprep.subr.mxu0 %v559
    %972 = vmatpush1.msra.mxu0 %v558
    %973 = vmatprep.subr.mxu0 %v563
    %974 = vmatpush1.msra.mxu0 %v562
    %975 = vmatprep.subr.mxu0 %v567
    %976 = vmatpush1.msra.mxu0 %v566
    %977 = vmatprep.subr.mxu0 %v571
    %978 = vmatpush1.msra.mxu0 %v570
    %979 = vmatprep.subr.mxu0 %v575
    %980 = vmatpush1.msra.mxu0 %v574
    %981 = vmatprep.subr.mxu0 %v579
    %982 = vmatpush1.msra.mxu0 %v578
    %983 = vmatprep.subr.mxu0 %v583
    %984 = vmatpush1.msra.mxu0 %v582
    %985 = vmatprep.mubr.f32.mxu0 %v54
    %986 = vmatmul.mubr.f32.gmra.mrb[0].mxu0 %v53
    %v987 = vpop.f32.mrb[0].mxu0
    %v988 = vadd.f32 %v905, %v987
    %v989 = vpop.f32.mrb[0].mxu0
    %v990 = vadd.f32 %v907, %v989
    %991 = vmatprep.mubr.f32.mxu0 %v63
    %992 = vmatmul.mubr.f32.gmra.mrb[0].mxu0 %v62
    %v993 = vpop.f32.mrb[0].mxu0
    %v994 = vadd.f32 %v911, %v993
    %v995 = vpop.f32.mrb[0].mxu0
    %v996 = vadd.f32 %v913, %v995
    %997 = vmatprep.mubr.f32.mxu0 %v72
    %998 = vmatmul.mubr.f32.gmra.mrb[0].mxu0 %v71
    %v999 = vpop.f32.mrb[0].mxu0
    %v1000 = vadd.f32 %v917, %v999
    %v1001 = vpop.f32.mrb[0].mxu0
    %v1002 = vadd.f32 %v919, %v1001
    %1003 = vdwg.mxu0
    %1004 = vmatprep.subr.mxu0 %v587
    %1005 = vmatpush1.msra.mxu0 %v586
    %1006 = vmatprep.subr.mxu0 %v591
    %1007 = vmatpush1.msra.mxu0 %v590
    %1008 = vmatprep.subr.mxu0 %v595
    %1009 = vmatpush1.msra.mxu0 %v594
    %1010 = vmatprep.subr.mxu0 %v599
    %1011 = vmatpush1.msra.mxu0 %v598
    %1012 = vmatprep.subr.mxu0 %v603
    %1013 = vmatpush1.msra.mxu0 %v602
    %1014 = vmatprep.subr.mxu0 %v607
    %1015 = vmatpush1.msra.mxu0 %v606
    %1016 = vmatprep.subr.mxu0 %v611
    %1017 = vmatpush1.msra.mxu0 %v610
    %1018 = vmatprep.subr.mxu0 %v615
    %1019 = vmatpush1.msra.mxu0 %v614
    %1020 = vmatprep.subr.mxu0 %v619
    %1021 = vmatpush1.msra.mxu0 %v618
    %1022 = vmatprep.subr.mxu0 %v623
    %1023 = vmatpush1.msra.mxu0 %v622
    %1024 = vmatprep.subr.mxu0 %v627
    %1025 = vmatpush1.msra.mxu0 %v626
    %1026 = vmatprep.subr.mxu0 %v631
    %1027 = vmatpush1.msra.mxu0 %v630
    %1028 = vmatprep.subr.mxu0 %v635
    %1029 = vmatpush1.msra.mxu0 %v634
    %1030 = vmatprep.subr.mxu0 %v639
    %1031 = vmatpush1.msra.mxu0 %v638
    %1032 = vmatprep.subr.mxu0 %v643
    %1033 = vmatpush1.msra.mxu0 %v642
    %1034 = vmatprep.subr.mxu0 %v647
    %1035 = vmatpush1.msra.mxu0 %v646
    %1036 = vmatprep.subr.mxu0 0.0
    %1037 = vmatpush1.msra.mxu0 0.0
    %1038 = vmatprep.subr.mxu0 0.0
    %1039 = vmatpush1.msra.mxu0 0.0
    %1040 = vmatprep.subr.mxu0 0.0
    %1041 = vmatpush1.msra.mxu0 0.0
    %1042 = vmatprep.subr.mxu0 0.0
    %1043 = vmatpush1.msra.mxu0 0.0
    %1044 = vmatprep.subr.mxu0 0.0
    %1045 = vmatpush1.msra.mxu0 0.0
    %1046 = vmatprep.subr.mxu0 0.0
    %1047 = vmatpush1.msra.mxu0 0.0
    %1048 = vmatprep.subr.mxu0 0.0
    %1049 = vmatpush1.msra.mxu0 0.0
    %1050 = vmatprep.subr.mxu0 0.0
    %1051 = vmatpush1.msra.mxu0 0.0
    %1052 = vmatprep.subr.mxu0 0.0
    %1053 = vmatpush1.msra.mxu0 0.0
    %1054 = vmatprep.subr.mxu0 0.0
    %1055 = vmatpush1.msra.mxu0 0.0
    %1056 = vmatprep.subr.mxu0 0.0
    %1057 = vmatpush1.msra.mxu0 0.0
    %1058 = vmatprep.subr.mxu0 0.0
    %1059 = vmatpush1.msra.mxu0 0.0
    %1060 = vmatprep.subr.mxu0 0.0
    %1061 = vmatpush1.msra.mxu0 0.0
    %1062 = vmatprep.subr.mxu0 0.0
    %1063 = vmatpush1.msra.mxu0 0.0
    %1064 = vmatprep.subr.mxu0 0.0
    %1065 = vmatpush1.msra.mxu0 0.0
    %1066 = vmatprep.subr.mxu0 0.0
    %1067 = vmatpush1.msra.mxu0 0.0
    %1068 = vmatprep.mubr.f32.mxu0 0.0
    %1069 = vmatmul.mubr.f32.gmra.mrb[0].mxu0 %v55
    %v1070 = vpop.f32.mrb[0].mxu0
    %v1071 = vadd.f32 %v988, %v1070
    %v1072 = vpop.f32.mrb[0].mxu0
    %v1073 = vadd.f32 %v990, %v1072
    %1074 = vmatprep.mubr.f32.mxu0 0.0
    %1075 = vmatmul.mubr.f32.gmra.mrb[0].mxu0 %v64
    %v1076 = vpop.f32.mrb[0].mxu0
    %v1077 = vadd.f32 %v994, %v1076
    %v1078 = vpop.f32.mrb[0].mxu0
    %v1079 = vadd.f32 %v996, %v1078
    %1080 = vmatprep.mubr.f32.mxu0 0.0
    %1081 = vmatmul.mubr.f32.gmra.mrb[0].mxu0 %v73
    %v1082 = vpop.f32.mrb[0].mxu0
    %v1083 = vadd.f32 %v1000, %v1082
    %v1084 = vpop.f32.mrb[0].mxu0
    %v1085 = vadd.f32 %v1002, %v1084
    %1086 = vdwg.mxu0
    %1087 = vmatprep.subr.mxu0 %v77
    %1088 = vmatpush1.msra.mxu0 %v76
    %1089 = vmatprep.subr.mxu0 %v81
    %1090 = vmatpush1.msra.mxu0 %v80
    %1091 = vmatprep.subr.mxu0 %v85
    %1092 = vmatpush1.msra.mxu0 %v84
    %1093 = vmatprep.subr.mxu0 %v89
    %1094 = vmatpush1.msra.mxu0 %v88
    %1095 = vmatprep.subr.mxu0 %v93
    %1096 = vmatpush1.msra.mxu0 %v92
    %1097 = vmatprep.subr.mxu0 %v97
    %1098 = vmatpush1.msra.mxu0 %v96
    %1099 = vmatprep.subr.mxu0 %v101
    %1100 = vmatpush1.msra.mxu0 %v100
    %1101 = vmatprep.subr.mxu0 %v105
    %1102 = vmatpush1.msra.mxu0 %v104
    %1103 = vmatprep.subr.mxu0 %v109
    %1104 = vmatpush1.msra.mxu0 %v108
    %1105 = vmatprep.subr.mxu0 %v113
    %1106 = vmatpush1.msra.mxu0 %v112
    %1107 = vmatprep.subr.mxu0 %v117
    %1108 = vmatpush1.msra.mxu0 %v116
    %1109 = vmatprep.subr.mxu0 %v121
    %1110 = vmatpush1.msra.mxu0 %v120
    %1111 = vmatprep.subr.mxu0 %v125
    %1112 = vmatpush1.msra.mxu0 %v124
    %1113 = vmatprep.subr.mxu0 %v129
    %1114 = vmatpush1.msra.mxu0 %v128
    %1115 = vmatprep.subr.mxu0 %v133
    %1116 = vmatpush1.msra.mxu0 %v132
    %1117 = vmatprep.subr.mxu0 %v137
    %1118 = vmatpush1.msra.mxu0 %v136
    %1119 = vmatprep.subr.mxu0 %v141
    %1120 = vmatpush1.msra.mxu0 %v140
    %1121 = vmatprep.subr.mxu0 %v145
    %1122 = vmatpush1.msra.mxu0 %v144
    %1123 = vmatprep.subr.mxu0 %v149
    %1124 = vmatpush1.msra.mxu0 %v148
    %1125 = vmatprep.subr.mxu0 %v153
    %1126 = vmatpush1.msra.mxu0 %v152
    %1127 = vmatprep.subr.mxu0 %v157
    %1128 = vmatpush1.msra.mxu0 %v156
    %1129 = vmatprep.subr.mxu0 %v161
    %1130 = vmatpush1.msra.mxu0 %v160
    %1131 = vmatprep.subr.mxu0 %v165
    %1132 = vmatpush1.msra.mxu0 %v164
    %1133 = vmatprep.subr.mxu0 %v169
    %1134 = vmatpush1.msra.mxu0 %v168
    %1135 = vmatprep.subr.mxu0 %v173
    %1136 = vmatpush1.msra.mxu0 %v172
    %1137 = vmatprep.subr.mxu0 %v177
    %1138 = vmatpush1.msra.mxu0 %v176
    %1139 = vmatprep.subr.mxu0 %v181
    %1140 = vmatpush1.msra.mxu0 %v180
    %1141 = vmatprep.subr.mxu0 %v185
    %1142 = vmatpush1.msra.mxu0 %v184
    %1143 = vmatprep.subr.mxu0 %v189
    %1144 = vmatpush1.msra.mxu0 %v188
    %1145 = vmatprep.subr.mxu0 %v193
    %1146 = vmatpush1.msra.mxu0 %v192
    %1147 = vmatprep.subr.mxu0 %v197
    %1148 = vmatpush1.msra.mxu0 %v196
    %1149 = vmatprep.subr.mxu0 %v201
    %1150 = vmatpush1.msra.mxu0 %v200
    %1151 = vmatprep.mubr.f32.mxu0 %v48
    %1152 = vmatmul.mubr.f32.gmra.mrb[0].mxu0 %v47
    %v1153 = vpop.f32.mrb[0].mxu0
    %v1154 = vadd.f32 %v663, %v1153
    %v1155 = vpop.f32.mrb[0].mxu0
    %v1156 = vadd.f32 %v667, %v1155
    %1157 = vmatprep.mubr.f32.mxu0 %v57
    %1158 = vmatmul.mubr.f32.gmra.mrb[0].mxu0 %v56
    %v1159 = vpop.f32.mrb[0].mxu0
    %v1160 = vadd.f32 %v663, %v1159
    %v1161 = vpop.f32.mrb[0].mxu0
    %v1162 = vadd.f32 %v667, %v1161
    %1163 = vmatprep.mubr.f32.mxu0 %v66
    %1164 = vmatmul.mubr.f32.gmra.mrb[0].mxu0 %v65
    %v1165 = vpop.f32.mrb[0].mxu0
    %v1166 = vadd.f32 %v663, %v1165
    %v1167 = vpop.f32.mrb[0].mxu0
    %v1168 = vadd.f32 %v667, %v1167
    %1169 = vdwg.mxu0
    %1170 = vmatprep.subr.mxu0 %v205
    %1171 = vmatpush1.msra.mxu0 %v204
    %1172 = vmatprep.subr.mxu0 %v209
    %1173 = vmatpush1.msra.mxu0 %v208
    %1174 = vmatprep.subr.mxu0 %v213
    %1175 = vmatpush1.msra.mxu0 %v212
    %1176 = vmatprep.subr.mxu0 %v217
    %1177 = vmatpush1.msra.mxu0 %v216
    %1178 = vmatprep.subr.mxu0 %v221
    %1179 = vmatpush1.msra.mxu0 %v220
    %1180 = vmatprep.subr.mxu0 %v225
    %1181 = vmatpush1.msra.mxu0 %v224
    %1182 = vmatprep.subr.mxu0 %v229
    %1183 = vmatpush1.msra.mxu0 %v228
    %1184 = vmatprep.subr.mxu0 %v233
    %1185 = vmatpush1.msra.mxu0 %v232
    %1186 = vmatprep.subr.mxu0 %v237
    %1187 = vmatpush1.msra.mxu0 %v236
    %1188 = vmatprep.subr.mxu0 %v241
    %1189 = vmatpush1.msra.mxu0 %v240
    %1190 = vmatprep.subr.mxu0 %v245
    %1191 = vmatpush1.msra.mxu0 %v244
    %1192 = vmatprep.subr.mxu0 %v249
    %1193 = vmatpush1.msra.mxu0 %v248
    %1194 = vmatprep.subr.mxu0 %v253
    %1195 = vmatpush1.msra.mxu0 %v252
    %1196 = vmatprep.subr.mxu0 %v257
    %1197 = vmatpush1.msra.mxu0 %v256
    %1198 = vmatprep.subr.mxu0 %v261
    %1199 = vmatpush1.msra.mxu0 %v260
    %1200 = vmatprep.subr.mxu0 %v265
    %1201 = vmatpush1.msra.mxu0 %v264
    %1202 = vmatprep.subr.mxu0 %v269
    %1203 = vmatpush1.msra.mxu0 %v268
    %1204 = vmatprep.subr.mxu0 %v273
    %1205 = vmatpush1.msra.mxu0 %v272
    %1206 = vmatprep.subr.mxu0 %v277
    %1207 = vmatpush1.msra.mxu0 %v276
    %1208 = vmatprep.subr.mxu0 %v281
    %1209 = vmatpush1.msra.mxu0 %v280
    %1210 = vmatprep.subr.mxu0 %v285
    %1211 = vmatpush1.msra.mxu0 %v284
    %1212 = vmatprep.subr.mxu0 %v289
    %1213 = vmatpush1.msra.mxu0 %v288
    %1214 = vmatprep.subr.mxu0 %v293
    %1215 = vmatpush1.msra.mxu0 %v292
    %1216 = vmatprep.subr.mxu0 %v297
    %1217 = vmatpush1.msra.mxu0 %v296
    %1218 = vmatprep.subr.mxu0 %v301
    %1219 = vmatpush1.msra.mxu0 %v300
    %1220 = vmatprep.subr.mxu0 %v305
    %1221 = vmatpush1.msra.mxu0 %v304
    %1222 = vmatprep.subr.mxu0 %v309
    %1223 = vmatpush1.msra.mxu0 %v308
    %1224 = vmatprep.subr.mxu0 %v313
    %1225 = vmatpush1.msra.mxu0 %v312
    %1226 = vmatprep.subr.mxu0 %v317
    %1227 = vmatpush1.msra.mxu0 %v316
    %1228 = vmatprep.subr.mxu0 %v321
    %1229 = vmatpush1.msra.mxu0 %v320
    %1230 = vmatprep.subr.mxu0 %v325
    %1231 = vmatpush1.msra.mxu0 %v324
    %1232 = vmatprep.subr.mxu0 %v329
    %1233 = vmatpush1.msra.mxu0 %v328
    %1234 = vmatprep.mubr.f32.mxu0 %v50
    %1235 = vmatmul.mubr.f32.gmra.mrb[0].mxu0 %v49
    %v1236 = vpop.f32.mrb[0].mxu0
    %v1237 = vadd.f32 %v1154, %v1236
    %v1238 = vpop.f32.mrb[0].mxu0
    %v1239 = vadd.f32 %v1156, %v1238
    %1240 = vmatprep.mubr.f32.mxu0 %v59
    %1241 = vmatmul.mubr.f32.gmra.mrb[0].mxu0 %v58
    %v1242 = vpop.f32.mrb[0].mxu0
    %v1243 = vadd.f32 %v1160, %v1242
    %v1244 = vpop.f32.mrb[0].mxu0
    %v1245 = vadd.f32 %v1162, %v1244
    %1246 = vmatprep.mubr.f32.mxu0 %v68
    %1247 = vmatmul.mubr.f32.gmra.mrb[0].mxu0 %v67
    %v1248 = vpop.f32.mrb[0].mxu0
    %v1249 = vadd.f32 %v1166, %v1248
    %v1250 = vpop.f32.mrb[0].mxu0
    %v1251 = vadd.f32 %v1168, %v1250
    %1252 = vdwg.mxu0
    %1253 = vmatprep.subr.mxu0 %v333
    %1254 = vmatpush1.msra.mxu0 %v332
    %1255 = vmatprep.subr.mxu0 %v337
    %1256 = vmatpush1.msra.mxu0 %v336
    %1257 = vmatprep.subr.mxu0 %v341
    %1258 = vmatpush1.msra.mxu0 %v340
    %1259 = vmatprep.subr.mxu0 %v345
    %1260 = vmatpush1.msra.mxu0 %v344
    %1261 = vmatprep.subr.mxu0 %v349
    %1262 = vmatpush1.msra.mxu0 %v348
    %1263 = vmatprep.subr.mxu0 %v353
    %1264 = vmatpush1.msra.mxu0 %v352
    %1265 = vmatprep.subr.mxu0 %v357
    %1266 = vmatpush1.msra.mxu0 %v356
    %1267 = vmatprep.subr.mxu0 %v361
    %1268 = vmatpush1.msra.mxu0 %v360
    %1269 = vmatprep.subr.mxu0 %v365
    %1270 = vmatpush1.msra.mxu0 %v364
    %1271 = vmatprep.subr.mxu0 %v369
    %1272 = vmatpush1.msra.mxu0 %v368
    %1273 = vmatprep.subr.mxu0 %v373
    %1274 = vmatpush1.msra.mxu0 %v372
    %1275 = vmatprep.subr.mxu0 %v377
    %1276 = vmatpush1.msra.mxu0 %v376
    %1277 = vmatprep.subr.mxu0 %v381
    %1278 = vmatpush1.msra.mxu0 %v380
    %1279 = vmatprep.subr.mxu0 %v385
    %1280 = vmatpush1.msra.mxu0 %v384
    %1281 = vmatprep.subr.mxu0 %v389
    %1282 = vmatpush1.msra.mxu0 %v388
    %1283 = vmatprep.subr.mxu0 %v393
    %1284 = vmatpush1.msra.mxu0 %v392
    %1285 = vmatprep.subr.mxu0 %v397
    %1286 = vmatpush1.msra.mxu0 %v396
    %1287 = vmatprep.subr.mxu0 %v401
    %1288 = vmatpush1.msra.mxu0 %v400
    %1289 = vmatprep.subr.mxu0 %v405
    %1290 = vmatpush1.msra.mxu0 %v404
    %1291 = vmatprep.subr.mxu0 %v409
    %1292 = vmatpush1.msra.mxu0 %v408
    %1293 = vmatprep.subr.mxu0 %v413
    %1294 = vmatpush1.msra.mxu0 %v412
    %1295 = vmatprep.subr.mxu0 %v417
    %1296 = vmatpush1.msra.mxu0 %v416
    %1297 = vmatprep.subr.mxu0 %v421
    %1298 = vmatpush1.msra.mxu0 %v420
    %1299 = vmatprep.subr.mxu0 %v425
    %1300 = vmatpush1.msra.mxu0 %v424
    %1301 = vmatprep.subr.mxu0 %v429
    %1302 = vmatpush1.msra.mxu0 %v428
    %1303 = vmatprep.subr.mxu0 %v433
    %1304 = vmatpush1.msra.mxu0 %v432
    %1305 = vmatprep.subr.mxu0 %v437
    %1306 = vmatpush1.msra.mxu0 %v436
    %1307 = vmatprep.subr.mxu0 %v441
    %1308 = vmatpush1.msra.mxu0 %v440
    %1309 = vmatprep.subr.mxu0 %v445
    %1310 = vmatpush1.msra.mxu0 %v444
    %1311 = vmatprep.subr.mxu0 %v449
    %1312 = vmatpush1.msra.mxu0 %v448
    %1313 = vmatprep.subr.mxu0 %v453
    %1314 = vmatpush1.msra.mxu0 %v452
    %1315 = vmatprep.subr.mxu0 %v457
    %1316 = vmatpush1.msra.mxu0 %v456
    %1317 = vmatprep.mubr.f32.mxu0 %v52
    %1318 = vmatmul.mubr.f32.gmra.mrb[0].mxu0 %v51
    %v1319 = vpop.f32.mrb[0].mxu0
    %v1320 = vadd.f32 %v1237, %v1319
    %v1321 = vpop.f32.mrb[0].mxu0
    %v1322 = vadd.f32 %v1239, %v1321
    %1323 = vmatprep.mubr.f32.mxu0 %v61
    %1324 = vmatmul.mubr.f32.gmra.mrb[0].mxu0 %v60
    %v1325 = vpop.f32.mrb[0].mxu0
    %v1326 = vadd.f32 %v1243, %v1325
    %v1327 = vpop.f32.mrb[0].mxu0
    %v1328 = vadd.f32 %v1245, %v1327
    %1329 = vmatprep.mubr.f32.mxu0 %v70
    %1330 = vmatmul.mubr.f32.gmra.mrb[0].mxu0 %v69
    %v1331 = vpop.f32.mrb[0].mxu0
    %v1332 = vadd.f32 %v1249, %v1331
    %v1333 = vpop.f32.mrb[0].mxu0
    %v1334 = vadd.f32 %v1251, %v1333
    %1335 = vdwg.mxu0
    %1336 = vmatprep.subr.mxu0 %v461
    %1337 = vmatpush1.msra.mxu0 %v460
    %1338 = vmatprep.subr.mxu0 %v465
    %1339 = vmatpush1.msra.mxu0 %v464
    %1340 = vmatprep.subr.mxu0 %v469
    %1341 = vmatpush1.msra.mxu0 %v468
    %1342 = vmatprep.subr.mxu0 %v473
    %1343 = vmatpush1.msra.mxu0 %v472
    %1344 = vmatprep.subr.mxu0 %v477
    %1345 = vmatpush1.msra.mxu0 %v476
    %1346 = vmatprep.subr.mxu0 %v481
    %1347 = vmatpush1.msra.mxu0 %v480
    %1348 = vmatprep.subr.mxu0 %v485
    %1349 = vmatpush1.msra.mxu0 %v484
    %1350 = vmatprep.subr.mxu0 %v489
    %1351 = vmatpush1.msra.mxu0 %v488
    %1352 = vmatprep.subr.mxu0 %v493
    %1353 = vmatpush1.msra.mxu0 %v492
    %1354 = vmatprep.subr.mxu0 %v497
    %1355 = vmatpush1.msra.mxu0 %v496
    %1356 = vmatprep.subr.mxu0 %v501
    %1357 = vmatpush1.msra.mxu0 %v500
    %1358 = vmatprep.subr.mxu0 %v505
    %1359 = vmatpush1.msra.mxu0 %v504
    %1360 = vmatprep.subr.mxu0 %v509
    %1361 = vmatpush1.msra.mxu0 %v508
    %1362 = vmatprep.subr.mxu0 %v513
    %1363 = vmatpush1.msra.mxu0 %v512
    %1364 = vmatprep.subr.mxu0 %v517
    %1365 = vmatpush1.msra.mxu0 %v516
    %1366 = vmatprep.subr.mxu0 %v521
    %1367 = vmatpush1.msra.mxu0 %v520
    %1368 = vmatprep.subr.mxu0 %v525
    %1369 = vmatpush1.msra.mxu0 %v524
    %1370 = vmatprep.subr.mxu0 %v529
    %1371 = vmatpush1.msra.mxu0 %v528
    %1372 = vmatprep.subr.mxu0 %v533
    %1373 = vmatpush1.msra.mxu0 %v532
    %1374 = vmatprep.subr.mxu0 %v537
    %1375 = vmatpush1.msra.mxu0 %v536
    %1376 = vmatprep.subr.mxu0 %v541
    %1377 = vmatpush1.msra.mxu0 %v540
    %1378 = vmatprep.subr.mxu0 %v545
    %1379 = vmatpush1.msra.mxu0 %v544
    %1380 = vmatprep.subr.mxu0 %v549
    %1381 = vmatpush1.msra.mxu0 %v548
    %1382 = vmatprep.subr.mxu0 %v553
    %1383 = vmatpush1.msra.mxu0 %v552
    %1384 = vmatprep.subr.mxu0 %v557
    %1385 = vmatpush1.msra.mxu0 %v556
    %1386 = vmatprep.subr.mxu0 %v561
    %1387 = vmatpush1.msra.mxu0 %v560
    %1388 = vmatprep.subr.mxu0 %v565
    %1389 = vmatpush1.msra.mxu0 %v564
    %1390 = vmatprep.subr.mxu0 %v569
    %1391 = vmatpush1.msra.mxu0 %v568
    %1392 = vmatprep.subr.mxu0 %v573
    %1393 = vmatpush1.msra.mxu0 %v572
    %1394 = vmatprep.subr.mxu0 %v577
    %1395 = vmatpush1.msra.mxu0 %v576
    %1396 = vmatprep.subr.mxu0 %v581
    %1397 = vmatpush1.msra.mxu0 %v580
    %1398 = vmatprep.subr.mxu0 %v585
    %1399 = vmatpush1.msra.mxu0 %v584
    %1400 = vmatprep.mubr.f32.mxu0 %v54
    %1401 = vmatmul.mubr.f32.gmra.mrb[0].mxu0 %v53
    %v1402 = vpop.f32.mrb[0].mxu0
    %v1403 = vadd.f32 %v1320, %v1402
    %v1404 = vpop.f32.mrb[0].mxu0
    %v1405 = vadd.f32 %v1322, %v1404
    %1406 = vmatprep.mubr.f32.mxu0 %v63
    %1407 = vmatmul.mubr.f32.gmra.mrb[0].mxu0 %v62
    %v1408 = vpop.f32.mrb[0].mxu0
    %v1409 = vadd.f32 %v1326, %v1408
    %v1410 = vpop.f32.mrb[0].mxu0
    %v1411 = vadd.f32 %v1328, %v1410
    %1412 = vmatprep.mubr.f32.mxu0 %v72
    %1413 = vmatmul.mubr.f32.gmra.mrb[0].mxu0 %v71
    %v1414 = vpop.f32.mrb[0].mxu0
    %v1415 = vadd.f32 %v1332, %v1414
    %v1416 = vpop.f32.mrb[0].mxu0
    %v1417 = vadd.f32 %v1334, %v1416
    %1418 = vdwg.mxu0
    %1419 = vmatprep.subr.mxu0 %v589
    %1420 = vmatpush1.msra.mxu0 %v588
    %1421 = vmatprep.subr.mxu0 %v593
    %1422 = vmatpush1.msra.mxu0 %v592
    %1423 = vmatprep.subr.mxu0 %v597
    %1424 = vmatpush1.msra.mxu0 %v596
    %1425 = vmatprep.subr.mxu0 %v601
    %1426 = vmatpush1.msra.mxu0 %v600
    %1427 = vmatprep.subr.mxu0 %v605
    %1428 = vmatpush1.msra.mxu0 %v604
    %1429 = vmatprep.subr.mxu0 %v609
    %1430 = vmatpush1.msra.mxu0 %v608
    %1431 = vmatprep.subr.mxu0 %v613
    %1432 = vmatpush1.msra.mxu0 %v612
    %1433 = vmatprep.subr.mxu0 %v617
    %1434 = vmatpush1.msra.mxu0 %v616
    %1435 = vmatprep.subr.mxu0 %v621
    %1436 = vmatpush1.msra.mxu0 %v620
    %1437 = vmatprep.subr.mxu0 %v625
    %1438 = vmatpush1.msra.mxu0 %v624
    %1439 = vmatprep.subr.mxu0 %v629
    %1440 = vmatpush1.msra.mxu0 %v628
    %1441 = vmatprep.subr.mxu0 %v633
    %1442 = vmatpush1.msra.mxu0 %v632
    %1443 = vmatprep.subr.mxu0 %v637
    %1444 = vmatpush1.msra.mxu0 %v636
    %1445 = vmatprep.subr.mxu0 %v641
    %1446 = vmatpush1.msra.mxu0 %v640
    %1447 = vmatprep.subr.mxu0 %v645
    %1448 = vmatpush1.msra.mxu0 %v644
    %1449 = vmatprep.subr.mxu0 %v649
    %1450 = vmatpush1.msra.mxu0 %v648
    %1451 = vmatprep.subr.mxu0 0.0
    %1452 = vmatpush1.msra.mxu0 0.0
    %1453 = vmatprep.subr.mxu0 0.0
    %1454 = vmatpush1.msra.mxu0 0.0
    %1455 = vmatprep.subr.mxu0 0.0
    %1456 = vmatpush1.msra.mxu0 0.0
    %1457 = vmatprep.subr.mxu0 0.0
    %1458 = vmatpush1.msra.mxu0 0.0
    %1459 = vmatprep.subr.mxu0 0.0
    %1460 = vmatpush1.msra.mxu0 0.0
    %1461 = vmatprep.subr.mxu0 0.0
    %1462 = vmatpush1.msra.mxu0 0.0
    %1463 = vmatprep.subr.mxu0 0.0
    %1464 = vmatpush1.msra.mxu0 0.0
    %1465 = vmatprep.subr.mxu0 0.0
    %1466 = vmatpush1.msra.mxu0 0.0
    %1467 = vmatprep.subr.mxu0 0.0
    %1468 = vmatpush1.msra.mxu0 0.0
    %1469 = vmatprep.subr.mxu0 0.0
    %1470 = vmatpush1.msra.mxu0 0.0
    %1471 = vmatprep.subr.mxu0 0.0
    %1472 = vmatpush1.msra.mxu0 0.0
    %1473 = vmatprep.subr.mxu0 0.0
    %1474 = vmatpush1.msra.mxu0 0.0
    %1475 = vmatprep.subr.mxu0 0.0
    %1476 = vmatpush1.msra.mxu0 0.0
    %1477 = vmatprep.subr.mxu0 0.0
    %1478 = vmatpush1.msra.mxu0 0.0
    %1479 = vmatprep.subr.mxu0 0.0
    %1480 = vmatpush1.msra.mxu0 0.0
    %1481 = vmatprep.subr.mxu0 0.0
    %1482 = vmatpush1.msra.mxu0 0.0
    %1483 = vmatprep.mubr.f32.mxu0 0.0
    %1484 = vmatmul.mubr.f32.gmra.mrb[0].mxu0 %v55
    %v1485 = vpop.f32.mrb[0].mxu0
    %v1486 = vadd.f32 %v1403, %v1485
    %v1487 = vpop.f32.mrb[0].mxu0
    %v1488 = vadd.f32 %v1405, %v1487
    %1489 = vmatprep.mubr.f32.mxu0 0.0
    %1490 = vmatmul.mubr.f32.gmra.mrb[0].mxu0 %v64
    %v1491 = vpop.f32.mrb[0].mxu0
    %v1492 = vadd.f32 %v1409, %v1491
    %v1493 = vpop.f32.mrb[0].mxu0
    %v1494 = vadd.f32 %v1411, %v1493
    %1495 = vmatprep.mubr.f32.mxu0 0.0
    %1496 = vmatmul.mubr.f32.gmra.mrb[0].mxu0 %v73
    %v1497 = vpop.f32.mrb[0].mxu0
    %v1498 = vadd.f32 %v1415, %v1497
    %v1499 = vpop.f32.mrb[0].mxu0
    %v1500 = vadd.f32 %v1417, %v1499
    %1501 = vdwg.mxu0
    %v1502 = vmax.f32 %v1071, 0.0
    %v1503 = vmax.f32 %v1073, 0.0
    %v1504 = vmax.f32 %v1486, 0.0
    %v1505 = vmax.f32 %v1488, 0.0
    %v1506 = vmax.f32 %v1077, 0.0
    %v1507 = vmax.f32 %v1079, 0.0
    %v1508 = vmax.f32 %v1492, 0.0
    %v1509 = vmax.f32 %v1494, 0.0
    %v1510 = vmax.f32 %v1083, 0.0
    %v1511 = vmax.f32 %v1085, 0.0
    %v1512 = vmax.f32 %v1498, 0.0
    %v1513 = vmax.f32 %v1500, 0.0
    %v1514 = vmax.f32 %v1502, %v1503
    %v1515 = vmax.f32 %v1506, %v1507
    %v1516 = vmax.f32 %v1510, %v1511
    %v1517 = vmax.f32 %v1504, %v1505
    %v1518 = vmax.f32 %v1508, %v1509
    %v1519 = vmax.f32 %v1512, %v1513
    %v1520 = vmax.f32 %v1514, %v1517
    %v1521 = vmax.f32 %v1515, %v1518
    %v1522 = vmax.f32 %v1516, %v1519
    %vm1525 = vcmask 1043456
    %v1526 = vrot.slane %v1521, 4
    %v1527 = vrot.slane %v1522, 4
    %v1528 = vsel %vm1525, %v1526, %v1527
    %v1531 = vrot.slane %v1520, 2
    %vm1533 = vcmask 1041408
    %v1534 = vrot.slane %v1521, 6
    %v1535 = vrot.slane %v1522, 6
    %v1536 = vsel %vm1533, %v1534, %v1535
    %v1538 = vrot.slane %v1520, 4
    %v1539 = vsel %vm1525, %v1538, %v1526
    %v1541 = vld [vmem:[#allocation2 + $0x1200] sm:$0xff]
    %v1542 = vld [vmem:[#allocation2 + $0x1208] sm:$0xff]
    %v1543 = vld [vmem:[#allocation2 + $0x1210] sm:$0xff]
    %v1544 = vld [vmem:[#allocation2 + $0x1218] sm:$0xff]
    %v1545 = vld [vmem:[#allocation2 + $0x1220] sm:$0xff]
    %v1546 = vld [vmem:[#allocation2 + $0x1228] sm:$0xff]
    %v1547 = vld [vmem:[#allocation2 + $0x1230] sm:$0xff]
    %v1548 = vld [vmem:[#allocation2 + $0x1238] sm:$0xff]
    %v1549 = vld [vmem:[#allocation2 + $0x1240] sm:$0xff]
    %v1550 = vld [vmem:[#allocation2 + $0x1248] sm:$0xff]
    %v1551 = vld [vmem:[#allocation2 + $0x1250] sm:$0xff]
    %v1552 = vld [vmem:[#allocation2 + $0x1258] sm:$0xff]
    %v1553 = vld [vmem:[#allocation2 + $0x1260] sm:$0xff]
    %v1554 = vld [vmem:[#allocation2 + $0x1268] sm:$0xff]
    %v1555 = vld [vmem:[#allocation2 + $0x1270] sm:$0xff]
    %v1556 = vld [vmem:[#allocation2 + $0x1278] sm:$0xff]
    %v1557 = vld [vmem:[#allocation2 + $0x1280] sm:$0xff]
    %v1558 = vld [vmem:[#allocation2 + $0x1288] sm:$0xff]
    %v1559 = vld [vmem:[#allocation2 + $0x1290] sm:$0xff]
    %v1560 = vld [vmem:[#allocation2 + $0x1298] sm:$0xff]
    %v1561 = vld [vmem:[#allocation2 + $0x12a0] sm:$0xff]
    %v1562 = vld [vmem:[#allocation2 + $0x12a8] sm:$0xff]
    %v1563 = vld [vmem:[#allocation2 + $0x12b0] sm:$0xff]
    %v1564 = vld [vmem:[#allocation2 + $0x12b8] sm:$0xff]
    %v1565 = vld [vmem:[#allocation2 + $0x12c0] sm:$0xff]
    %v1566 = vld [vmem:[#allocation2 + $0x12c8] sm:$0xff]
    %v1567 = vld [vmem:[#allocation2 + $0x12d0] sm:$0xff]
    %v1568 = vld [vmem:[#allocation2 + $0x12d8] sm:$0xff]
    %v1569 = vld [vmem:[#allocation2 + $0x12e0] sm:$0xff]
    %v1570 = vld [vmem:[#allocation2 + $0x12e8] sm:$0xff]
    %v1571 = vld [vmem:[#allocation2 + $0x12f0] sm:$0xff]
    %v1572 = vld [vmem:[#allocation2 + $0x12f8] sm:$0xff]
    %v1573 = vld [vmem:[#allocation2 + $0x1300] sm:$0xff]
    %v1574 = vld [vmem:[#allocation2 + $0x1308] sm:$0xff]
    %v1575 = vld [vmem:[#allocation2 + $0x1310] sm:$0xff]
    %v1576 = vld [vmem:[#allocation2 + $0x1318] sm:$0xff]
    %v1577 = vld [vmem:[#allocation2 + $0x1320] sm:$0xff]
    %v1578 = vld [vmem:[#allocation2 + $0x1328] sm:$0xff]
    %v1579 = vld [vmem:[#allocation2 + $0x1330] sm:$0xff]
    %v1580 = vld [vmem:[#allocation2 + $0x1338] sm:$0xff]
    %v1581 = vld [vmem:[#allocation2 + $0x1340] sm:$0xff]
    %v1582 = vld [vmem:[#allocation2 + $0x1348] sm:$0xff]
    %v1583 = vld [vmem:[#allocation2 + $0x1350] sm:$0xff]
    %v1584 = vld [vmem:[#allocation2 + $0x1358] sm:$0xff]
    %v1585 = vld [vmem:[#allocation2 + $0x1360] sm:$0xff]
    %v1586 = vld [vmem:[#allocation2 + $0x1368] sm:$0xff]
    %v1587 = vld [vmem:[#allocation2 + $0x1370] sm:$0xff]
    %v1588 = vld [vmem:[#allocation2 + $0x1378] sm:$0xff]
    %v1589 = vld [vmem:[#allocation2 + $0x1380] sm:$0xff]
    %v1590 = vld [vmem:[#allocation2 + $0x1388] sm:$0xff]
    %v1591 = vld [vmem:[#allocation2 + $0x1390] sm:$0xff]
    %v1592 = vld [vmem:[#allocation2 + $0x1398] sm:$0xff]
    %v1593 = vld [vmem:[#allocation2 + $0x13a0] sm:$0xff]
    %v1594 = vld [vmem:[#allocation2 + $0x13a8] sm:$0xff]
    %v1595 = vld [vmem:[#allocation2 + $0x13b0] sm:$0xff]
    %v1596 = vld [vmem:[#allocation2 + $0x13b8] sm:$0xff]
    %v1597 = vld [vmem:[#allocation2 + $0x13c0] sm:$0xff]
    %v1598 = vld [vmem:[#allocation2 + $0x13c8] sm:$0xff]
    %v1599 = vld [vmem:[#allocation2 + $0x13d0] sm:$0xff]
    %v1600 = vld [vmem:[#allocation2 + $0x13d8] sm:$0xff]
    %v1601 = vld [vmem:[#allocation2 + $0x13e0] sm:$0xff]
    %v1602 = vld [vmem:[#allocation2 + $0x13e8] sm:$0xff]
    %v1603 = vld [vmem:[#allocation2 + $0x13f0] sm:$0xff]
    %v1604 = vld [vmem:[#allocation2 + $0x13f8] sm:$0xff]
    %v1605 = vld [vmem:[#allocation2 + $0x1400] sm:$0xff]
    %v1606 = vld [vmem:[#allocation2 + $0x1408] sm:$0xff]
    %v1607 = vld [vmem:[#allocation2 + $0x1410] sm:$0xff]
    %v1608 = vld [vmem:[#allocation2 + $0x1418] sm:$0xff]
    %v1609 = vld [vmem:[#allocation2 + $0x1420] sm:$0xff]
    %v1610 = vld [vmem:[#allocation2 + $0x1428] sm:$0xff]
    %v1611 = vld [vmem:[#allocation2 + $0x1430] sm:$0xff]
    %v1612 = vld [vmem:[#allocation2 + $0x1438] sm:$0xff]
    %v1613 = vld [vmem:[#allocation2 + $0x1440] sm:$0xff]
    %v1614 = vld [vmem:[#allocation2 + $0x1448] sm:$0xff]
    %v1615 = vld [vmem:[#allocation2 + $0x1450] sm:$0xff]
    %v1616 = vld [vmem:[#allocation2 + $0x1458] sm:$0xff]
    %v1617 = vld [vmem:[#allocation2 + $0x1460] sm:$0xff]
    %v1618 = vld [vmem:[#allocation2 + $0x1468] sm:$0xff]
    %v1619 = vld [vmem:[#allocation2 + $0x1470] sm:$0xff]
    %v1620 = vld [vmem:[#allocation2 + $0x1478] sm:$0xff]
    %v1621 = vld [vmem:[#allocation2 + $0x1480] sm:$0xff]
    %v1622 = vld [vmem:[#allocation2 + $0x1488] sm:$0xff]
    %v1623 = vld [vmem:[#allocation2 + $0x1490] sm:$0xff]
    %v1624 = vld [vmem:[#allocation2 + $0x1498] sm:$0xff]
    %v1625 = vld [vmem:[#allocation2 + $0x14a0] sm:$0xff]
    %v1626 = vld [vmem:[#allocation2 + $0x14a8] sm:$0xff]
    %v1627 = vld [vmem:[#allocation2 + $0x14b0] sm:$0xff]
    %v1628 = vld [vmem:[#allocation2 + $0x14b8] sm:$0xff]
    %v1629 = vld [vmem:[#allocation2 + $0x14c0] sm:$0xff]
    %v1630 = vld [vmem:[#allocation2 + $0x14c8] sm:$0xff]
    %v1631 = vld [vmem:[#allocation2 + $0x14d0] sm:$0xff]
    %v1632 = vld [vmem:[#allocation2 + $0x14d8] sm:$0xff]
    %v1633 = vld [vmem:[#allocation2 + $0x14e0] sm:$0xff]
    %v1634 = vld [vmem:[#allocation2 + $0x14e8] sm:$0xff]
    %v1635 = vld [vmem:[#allocation2 + $0x14f0] sm:$0xff]
    %v1636 = vld [vmem:[#allocation2 + $0x14f8] sm:$0xff]
    %v1637 = vld [vmem:[#allocation2 + $0x1500] sm:$0xff]
    %v1638 = vld [vmem:[#allocation2 + $0x1508] sm:$0xff]
    %v1639 = vld [vmem:[#allocation2 + $0x1510] sm:$0xff]
    %v1640 = vld [vmem:[#allocation2 + $0x1518] sm:$0xff]
    %v1641 = vld [vmem:[#allocation2 + $0x1520] sm:$0xff]
    %v1642 = vld [vmem:[#allocation2 + $0x1528] sm:$0xff]
    %v1643 = vld [vmem:[#allocation2 + $0x1530] sm:$0xff]
    %v1644 = vld [vmem:[#allocation2 + $0x1538] sm:$0xff]
    %v1645 = vld [vmem:[#allocation2 + $0x1540] sm:$0xff]
    %v1646 = vld [vmem:[#allocation2 + $0x1548] sm:$0xff]
    %v1647 = vld [vmem:[#allocation2 + $0x1550] sm:$0xff]
    %v1648 = vld [vmem:[#allocation2 + $0x1558] sm:$0xff]
    %v1649 = vld [vmem:[#allocation2 + $0x1560] sm:$0xff]
    %v1650 = vld [vmem:[#allocation2 + $0x1568] sm:$0xff]
    %v1651 = vld [vmem:[#allocation2 + $0x1570] sm:$0xff]
    %v1652 = vld [vmem:[#allocation2 + $0x1578] sm:$0xff]
    %v1653 = vld [vmem:[#allocation2 + $0x1580] sm:$0xff]
    %v1654 = vld [vmem:[#allocation2 + $0x1588] sm:$0xff]
    %v1655 = vld [vmem:[#allocation2 + $0x1590] sm:$0xff]
    %v1656 = vld [vmem:[#allocation2 + $0x1598] sm:$0xff]
    %v1657 = vld [vmem:[#allocation2 + $0x15a0] sm:$0xff]
    %v1658 = vld [vmem:[#allocation2 + $0x15a8] sm:$0xff]
    %v1659 = vld [vmem:[#allocation2 + $0x15b0] sm:$0xff]
    %v1660 = vld [vmem:[#allocation2 + $0x15b8] sm:$0xff]
    %v1661 = vld [vmem:[#allocation2 + $0x15c0] sm:$0xff]
    %v1662 = vld [vmem:[#allocation2 + $0x15c8] sm:$0xff]
    %v1663 = vld [vmem:[#allocation2 + $0x15d0] sm:$0xff]
    %v1664 = vld [vmem:[#allocation2 + $0x15d8] sm:$0xff]
    %v1665 = vld [vmem:[#allocation2 + $0x15e0] sm:$0xff]
    %v1666 = vld [vmem:[#allocation2 + $0x15e8] sm:$0xff]
    %v1667 = vld [vmem:[#allocation2 + $0x15f0] sm:$0xff]
    %v1668 = vld [vmem:[#allocation2 + $0x15f8] sm:$0xff]
    %v1669 = vld [vmem:[#allocation2 + $0x1600] sm:$0xff]
    %v1670 = vld [vmem:[#allocation2 + $0x1608] sm:$0xff]
    %v1671 = vld [vmem:[#allocation2 + $0x1610] sm:$0xff]
    %v1672 = vld [vmem:[#allocation2 + $0x1618] sm:$0xff]
    %v1673 = vld [vmem:[#allocation2 + $0x1620] sm:$0xff]
    %v1674 = vld [vmem:[#allocation2 + $0x1628] sm:$0xff]
    %v1675 = vld [vmem:[#allocation2 + $0x1630] sm:$0xff]
    %v1676 = vld [vmem:[#allocation2 + $0x1638] sm:$0xff]
    %v1677 = vld [vmem:[#allocation2 + $0x1640] sm:$0xff]
    %v1678 = vld [vmem:[#allocation2 + $0x1648] sm:$0xff]
    %v1679 = vld [vmem:[#allocation2 + $0x1650] sm:$0xff]
    %v1680 = vld [vmem:[#allocation2 + $0x1658] sm:$0xff]
    %v1681 = vld [vmem:[#allocation2 + $0x1660] sm:$0xff]
    %v1682 = vld [vmem:[#allocation2 + $0x1668] sm:$0xff]
    %v1683 = vld [vmem:[#allocation2 + $0x1670] sm:$0xff]
    %v1684 = vld [vmem:[#allocation2 + $0x1678] sm:$0xff]
    %v1685 = vld [vmem:[#allocation2 + $0x1680] sm:$0xff]
    %v1686 = vld [vmem:[#allocation2 + $0x1688] sm:$0xff]
    %v1687 = vld [vmem:[#allocation2 + $0x1690] sm:$0xff]
    %v1688 = vld [vmem:[#allocation2 + $0x1698] sm:$0xff]
    %v1689 = vld [vmem:[#allocation2 + $0x16a0] sm:$0xff]
    %v1690 = vld [vmem:[#allocation2 + $0x16a8] sm:$0xff]
    %v1691 = vld [vmem:[#allocation2 + $0x16b0] sm:$0xff]
    %v1692 = vld [vmem:[#allocation2 + $0x16b8] sm:$0xff]
    %v1693 = vld [vmem:[#allocation2 + $0x16c0] sm:$0xff]
    %v1694 = vld [vmem:[#allocation2 + $0x16c8] sm:$0xff]
    %v1695 = vld [vmem:[#allocation2 + $0x16d0] sm:$0xff]
    %v1696 = vld [vmem:[#allocation2 + $0x16d8] sm:$0xff]
    %v1697 = vld [vmem:[#allocation2 + $0x16e0] sm:$0xff]
    %v1698 = vld [vmem:[#allocation2 + $0x16e8] sm:$0xff]
    %v1699 = vld [vmem:[#allocation2 + $0x16f0] sm:$0xff]
    %v1700 = vld [vmem:[#allocation2 + $0x16f8] sm:$0xff]
    %v1701 = vld [vmem:[#allocation2 + $0x1700] sm:$0xff]
    %v1702 = vld [vmem:[#allocation2 + $0x1708] sm:$0xff]
    %v1703 = vld [vmem:[#allocation2 + $0x1710] sm:$0xff]
    %v1704 = vld [vmem:[#allocation2 + $0x1718] sm:$0xff]
    %v1705 = vld [vmem:[#allocation2 + $0x1720] sm:$0xff]
    %v1706 = vld [vmem:[#allocation2 + $0x1728] sm:$0xff]
    %v1707 = vld [vmem:[#allocation2 + $0x1730] sm:$0xff]
    %v1708 = vld [vmem:[#allocation2 + $0x1738] sm:$0xff]
    %v1709 = vld [vmem:[#allocation2 + $0x1740] sm:$0xff]
    %v1710 = vld [vmem:[#allocation2 + $0x1748] sm:$0xff]
    %v1711 = vld [vmem:[#allocation2 + $0x1750] sm:$0xff]
    %v1712 = vld [vmem:[#allocation2 + $0x1758] sm:$0xff]
    %v1713 = vld [vmem:[#allocation2 + $0x1760] sm:$0xff]
    %v1714 = vld [vmem:[#allocation2 + $0x1768] sm:$0xff]
    %v1715 = vld [vmem:[#allocation2 + $0x1770] sm:$0xff]
    %v1716 = vld [vmem:[#allocation2 + $0x1778] sm:$0xff]
    %v1717 = vld [vmem:[#allocation2 + $0x1780] sm:$0xff]
    %v1718 = vld [vmem:[#allocation2 + $0x1788] sm:$0xff]
    %v1719 = vld [vmem:[#allocation2 + $0x1790] sm:$0xff]
    %v1720 = vld [vmem:[#allocation2 + $0x1798] sm:$0xff]
    %v1721 = vld [vmem:[#allocation2 + $0x17a0] sm:$0xff]
    %v1722 = vld [vmem:[#allocation2 + $0x17a8] sm:$0xff]
    %v1723 = vld [vmem:[#allocation2 + $0x17b0] sm:$0xff]
    %v1724 = vld [vmem:[#allocation2 + $0x17b8] sm:$0xff]
    %v1725 = vld [vmem:[#allocation2 + $0x17c0] sm:$0xff]
    %v1726 = vld [vmem:[#allocation2 + $0x17c8] sm:$0xff]
    %v1727 = vld [vmem:[#allocation2 + $0x17d0] sm:$0xff]
    %v1728 = vld [vmem:[#allocation2 + $0x17d8] sm:$0xff]
    %v1729 = vld [vmem:[#allocation2 + $0x17e0] sm:$0xff]
    %v1730 = vld [vmem:[#allocation2 + $0x17e8] sm:$0xff]
    %v1731 = vld [vmem:[#allocation2 + $0x17f0] sm:$0xff]
    %v1732 = vld [vmem:[#allocation2 + $0x17f8] sm:$0xff]
    %v1733 = vld [vmem:[#allocation2 + $0x1800] sm:$0xff]
    %v1734 = vld [vmem:[#allocation2 + $0x1808] sm:$0xff]
    %v1735 = vld [vmem:[#allocation2 + $0x1810] sm:$0xff]
    %v1736 = vld [vmem:[#allocation2 + $0x1818] sm:$0xff]
    %v1737 = vld [vmem:[#allocation2 + $0x1820] sm:$0xff]
    %v1738 = vld [vmem:[#allocation2 + $0x1828] sm:$0xff]
    %v1739 = vld [vmem:[#allocation2 + $0x1830] sm:$0xff]
    %v1740 = vld [vmem:[#allocation2 + $0x1838] sm:$0xff]
    %v1741 = vld [vmem:[#allocation2 + $0x1840] sm:$0xff]
    %v1742 = vld [vmem:[#allocation2 + $0x1848] sm:$0xff]
    %v1743 = vld [vmem:[#allocation2 + $0x1850] sm:$0xff]
    %v1744 = vld [vmem:[#allocation2 + $0x1858] sm:$0xff]
    %v1745 = vld [vmem:[#allocation2 + $0x1860] sm:$0xff]
    %v1746 = vld [vmem:[#allocation2 + $0x1868] sm:$0xff]
    %v1747 = vld [vmem:[#allocation2 + $0x1870] sm:$0xff]
    %v1748 = vld [vmem:[#allocation2 + $0x1878] sm:$0xff]
    %v1749 = vld [vmem:[#allocation2 + $0x1880] sm:$0xff]
    %v1750 = vld [vmem:[#allocation2 + $0x1888] sm:$0xff]
    %v1751 = vld [vmem:[#allocation2 + $0x1890] sm:$0xff]
    %v1752 = vld [vmem:[#allocation2 + $0x1898] sm:$0xff]
    %v1753 = vld [vmem:[#allocation2 + $0x18a0] sm:$0xff]
    %v1754 = vld [vmem:[#allocation2 + $0x18a8] sm:$0xff]
    %v1755 = vld [vmem:[#allocation2 + $0x18b0] sm:$0xff]
    %v1756 = vld [vmem:[#allocation2 + $0x18b8] sm:$0xff]
    %v1757 = vld [vmem:[#allocation2 + $0x18c0] sm:$0xff]
    %v1758 = vld [vmem:[#allocation2 + $0x18c8] sm:$0xff]
    %v1759 = vld [vmem:[#allocation2 + $0x18d0] sm:$0xff]
    %v1760 = vld [vmem:[#allocation2 + $0x18d8] sm:$0xff]
    %v1761 = vld [vmem:[#allocation2 + $0x18e0] sm:$0xff]
    %v1762 = vld [vmem:[#allocation2 + $0x18e8] sm:$0xff]
    %v1763 = vld [vmem:[#allocation2 + $0x18f0] sm:$0xff]
    %v1764 = vld [vmem:[#allocation2 + $0x18f8] sm:$0xff]
    %v1765 = vld [vmem:[#allocation2 + $0x1900] sm:$0xff]
    %v1766 = vld [vmem:[#allocation2 + $0x1908] sm:$0xff]
    %v1767 = vld [vmem:[#allocation2 + $0x1910] sm:$0xff]
    %v1768 = vld [vmem:[#allocation2 + $0x1918] sm:$0xff]
    %v1769 = vld [vmem:[#allocation2 + $0x1920] sm:$0xff]
    %v1770 = vld [vmem:[#allocation2 + $0x1928] sm:$0xff]
    %v1771 = vld [vmem:[#allocation2 + $0x1930] sm:$0xff]
    %v1772 = vld [vmem:[#allocation2 + $0x1938] sm:$0xff]
    %v1773 = vld [vmem:[#allocation2 + $0x1940] sm:$0xff]
    %v1774 = vld [vmem:[#allocation2 + $0x1948] sm:$0xff]
    %v1775 = vld [vmem:[#allocation2 + $0x1950] sm:$0xff]
    %v1776 = vld [vmem:[#allocation2 + $0x1958] sm:$0xff]
    %v1777 = vld [vmem:[#allocation2 + $0x1960] sm:$0xff]
    %v1778 = vld [vmem:[#allocation2 + $0x1968] sm:$0xff]
    %v1779 = vld [vmem:[#allocation2 + $0x1970] sm:$0xff]
    %v1780 = vld [vmem:[#allocation2 + $0x1978] sm:$0xff]
    %v1781 = vld [vmem:[#allocation2 + $0x1980] sm:$0xff]
    %v1782 = vld [vmem:[#allocation2 + $0x1988] sm:$0xff]
    %v1783 = vld [vmem:[#allocation2 + $0x1990] sm:$0xff]
    %v1784 = vld [vmem:[#allocation2 + $0x1998] sm:$0xff]
    %v1785 = vld [vmem:[#allocation2 + $0x19a0] sm:$0xff]
    %v1786 = vld [vmem:[#allocation2 + $0x19a8] sm:$0xff]
    %v1787 = vld [vmem:[#allocation2 + $0x19b0] sm:$0xff]
    %v1788 = vld [vmem:[#allocation2 + $0x19b8] sm:$0xff]
    %v1789 = vld [vmem:[#allocation2 + $0x19c0] sm:$0xff]
    %v1790 = vld [vmem:[#allocation2 + $0x19c8] sm:$0xff]
    %v1791 = vld [vmem:[#allocation2 + $0x19d0] sm:$0xff]
    %v1792 = vld [vmem:[#allocation2 + $0x19d8] sm:$0xff]
    %v1793 = vld [vmem:[#allocation2 + $0x19e0] sm:$0xff]
    %v1794 = vld [vmem:[#allocation2 + $0x19e8] sm:$0xff]
    %v1795 = vld [vmem:[#allocation2 + $0x19f0] sm:$0xff]
    %v1796 = vld [vmem:[#allocation2 + $0x19f8] sm:$0xff]
    %v1797 = vld [vmem:[#allocation2 + $0x1a00] sm:$0xff]
    %v1798 = vld [vmem:[#allocation2 + $0x1a08] sm:$0xff]
    %v1799 = vld [vmem:[#allocation2 + $0x1a10] sm:$0xff]
    %v1800 = vld [vmem:[#allocation2 + $0x1a18] sm:$0xff]
    %v1801 = vld [vmem:[#allocation2 + $0x1a20] sm:$0xff]
    %v1802 = vld [vmem:[#allocation2 + $0x1a28] sm:$0xff]
    %v1803 = vld [vmem:[#allocation2 + $0x1a30] sm:$0xff]
    %v1804 = vld [vmem:[#allocation2 + $0x1a38] sm:$0xff]
    %v1805 = vld [vmem:[#allocation2 + $0x1a40] sm:$0xff]
    %v1806 = vld [vmem:[#allocation2 + $0x1a48] sm:$0xff]
    %v1807 = vld [vmem:[#allocation2 + $0x1a50] sm:$0xff]
    %v1808 = vld [vmem:[#allocation2 + $0x1a58] sm:$0xff]
    %v1809 = vld [vmem:[#allocation2 + $0x1a60] sm:$0xff]
    %v1810 = vld [vmem:[#allocation2 + $0x1a68] sm:$0xff]
    %v1811 = vld [vmem:[#allocation2 + $0x1a70] sm:$0xff]
    %v1812 = vld [vmem:[#allocation2 + $0x1a78] sm:$0xff]
    %v1813 = vld [vmem:[#allocation2 + $0x1a80] sm:$0xff]
    %v1814 = vld [vmem:[#allocation2 + $0x1a88] sm:$0xff]
    %v1815 = vld [vmem:[#allocation2 + $0x1a90] sm:$0xff]
    %v1816 = vld [vmem:[#allocation2 + $0x1a98] sm:$0xff]
    %v1817 = vld [vmem:[#allocation2 + $0x1aa0] sm:$0xff]
    %v1818 = vld [vmem:[#allocation2 + $0x1aa8] sm:$0xff]
    %v1819 = vld [vmem:[#allocation2 + $0x1ab0] sm:$0xff]
    %v1820 = vld [vmem:[#allocation2 + $0x1ab8] sm:$0xff]
    %v1821 = vld [vmem:[#allocation2 + $0x1ac0] sm:$0xff]
    %v1822 = vld [vmem:[#allocation2 + $0x1ac8] sm:$0xff]
    %v1823 = vld [vmem:[#allocation2 + $0x1ad0] sm:$0xff]
    %v1824 = vld [vmem:[#allocation2 + $0x1ad8] sm:$0xff]
    %v1825 = vld [vmem:[#allocation2 + $0x1ae0] sm:$0xff]
    %v1826 = vld [vmem:[#allocation2 + $0x1ae8] sm:$0xff]
    %v1827 = vld [vmem:[#allocation2 + $0x1af0] sm:$0xff]
    %v1828 = vld [vmem:[#allocation2 + $0x1af8] sm:$0xff]
    %v1829 = vld [vmem:[#allocation2 + $0x1b00] sm:$0xff]
    %v1830 = vld [vmem:[#allocation2 + $0x1b08] sm:$0xff]
    %v1831 = vld [vmem:[#allocation2 + $0x1b10] sm:$0xff]
    %v1832 = vld [vmem:[#allocation2 + $0x1b18] sm:$0xff]
    %v1833 = vld [vmem:[#allocation2 + $0x1b20] sm:$0xff]
    %v1834 = vld [vmem:[#allocation2 + $0x1b28] sm:$0xff]
    %v1835 = vld [vmem:[#allocation2 + $0x1b30] sm:$0xff]
    %v1836 = vld [vmem:[#allocation2 + $0x1b38] sm:$0xff]
    %v1837 = vld [vmem:[#allocation2 + $0x1b40] sm:$0xff]
    %v1838 = vld [vmem:[#allocation2 + $0x1b48] sm:$0xff]
    %v1839 = vld [vmem:[#allocation2 + $0x1b50] sm:$0xff]
    %v1840 = vld [vmem:[#allocation2 + $0x1b58] sm:$0xff]
    %v1841 = vld [vmem:[#allocation2 + $0x1b60] sm:$0xff]
    %v1842 = vld [vmem:[#allocation2 + $0x1b68] sm:$0xff]
    %v1843 = vld [vmem:[#allocation2 + $0x1b70] sm:$0xff]
    %v1844 = vld [vmem:[#allocation2 + $0x1b78] sm:$0xff]
    %v1845 = vld [vmem:[#allocation2 + $0x1b80] sm:$0xff]
    %v1846 = vld [vmem:[#allocation2 + $0x1b88] sm:$0xff]
    %v1847 = vld [vmem:[#allocation2 + $0x1b90] sm:$0xff]
    %v1848 = vld [vmem:[#allocation2 + $0x1b98] sm:$0xff]
    %v1849 = vld [vmem:[#allocation2 + $0x1ba0] sm:$0xff]
    %v1850 = vld [vmem:[#allocation2 + $0x1ba8] sm:$0xff]
    %v1851 = vld [vmem:[#allocation2 + $0x1bb0] sm:$0xff]
    %v1852 = vld [vmem:[#allocation2 + $0x1bb8] sm:$0xff]
    %v1853 = vld [vmem:[#allocation2 + $0x1bc0] sm:$0xff]
    %v1854 = vld [vmem:[#allocation2 + $0x1bc8] sm:$0xff]
    %v1855 = vld [vmem:[#allocation2 + $0x1bd0] sm:$0xff]
    %v1856 = vld [vmem:[#allocation2 + $0x1bd8] sm:$0xff]
    %v1857 = vld [vmem:[#allocation2 + $0x1be0] sm:$0xff]
    %v1858 = vld [vmem:[#allocation2 + $0x1be8] sm:$0xff]
    %v1859 = vld [vmem:[#allocation2 + $0x1bf0] sm:$0xff]
    %v1860 = vld [vmem:[#allocation2 + $0x1bf8] sm:$0xff]
    %v1861 = vld [vmem:[#allocation2 + $0x1c00] sm:$0xff]
    %v1862 = vld [vmem:[#allocation2 + $0x1c08] sm:$0xff]
    %v1863 = vld [vmem:[#allocation2 + $0x1c10] sm:$0xff]
    %v1864 = vld [vmem:[#allocation2 + $0x1c18] sm:$0xff]
    %v1865 = vld [vmem:[#allocation2 + $0x1c20] sm:$0xff]
    %v1866 = vld [vmem:[#allocation2 + $0x1c28] sm:$0xff]
    %v1867 = vld [vmem:[#allocation2 + $0x1c30] sm:$0xff]
    %v1868 = vld [vmem:[#allocation2 + $0x1c38] sm:$0xff]
    %v1869 = vld [vmem:[#allocation2 + $0x1c40] sm:$0xff]
    %v1870 = vld [vmem:[#allocation2 + $0x1c48] sm:$0xff]
    %v1871 = vld [vmem:[#allocation2 + $0x1c50] sm:$0xff]
    %v1872 = vld [vmem:[#allocation2 + $0x1c58] sm:$0xff]
    %v1873 = vld [vmem:[#allocation2 + $0x1c60] sm:$0xff]
    %v1874 = vld [vmem:[#allocation2 + $0x1c68] sm:$0xff]
    %v1875 = vld [vmem:[#allocation2 + $0x1c70] sm:$0xff]
    %v1876 = vld [vmem:[#allocation2 + $0x1c78] sm:$0xff]
    %v1877 = vld [vmem:[#allocation2 + $0x1c80] sm:$0xff]
    %v1878 = vld [vmem:[#allocation2 + $0x1c88] sm:$0xff]
    %v1879 = vld [vmem:[#allocation2 + $0x1c90] sm:$0xff]
    %v1880 = vld [vmem:[#allocation2 + $0x1c98] sm:$0xff]
    %v1881 = vld [vmem:[#allocation2 + $0x1ca0] sm:$0xff]
    %v1882 = vld [vmem:[#allocation2 + $0x1ca8] sm:$0xff]
    %v1883 = vld [vmem:[#allocation2 + $0x1cb0] sm:$0xff]
    %v1884 = vld [vmem:[#allocation2 + $0x1cb8] sm:$0xff]
    %v1885 = vld [vmem:[#allocation2 + $0x1cc0] sm:$0xff]
    %v1886 = vld [vmem:[#allocation2 + $0x1cc8] sm:$0xff]
    %v1887 = vld [vmem:[#allocation2 + $0x1cd0] sm:$0xff]
    %v1888 = vld [vmem:[#allocation2 + $0x1cd8] sm:$0xff]
    %v1889 = vld [vmem:[#allocation2 + $0x1ce0] sm:$0xff]
    %v1890 = vld [vmem:[#allocation2 + $0x1ce8] sm:$0xff]
    %v1891 = vld [vmem:[#allocation2 + $0x1cf0] sm:$0xff]
    %v1892 = vld [vmem:[#allocation2 + $0x1cf8] sm:$0xff]
    %v1893 = vld [vmem:[#allocation2 + $0x1d00] sm:$0xff]
    %v1894 = vld [vmem:[#allocation2 + $0x1d08] sm:$0xff]
    %v1895 = vld [vmem:[#allocation2 + $0x1d10] sm:$0xff]
    %v1896 = vld [vmem:[#allocation2 + $0x1d18] sm:$0xff]
    %v1897 = vld [vmem:[#allocation2 + $0x1d20] sm:$0xff]
    %v1898 = vld [vmem:[#allocation2 + $0x1d28] sm:$0xff]
    %v1899 = vld [vmem:[#allocation2 + $0x1d30] sm:$0xff]
    %v1900 = vld [vmem:[#allocation2 + $0x1d38] sm:$0xff]
    %v1901 = vld [vmem:[#allocation2 + $0x1d40] sm:$0xff]
    %v1902 = vld [vmem:[#allocation2 + $0x1d48] sm:$0xff]
    %v1903 = vld [vmem:[#allocation2 + $0x1d50] sm:$0xff]
    %v1904 = vld [vmem:[#allocation2 + $0x1d58] sm:$0xff]
    %v1905 = vld [vmem:[#allocation2 + $0x1d60] sm:$0xff]
    %v1906 = vld [vmem:[#allocation2 + $0x1d68] sm:$0xff]
    %v1907 = vld [vmem:[#allocation2 + $0x1d70] sm:$0xff]
    %v1908 = vld [vmem:[#allocation2 + $0x1d78] sm:$0xff]
    %v1909 = vld [vmem:[#allocation2 + $0x1d80] sm:$0xff]
    %v1910 = vld [vmem:[#allocation2 + $0x1d88] sm:$0xff]
    %v1911 = vld [vmem:[#allocation2 + $0x1d90] sm:$0xff]
    %v1912 = vld [vmem:[#allocation2 + $0x1d98] sm:$0xff]
    %v1913 = vld [vmem:[#allocation2 + $0x1da0] sm:$0xff]
    %v1914 = vld [vmem:[#allocation2 + $0x1da8] sm:$0xff]
    %v1915 = vld [vmem:[#allocation2 + $0x1db0] sm:$0xff]
    %v1916 = vld [vmem:[#allocation2 + $0x1db8] sm:$0xff]
    %v1917 = vld [vmem:[#allocation2 + $0x1dc0] sm:$0xff]
    %v1918 = vld [vmem:[#allocation2 + $0x1dc8] sm:$0xff]
    %v1919 = vld [vmem:[#allocation2 + $0x1dd0] sm:$0xff]
    %v1920 = vld [vmem:[#allocation2 + $0x1dd8] sm:$0xff]
    %v1921 = vld [vmem:[#allocation2 + $0x1de0] sm:$0xff]
    %v1922 = vld [vmem:[#allocation2 + $0x1de8] sm:$0xff]
    %v1923 = vld [vmem:[#allocation2 + $0x1df0] sm:$0xff]
    %v1924 = vld [vmem:[#allocation2 + $0x1df8] sm:$0xff]
    %s1925 = scalar_lea.vmem [#allocation5], 1
    %v1926 = vld [vmem:[%s1925] ss:$8 sm:$0xf]
    %v1928 = vlaneseq
    %v1929 = vshrl.u32 %v1928, 7
    %v1930 = vsub.s32 0, %v1929
    %v1931 = vrot.slane %v1926, %v1930
    %v1932 = vlaneseq
    %v1933 = vshrl.u32 %v1932, 7
    %v1934 = vsub.s32 1, %v1933
    %v1935 = vrot.slane %v1926, %v1934
    %v1936 = vlaneseq
    %v1937 = vshrl.u32 %v1936, 7
    %v1938 = vsub.s32 2, %v1937
    %v1939 = vrot.slane %v1926, %v1938
    %v1940 = vlaneseq
    %v1941 = vshrl.u32 %v1940, 7
    %v1942 = vsub.s32 3, %v1941
    %v1943 = vrot.slane %v1926, %v1942
    %1948 = vmatprep.subr.mxu0 %v1542
    %1949 = vmatpush1.msra.mxu0 %v1541
    %1950 = vmatprep.subr.mxu0 %v1546
    %1951 = vmatpush1.msra.mxu0 %v1545
    %1952 = vmatprep.subr.mxu0 %v1550
    %1953 = vmatpush1.msra.mxu0 %v1549
    %1954 = vmatprep.subr.mxu0 %v1554
    %1955 = vmatpush1.msra.mxu0 %v1553
    %1956 = vmatprep.subr.mxu0 %v1558
    %1957 = vmatpush1.msra.mxu0 %v1557
    %1958 = vmatprep.subr.mxu0 %v1562
    %1959 = vmatpush1.msra.mxu0 %v1561
    %1960 = vmatprep.subr.mxu0 %v1566
    %1961 = vmatpush1.msra.mxu0 %v1565
    %1962 = vmatprep.subr.mxu0 %v1570
    %1963 = vmatpush1.msra.mxu0 %v1569
    %1964 = vmatprep.subr.mxu0 %v1574
    %1965 = vmatpush1.msra.mxu0 %v1573
    %1966 = vmatprep.subr.mxu0 %v1578
    %1967 = vmatpush1.msra.mxu0 %v1577
    %1968 = vmatprep.subr.mxu0 %v1582
    %1969 = vmatpush1.msra.mxu0 %v1581
    %1970 = vmatprep.subr.mxu0 %v1586
    %1971 = vmatpush1.msra.mxu0 %v1585
    %1972 = vmatprep.subr.mxu0 %v1590
    %1973 = vmatpush1.msra.mxu0 %v1589
    %1974 = vmatprep.subr.mxu0 %v1594
    %1975 = vmatpush1.msra.mxu0 %v1593
    %1976 = vmatprep.subr.mxu0 %v1598
    %1977 = vmatpush1.msra.mxu0 %v1597
    %1978 = vmatprep.subr.mxu0 %v1602
    %1979 = vmatpush1.msra.mxu0 %v1601
    %1980 = vmatprep.subr.mxu0 %v1606
    %1981 = vmatpush1.msra.mxu0 %v1605
    %1982 = vmatprep.subr.mxu0 %v1610
    %1983 = vmatpush1.msra.mxu0 %v1609
    %1984 = vmatprep.subr.mxu0 %v1614
    %1985 = vmatpush1.msra.mxu0 %v1613
    %1986 = vmatprep.subr.mxu0 %v1618
    %1987 = vmatpush1.msra.mxu0 %v1617
    %1988 = vmatprep.subr.mxu0 %v1622
    %1989 = vmatpush1.msra.mxu0 %v1621
    %1990 = vmatprep.subr.mxu0 %v1626
    %1991 = vmatpush1.msra.mxu0 %v1625
    %1992 = vmatprep.subr.mxu0 %v1630
    %1993 = vmatpush1.msra.mxu0 %v1629
    %1994 = vmatprep.subr.mxu0 %v1634
    %1995 = vmatpush1.msra.mxu0 %v1633
    %1996 = vmatprep.subr.mxu0 %v1638
    %1997 = vmatpush1.msra.mxu0 %v1637
    %1998 = vmatprep.subr.mxu0 %v1642
    %1999 = vmatpush1.msra.mxu0 %v1641
    %2000 = vmatprep.subr.mxu0 %v1646
    %2001 = vmatpush1.msra.mxu0 %v1645
    %2002 = vmatprep.subr.mxu0 %v1650
    %2003 = vmatpush1.msra.mxu0 %v1649
    %2004 = vmatprep.subr.mxu0 %v1654
    %2005 = vmatpush1.msra.mxu0 %v1653
    %2006 = vmatprep.subr.mxu0 %v1658
    %2007 = vmatpush1.msra.mxu0 %v1657
    %2008 = vmatprep.subr.mxu0 %v1662
    %2009 = vmatpush1.msra.mxu0 %v1661
    %2010 = vmatprep.subr.mxu0 %v1666
    %2011 = vmatpush1.msra.mxu0 %v1665
    %2012 = vmatprep.mubr.f32.mxu0 %v1528
    %2013 = vmatmul.mubr.f32.gmra.mrb[0].mxu0 %v1520
    %v2014 = vpop.f32.mrb[0].mxu0
    %v2015 = vadd.f32 %v1931, %v2014
    %v2016 = vpop.f32.mrb[0].mxu0
    %v2017 = vadd.f32 %v1935, %v2016
    %2018 = vdwg.mxu0
    %2019 = vmatprep.subr.mxu0 %v1670
    %2020 = vmatpush1.msra.mxu0 %v1669
    %2021 = vmatprep.subr.mxu0 %v1674
    %2022 = vmatpush1.msra.mxu0 %v1673
    %2023 = vmatprep.subr.mxu0 %v1678
    %2024 = vmatpush1.msra.mxu0 %v1677
    %2025 = vmatprep.subr.mxu0 %v1682
    %2026 = vmatpush1.msra.mxu0 %v1681
    %2027 = vmatprep.subr.mxu0 %v1686
    %2028 = vmatpush1.msra.mxu0 %v1685
    %2029 = vmatprep.subr.mxu0 %v1690
    %2030 = vmatpush1.msra.mxu0 %v1689
    %2031 = vmatprep.subr.mxu0 %v1694
    %2032 = vmatpush1.msra.mxu0 %v1693
    %2033 = vmatprep.subr.mxu0 %v1698
    %2034 = vmatpush1.msra.mxu0 %v1697
    %2035 = vmatprep.subr.mxu0 %v1702
    %2036 = vmatpush1.msra.mxu0 %v1701
    %2037 = vmatprep.subr.mxu0 %v1706
    %2038 = vmatpush1.msra.mxu0 %v1705
    %2039 = vmatprep.subr.mxu0 %v1710
    %2040 = vmatpush1.msra.mxu0 %v1709
    %2041 = vmatprep.subr.mxu0 %v1714
    %2042 = vmatpush1.msra.mxu0 %v1713
    %2043 = vmatprep.subr.mxu0 %v1718
    %2044 = vmatpush1.msra.mxu0 %v1717
    %2045 = vmatprep.subr.mxu0 %v1722
    %2046 = vmatpush1.msra.mxu0 %v1721
    %2047 = vmatprep.subr.mxu0 %v1726
    %2048 = vmatpush1.msra.mxu0 %v1725
    %2049 = vmatprep.subr.mxu0 %v1730
    %2050 = vmatpush1.msra.mxu0 %v1729
    %2051 = vmatprep.subr.mxu0 %v1734
    %2052 = vmatpush1.msra.mxu0 %v1733
    %2053 = vmatprep.subr.mxu0 %v1738
    %2054 = vmatpush1.msra.mxu0 %v1737
    %2055 = vmatprep.subr.mxu0 %v1742
    %2056 = vmatpush1.msra.mxu0 %v1741
    %2057 = vmatprep.subr.mxu0 %v1746
    %2058 = vmatpush1.msra.mxu0 %v1745
    %2059 = vmatprep.subr.mxu0 %v1750
    %2060 = vmatpush1.msra.mxu0 %v1749
    %2061 = vmatprep.subr.mxu0 %v1754
    %2062 = vmatpush1.msra.mxu0 %v1753
    %2063 = vmatprep.subr.mxu0 %v1758
    %2064 = vmatpush1.msra.mxu0 %v1757
    %2065 = vmatprep.subr.mxu0 %v1762
    %2066 = vmatpush1.msra.mxu0 %v1761
    %2067 = vmatprep.subr.mxu0 %v1766
    %2068 = vmatpush1.msra.mxu0 %v1765
    %2069 = vmatprep.subr.mxu0 %v1770
    %2070 = vmatpush1.msra.mxu0 %v1769
    %2071 = vmatprep.subr.mxu0 %v1774
    %2072 = vmatpush1.msra.mxu0 %v1773
    %2073 = vmatprep.subr.mxu0 %v1778
    %2074 = vmatpush1.msra.mxu0 %v1777
    %2075 = vmatprep.subr.mxu0 %v1782
    %2076 = vmatpush1.msra.mxu0 %v1781
    %2077 = vmatprep.subr.mxu0 %v1786
    %2078 = vmatpush1.msra.mxu0 %v1785
    %2079 = vmatprep.subr.mxu0 %v1790
    %2080 = vmatpush1.msra.mxu0 %v1789
    %2081 = vmatprep.subr.mxu0 %v1794
    %2082 = vmatpush1.msra.mxu0 %v1793
    %2083 = vmatprep.mubr.f32.mxu0 %v1536
    %2084 = vmatmul.mubr.f32.gmra.mrb[0].mxu0 %v1531
    %v2085 = vpop.f32.mrb[0].mxu0
    %v2086 = vadd.f32 %v2015, %v2085
    %v2087 = vpop.f32.mrb[0].mxu0
    %v2088 = vadd.f32 %v2017, %v2087
    %2089 = vdwg.mxu0
    %2090 = vmatprep.subr.mxu0 %v1798
    %2091 = vmatpush1.msra.mxu0 %v1797
    %2092 = vmatprep.subr.mxu0 %v1802
    %2093 = vmatpush1.msra.mxu0 %v1801
    %2094 = vmatprep.subr.mxu0 %v1806
    %2095 = vmatpush1.msra.mxu0 %v1805
    %2096 = vmatprep.subr.mxu0 %v1810
    %2097 = vmatpush1.msra.mxu0 %v1809
    %2098 = vmatprep.subr.mxu0 %v1814
    %2099 = vmatpush1.msra.mxu0 %v1813
    %2100 = vmatprep.subr.mxu0 %v1818
    %2101 = vmatpush1.msra.mxu0 %v1817
    %2102 = vmatprep.subr.mxu0 %v1822
    %2103 = vmatpush1.msra.mxu0 %v1821
    %2104 = vmatprep.subr.mxu0 %v1826
    %2105 = vmatpush1.msra.mxu0 %v1825
    %2106 = vmatprep.subr.mxu0 %v1830
    %2107 = vmatpush1.msra.mxu0 %v1829
    %2108 = vmatprep.subr.mxu0 %v1834
    %2109 = vmatpush1.msra.mxu0 %v1833
    %2110 = vmatprep.subr.mxu0 %v1838
    %2111 = vmatpush1.msra.mxu0 %v1837
    %2112 = vmatprep.subr.mxu0 %v1842
    %2113 = vmatpush1.msra.mxu0 %v1841
    %2114 = vmatprep.subr.mxu0 %v1846
    %2115 = vmatpush1.msra.mxu0 %v1845
    %2116 = vmatprep.subr.mxu0 %v1850
    %2117 = vmatpush1.msra.mxu0 %v1849
    %2118 = vmatprep.subr.mxu0 %v1854
    %2119 = vmatpush1.msra.mxu0 %v1853
    %2120 = vmatprep.subr.mxu0 %v1858
    %2121 = vmatpush1.msra.mxu0 %v1857
    %2122 = vmatprep.subr.mxu0 %v1862
    %2123 = vmatpush1.msra.mxu0 %v1861
    %2124 = vmatprep.subr.mxu0 %v1866
    %2125 = vmatpush1.msra.mxu0 %v1865
    %2126 = vmatprep.subr.mxu0 %v1870
    %2127 = vmatpush1.msra.mxu0 %v1869
    %2128 = vmatprep.subr.mxu0 %v1874
    %2129 = vmatpush1.msra.mxu0 %v1873
    %2130 = vmatprep.subr.mxu0 %v1878
    %2131 = vmatpush1.msra.mxu0 %v1877
    %2132 = vmatprep.subr.mxu0 %v1882
    %2133 = vmatpush1.msra.mxu0 %v1881
    %2134 = vmatprep.subr.mxu0 %v1886
    %2135 = vmatpush1.msra.mxu0 %v1885
    %2136 = vmatprep.subr.mxu0 %v1890
    %2137 = vmatpush1.msra.mxu0 %v1889
    %2138 = vmatprep.subr.mxu0 %v1894
    %2139 = vmatpush1.msra.mxu0 %v1893
    %2140 = vmatprep.subr.mxu0 %v1898
    %2141 = vmatpush1.msra.mxu0 %v1897
    %2142 = vmatprep.subr.mxu0 %v1902
    %2143 = vmatpush1.msra.mxu0 %v1901
    %2144 = vmatprep.subr.mxu0 %v1906
    %2145 = vmatpush1.msra.mxu0 %v1905
    %2146 = vmatprep.subr.mxu0 %v1910
    %2147 = vmatpush1.msra.mxu0 %v1909
    %2148 = vmatprep.subr.mxu0 %v1914
    %2149 = vmatpush1.msra.mxu0 %v1913
    %2150 = vmatprep.subr.mxu0 %v1918
    %2151 = vmatpush1.msra.mxu0 %v1917
    %2152 = vmatprep.subr.mxu0 %v1922
    %2153 = vmatpush1.msra.mxu0 %v1921
    %2154 = vmatprep.mubr.f32.mxu0 %v1522
    %2155 = vmatmul.mubr.f32.gmra.mrb[0].mxu0 %v1539
    %v2156 = vpop.f32.mrb[0].mxu0
    %v2157 = vadd.f32 %v2086, %v2156
    %v2158 = vpop.f32.mrb[0].mxu0
    %v2159 = vadd.f32 %v2088, %v2158
    %2160 = vdwg.mxu0
    %2161 = vmatprep.subr.mxu0 %v1544
    %2162 = vmatpush1.msra.mxu0 %v1543
    %2163 = vmatprep.subr.mxu0 %v1548
    %2164 = vmatpush1.msra.mxu0 %v1547
    %2165 = vmatprep.subr.mxu0 %v1552
    %2166 = vmatpush1.msra.mxu0 %v1551
    %2167 = vmatprep.subr.mxu0 %v1556
    %2168 = vmatpush1.msra.mxu0 %v1555
    %2169 = vmatprep.subr.mxu0 %v1560
    %2170 = vmatpush1.msra.mxu0 %v1559
    %2171 = vmatprep.subr.mxu0 %v1564
    %2172 = vmatpush1.msra.mxu0 %v1563
    %2173 = vmatprep.subr.mxu0 %v1568
    %2174 = vmatpush1.msra.mxu0 %v1567
    %2175 = vmatprep.subr.mxu0 %v1572
    %2176 = vmatpush1.msra.mxu0 %v1571
    %2177 = vmatprep.subr.mxu0 %v1576
    %2178 = vmatpush1.msra.mxu0 %v1575
    %2179 = vmatprep.subr.mxu0 %v1580
    %2180 = vmatpush1.msra.mxu0 %v1579
    %2181 = vmatprep.subr.mxu0 %v1584
    %2182 = vmatpush1.msra.mxu0 %v1583
    %2183 = vmatprep.subr.mxu0 %v1588
    %2184 = vmatpush1.msra.mxu0 %v1587
    %2185 = vmatprep.subr.mxu0 %v1592
    %2186 = vmatpush1.msra.mxu0 %v1591
    %2187 = vmatprep.subr.mxu0 %v1596
    %2188 = vmatpush1.msra.mxu0 %v1595
    %2189 = vmatprep.subr.mxu0 %v1600
    %2190 = vmatpush1.msra.mxu0 %v1599
    %2191 = vmatprep.subr.mxu0 %v1604
    %2192 = vmatpush1.msra.mxu0 %v1603
    %2193 = vmatprep.subr.mxu0 %v1608
    %2194 = vmatpush1.msra.mxu0 %v1607
    %2195 = vmatprep.subr.mxu0 %v1612
    %2196 = vmatpush1.msra.mxu0 %v1611
    %2197 = vmatprep.subr.mxu0 %v1616
    %2198 = vmatpush1.msra.mxu0 %v1615
    %2199 = vmatprep.subr.mxu0 %v1620
    %2200 = vmatpush1.msra.mxu0 %v1619
    %2201 = vmatprep.subr.mxu0 %v1624
    %2202 = vmatpush1.msra.mxu0 %v1623
    %2203 = vmatprep.subr.mxu0 %v1628
    %2204 = vmatpush1.msra.mxu0 %v1627
    %2205 = vmatprep.subr.mxu0 %v1632
    %2206 = vmatpush1.msra.mxu0 %v1631
    %2207 = vmatprep.subr.mxu0 %v1636
    %2208 = vmatpush1.msra.mxu0 %v1635
    %2209 = vmatprep.subr.mxu0 %v1640
    %2210 = vmatpush1.msra.mxu0 %v1639
    %2211 = vmatprep.subr.mxu0 %v1644
    %2212 = vmatpush1.msra.mxu0 %v1643
    %2213 = vmatprep.subr.mxu0 %v1648
    %2214 = vmatpush1.msra.mxu0 %v1647
    %2215 = vmatprep.subr.mxu0 %v1652
    %2216 = vmatpush1.msra.mxu0 %v1651
    %2217 = vmatprep.subr.mxu0 %v1656
    %2218 = vmatpush1.msra.mxu0 %v1655
    %2219 = vmatprep.subr.mxu0 %v1660
    %2220 = vmatpush1.msra.mxu0 %v1659
    %2221 = vmatprep.subr.mxu0 %v1664
    %2222 = vmatpush1.msra.mxu0 %v1663
    %2223 = vmatprep.subr.mxu0 %v1668
    %2224 = vmatpush1.msra.mxu0 %v1667
    %2225 = vmatprep.mubr.f32.mxu0 %v1528
    %2226 = vmatmul.mubr.f32.gmra.mrb[0].mxu0 %v1520
    %v2227 = vpop.f32.mrb[0].mxu0
    %v2228 = vadd.f32 %v1939, %v2227
    %v2229 = vpop.f32.mrb[0].mxu0
    %v2230 = vadd.f32 %v1943, %v2229
    %2231 = vdwg.mxu0
    %2232 = vmatprep.subr.mxu0 %v1672
    %2233 = vmatpush1.msra.mxu0 %v1671
    %2234 = vmatprep.subr.mxu0 %v1676
    %2235 = vmatpush1.msra.mxu0 %v1675
    %2236 = vmatprep.subr.mxu0 %v1680
    %2237 = vmatpush1.msra.mxu0 %v1679
    %2238 = vmatprep.subr.mxu0 %v1684
    %2239 = vmatpush1.msra.mxu0 %v1683
    %2240 = vmatprep.subr.mxu0 %v1688
    %2241 = vmatpush1.msra.mxu0 %v1687
    %2242 = vmatprep.subr.mxu0 %v1692
    %2243 = vmatpush1.msra.mxu0 %v1691
    %2244 = vmatprep.subr.mxu0 %v1696
    %2245 = vmatpush1.msra.mxu0 %v1695
    %2246 = vmatprep.subr.mxu0 %v1700
    %2247 = vmatpush1.msra.mxu0 %v1699
    %2248 = vmatprep.subr.mxu0 %v1704
    %2249 = vmatpush1.msra.mxu0 %v1703
    %2250 = vmatprep.subr.mxu0 %v1708
    %2251 = vmatpush1.msra.mxu0 %v1707
    %2252 = vmatprep.subr.mxu0 %v1712
    %2253 = vmatpush1.msra.mxu0 %v1711
    %2254 = vmatprep.subr.mxu0 %v1716
    %2255 = vmatpush1.msra.mxu0 %v1715
    %2256 = vmatprep.subr.mxu0 %v1720
    %2257 = vmatpush1.msra.mxu0 %v1719
    %2258 = vmatprep.subr.mxu0 %v1724
    %2259 = vmatpush1.msra.mxu0 %v1723
    %2260 = vmatprep.subr.mxu0 %v1728
    %2261 = vmatpush1.msra.mxu0 %v1727
    %2262 = vmatprep.subr.mxu0 %v1732
    %2263 = vmatpush1.msra.mxu0 %v1731
    %2264 = vmatprep.subr.mxu0 %v1736
    %2265 = vmatpush1.msra.mxu0 %v1735
    %2266 = vmatprep.subr.mxu0 %v1740
    %2267 = vmatpush1.msra.mxu0 %v1739
    %2268 = vmatprep.subr.mxu0 %v1744
    %2269 = vmatpush1.msra.mxu0 %v1743
    %2270 = vmatprep.subr.mxu0 %v1748
    %2271 = vmatpush1.msra.mxu0 %v1747
    %2272 = vmatprep.subr.mxu0 %v1752
    %2273 = vmatpush1.msra.mxu0 %v1751
    %2274 = vmatprep.subr.mxu0 %v1756
    %2275 = vmatpush1.msra.mxu0 %v1755
    %2276 = vmatprep.subr.mxu0 %v1760
    %2277 = vmatpush1.msra.mxu0 %v1759
    %2278 = vmatprep.subr.mxu0 %v1764
    %2279 = vmatpush1.msra.mxu0 %v1763
    %2280 = vmatprep.subr.mxu0 %v1768
    %2281 = vmatpush1.msra.mxu0 %v1767
    %2282 = vmatprep.subr.mxu0 %v1772
    %2283 = vmatpush1.msra.mxu0 %v1771
    %2284 = vmatprep.subr.mxu0 %v1776
    %2285 = vmatpush1.msra.mxu0 %v1775
    %2286 = vmatprep.subr.mxu0 %v1780
    %2287 = vmatpush1.msra.mxu0 %v1779
    %2288 = vmatprep.subr.mxu0 %v1784
    %2289 = vmatpush1.msra.mxu0 %v1783
    %2290 = vmatprep.subr.mxu0 %v1788
    %2291 = vmatpush1.msra.mxu0 %v1787
    %2292 = vmatprep.subr.mxu0 %v1792
    %2293 = vmatpush1.msra.mxu0 %v1791
    %2294 = vmatprep.subr.mxu0 %v1796
    %2295 = vmatpush1.msra.mxu0 %v1795
    %2296 = vmatprep.mubr.f32.mxu0 %v1536
    %2297 = vmatmul.mubr.f32.gmra.mrb[0].mxu0 %v1531
    %v2298 = vpop.f32.mrb[0].mxu0
    %v2299 = vadd.f32 %v2228, %v2298
    %v2300 = vpop.f32.mrb[0].mxu0
    %v2301 = vadd.f32 %v2230, %v2300
    %2302 = vdwg.mxu0
    %2303 = vmatprep.subr.mxu0 %v1800
    %2304 = vmatpush1.msra.mxu0 %v1799
    %2305 = vmatprep.subr.mxu0 %v1804
    %2306 = vmatpush1.msra.mxu0 %v1803
    %2307 = vmatprep.subr.mxu0 %v1808
    %2308 = vmatpush1.msra.mxu0 %v1807
    %2309 = vmatprep.subr.mxu0 %v1812
    %2310 = vmatpush1.msra.mxu0 %v1811
    %2311 = vmatprep.subr.mxu0 %v1816
    %2312 = vmatpush1.msra.mxu0 %v1815
    %2313 = vmatprep.subr.mxu0 %v1820
    %2314 = vmatpush1.msra.mxu0 %v1819
    %2315 = vmatprep.subr.mxu0 %v1824
    %2316 = vmatpush1.msra.mxu0 %v1823
    %2317 = vmatprep.subr.mxu0 %v1828
    %2318 = vmatpush1.msra.mxu0 %v1827
    %2319 = vmatprep.subr.mxu0 %v1832
    %2320 = vmatpush1.msra.mxu0 %v1831
    %2321 = vmatprep.subr.mxu0 %v1836
    %2322 = vmatpush1.msra.mxu0 %v1835
    %2323 = vmatprep.subr.mxu0 %v1840
    %2324 = vmatpush1.msra.mxu0 %v1839
    %2325 = vmatprep.subr.mxu0 %v1844
    %2326 = vmatpush1.msra.mxu0 %v1843
    %2327 = vmatprep.subr.mxu0 %v1848
    %2328 = vmatpush1.msra.mxu0 %v1847
    %2329 = vmatprep.subr.mxu0 %v1852
    %2330 = vmatpush1.msra.mxu0 %v1851
    %2331 = vmatprep.subr.mxu0 %v1856
    %2332 = vmatpush1.msra.mxu0 %v1855
    %2333 = vmatprep.subr.mxu0 %v1860
    %2334 = vmatpush1.msra.mxu0 %v1859
    %2335 = vmatprep.subr.mxu0 %v1864
    %2336 = vmatpush1.msra.mxu0 %v1863
    %2337 = vmatprep.subr.mxu0 %v1868
    %2338 = vmatpush1.msra.mxu0 %v1867
    %2339 = vmatprep.subr.mxu0 %v1872
    %2340 = vmatpush1.msra.mxu0 %v1871
    %2341 = vmatprep.subr.mxu0 %v1876
    %2342 = vmatpush1.msra.mxu0 %v1875
    %2343 = vmatprep.subr.mxu0 %v1880
    %2344 = vmatpush1.msra.mxu0 %v1879
    %2345 = vmatprep.subr.mxu0 %v1884
    %2346 = vmatpush1.msra.mxu0 %v1883
    %2347 = vmatprep.subr.mxu0 %v1888
    %2348 = vmatpush1.msra.mxu0 %v1887
    %2349 = vmatprep.subr.mxu0 %v1892
    %2350 = vmatpush1.msra.mxu0 %v1891
    %2351 = vmatprep.subr.mxu0 %v1896
    %2352 = vmatpush1.msra.mxu0 %v1895
    %2353 = vmatprep.subr.mxu0 %v1900
    %2354 = vmatpush1.msra.mxu0 %v1899
    %2355 = vmatprep.subr.mxu0 %v1904
    %2356 = vmatpush1.msra.mxu0 %v1903
    %2357 = vmatprep.subr.mxu0 %v1908
    %2358 = vmatpush1.msra.mxu0 %v1907
    %2359 = vmatprep.subr.mxu0 %v1912
    %2360 = vmatpush1.msra.mxu0 %v1911
    %2361 = vmatprep.subr.mxu0 %v1916
    %2362 = vmatpush1.msra.mxu0 %v1915
    %2363 = vmatprep.subr.mxu0 %v1920
    %2364 = vmatpush1.msra.mxu0 %v1919
    %2365 = vmatprep.subr.mxu0 %v1924
    %2366 = vmatpush1.msra.mxu0 %v1923
    %2367 = vmatprep.mubr.f32.mxu0 %v1522
    %2368 = vmatmul.mubr.f32.gmra.mrb[0].mxu0 %v1539
    %v2369 = vpop.f32.mrb[0].mxu0
    %v2370 = vadd.f32 %v2299, %v2369
    %v2371 = vpop.f32.mrb[0].mxu0
    %v2372 = vadd.f32 %v2301, %v2371
    %2373 = vdwg.mxu0
    %v2374 = vmax.f32 %v2157, 0.0
    %v2375 = vmax.f32 %v2159, 0.0
    %v2376 = vmax.f32 %v2370, 0.0
    %v2377 = vmax.f32 %v2372, 0.0
    %v2378 = vmax.f32 %v2374, %v2375
    %v2379 = vmax.f32 %v2376, %v2377
    %v2380 = vmax.f32 %v2378, %v2379
    %v2382 = vrot.slane %v2380, 2
    %v2384 = vrot.slane %v2380, 4
    %v2386 = vld [vmem:[%s1] sm:$0x3]
    %v2387 = vld [vmem:[%s3] sm:$0xff]
    %v2388 = vld [vmem:[%s3 + $0x8] sm:$0xff]
    %v2389 = vld [vmem:[%s3 + $0x10] sm:$0xff]
    %v2390 = vld [vmem:[%s3 + $0x18] sm:$0xff]
    %v2391 = vld [vmem:[%s3 + $0x20] sm:$0xff]
    %v2392 = vld [vmem:[%s3 + $0x28] sm:$0xff]
    %v2393 = vld [vmem:[%s3 + $0x30] sm:$0xff]
    %v2394 = vld [vmem:[%s3 + $0x38] sm:$0xff]
    %v2395 = vld [vmem:[%s3 + $0x40] sm:$0xff]
    %v2396 = vld [vmem:[%s3 + $0x48] sm:$0xff]
    %v2397 = vld [vmem:[%s3 + $0x50] sm:$0xff]
    %v2398 = vld [vmem:[%s3 + $0x58] sm:$0xff]
    %v2399 = vld [vmem:[%s3 + $0x60] sm:$0xff]
    %v2400 = vld [vmem:[%s3 + $0x68] sm:$0xff]
    %v2401 = vld [vmem:[%s3 + $0x70] sm:$0xff]
    %v2402 = vld [vmem:[%s3 + $0x78] sm:$0xff]
    %v2403 = vld [vmem:[%s3 + $0x80] sm:$0xff]
    %v2404 = vld [vmem:[%s3 + $0x88] sm:$0xff]
    %v2405 = vld [vmem:[%s3 + $0x90] sm:$0xff]
    %v2406 = vld [vmem:[%s3 + $0x98] sm:$0xff]
    %v2407 = vld [vmem:[%s3 + $0xa0] sm:$0xff]
    %v2408 = vld [vmem:[%s3 + $0xa8] sm:$0xff]
    %v2409 = vld [vmem:[%s3 + $0xb0] sm:$0xff]
    %v2410 = vld [vmem:[%s3 + $0xb8] sm:$0xff]
    %v2411 = vld [vmem:[%s3 + $0xc0] sm:$0xff]
    %v2412 = vld [vmem:[%s3 + $0xc8] sm:$0xff]
    %v2413 = vld [vmem:[%s3 + $0xd0] sm:$0xff]
    %v2414 = vld [vmem:[%s3 + $0xd8] sm:$0xff]
    %v2415 = vld [vmem:[%s3 + $0xe0] sm:$0xff]
    %v2416 = vld [vmem:[%s3 + $0xe8] sm:$0xff]
    %v2417 = vld [vmem:[%s3 + $0xf0] sm:$0xff]
    %v2418 = vld [vmem:[%s3 + $0xf8] sm:$0xff]
    %v2419 = vld [vmem:[%s3 + $0x100] sm:$0xff]
    %v2420 = vld [vmem:[%s3 + $0x108] sm:$0xff]
    %v2421 = vld [vmem:[%s3 + $0x110] sm:$0xff]
    %v2422 = vld [vmem:[%s3 + $0x118] sm:$0xff]
    %v2423 = vld [vmem:[%s3 + $0x120] sm:$0xff]
    %v2424 = vld [vmem:[%s3 + $0x128] sm:$0xff]
    %v2425 = vld [vmem:[%s3 + $0x130] sm:$0xff]
    %v2426 = vld [vmem:[%s3 + $0x138] sm:$0xff]
    %v2427 = vld [vmem:[%s3 + $0x140] sm:$0xff]
    %v2428 = vld [vmem:[%s3 + $0x148] sm:$0xff]
    %v2429 = vld [vmem:[%s3 + $0x150] sm:$0xff]
    %v2430 = vld [vmem:[%s3 + $0x158] sm:$0xff]
    %v2431 = vld [vmem:[%s3 + $0x160] sm:$0xff]
    %v2432 = vld [vmem:[%s3 + $0x168] sm:$0xff]
    %v2433 = vld [vmem:[%s3 + $0x170] sm:$0xff]
    %v2434 = vld [vmem:[%s3 + $0x178] sm:$0xff]
    %v2435 = vld [vmem:[%s3 + $0x180] sm:$0xff]
    %v2436 = vld [vmem:[%s3 + $0x188] sm:$0xff]
    %v2437 = vld [vmem:[%s3 + $0x190] sm:$0xff]
    %v2438 = vld [vmem:[%s3 + $0x198] sm:$0xff]
    %v2439 = vld [vmem:[%s3 + $0x1a0] sm:$0xff]
    %v2440 = vld [vmem:[%s3 + $0x1a8] sm:$0xff]
    %v2441 = vld [vmem:[%s3 + $0x1b0] sm:$0xff]
    %v2442 = vld [vmem:[%s3 + $0x1b8] sm:$0xff]
    %v2443 = vld [vmem:[%s3 + $0x1c0] sm:$0xff]
    %v2444 = vld [vmem:[%s3 + $0x1c8] sm:$0xff]
    %v2445 = vld [vmem:[%s3 + $0x1d0] sm:$0xff]
    %v2446 = vld [vmem:[%s3 + $0x1d8] sm:$0xff]
    %v2447 = vld [vmem:[%s3 + $0x1e0] sm:$0xff]
    %v2448 = vld [vmem:[%s3 + $0x1e8] sm:$0xff]
    %v2449 = vld [vmem:[%s3 + $0x1f0] sm:$0xff]
    %v2450 = vld [vmem:[%s3 + $0x1f8] sm:$0xff]
    %v2451 = vld [vmem:[#allocation5 + $0x2] ss:$0 sm:$0xff]
    %2452 = vmatprep.subr.mxu0 0.0
    %2453 = vmatpush1.msra.mxu0 %v2387
    %2454 = vmatprep.subr.mxu0 0.0
    %2455 = vmatpush1.msra.mxu0 %v2388
    %2456 = vmatprep.subr.mxu0 0.0
    %2457 = vmatpush1.msra.mxu0 %v2389
    %2458 = vmatprep.subr.mxu0 0.0
    %2459 = vmatpush1.msra.mxu0 %v2390
    %2460 = vmatprep.subr.mxu0 0.0
    %2461 = vmatpush1.msra.mxu0 %v2391
    %2462 = vmatprep.subr.mxu0 0.0
    %2463 = vmatpush1.msra.mxu0 %v2392
    %2464 = vmatprep.subr.mxu0 0.0
    %2465 = vmatpush1.msra.mxu0 %v2393
    %2466 = vmatprep.subr.mxu0 0.0
    %2467 = vmatpush1.msra.mxu0 %v2394
    %2468 = vmatprep.subr.mxu0 0.0
    %2469 = vmatpush1.msra.mxu0 %v2395
    %2470 = vmatprep.subr.mxu0 0.0
    %2471 = vmatpush1.msra.mxu0 %v2396
    %2472 = vmatprep.subr.mxu0 0.0
    %2473 = vmatpush1.msra.mxu0 %v2397
    %2474 = vmatprep.subr.mxu0 0.0
    %2475 = vmatpush1.msra.mxu0 %v2398
    %2476 = vmatprep.subr.mxu0 0.0
    %2477 = vmatpush1.msra.mxu0 %v2399
    %2478 = vmatprep.subr.mxu0 0.0
    %2479 = vmatpush1.msra.mxu0 %v2400
    %2480 = vmatprep.subr.mxu0 0.0
    %2481 = vmatpush1.msra.mxu0 %v2401
    %2482 = vmatprep.subr.mxu0 0.0
    %2483 = vmatpush1.msra.mxu0 %v2402
    %2484 = vmatprep.subr.mxu0 0.0
    %2485 = vmatpush1.msra.mxu0 %v2403
    %2486 = vmatprep.subr.mxu0 0.0
    %2487 = vmatpush1.msra.mxu0 %v2404
    %2488 = vmatprep.subr.mxu0 0.0
    %2489 = vmatpush1.msra.mxu0 %v2405
    %2490 = vmatprep.subr.mxu0 0.0
    %2491 = vmatpush1.msra.mxu0 %v2406
    %2492 = vmatprep.subr.mxu0 0.0
    %2493 = vmatpush1.msra.mxu0 %v2407
    %2494 = vmatprep.subr.mxu0 0.0
    %2495 = vmatpush1.msra.mxu0 %v2408
    %2496 = vmatprep.subr.mxu0 0.0
    %2497 = vmatpush1.msra.mxu0 %v2409
    %2498 = vmatprep.subr.mxu0 0.0
    %2499 = vmatpush1.msra.mxu0 %v2410
    %2500 = vmatprep.subr.mxu0 0.0
    %2501 = vmatpush1.msra.mxu0 %v2411
    %2502 = vmatprep.subr.mxu0 0.0
    %2503 = vmatpush1.msra.mxu0 %v2412
    %2504 = vmatprep.subr.mxu0 0.0
    %2505 = vmatpush1.msra.mxu0 %v2413
    %2506 = vmatprep.subr.mxu0 0.0
    %2507 = vmatpush1.msra.mxu0 %v2414
    %2508 = vmatprep.subr.mxu0 0.0
    %2509 = vmatpush1.msra.mxu0 %v2415
    %2510 = vmatprep.subr.mxu0 0.0
    %2511 = vmatpush1.msra.mxu0 %v2416
    %2512 = vmatprep.subr.mxu0 0.0
    %2513 = vmatpush1.msra.mxu0 %v2417
    %2514 = vmatprep.subr.mxu0 0.0
    %2515 = vmatpush1.msra.mxu0 %v2418
    %2516 = vmatprep.mubr.f32.mxu0 %v2382
    %2517 = vmatmul.mubr.f32.gmra.mrb[0].mxu0 %v2380
    %v2518 = vpop.f32.mrb[0].mxu0
    %v2519 = vadd.f32 %v2451, %v2518
    %v2520 = vpop.f32.mrb[0].mxu0
    %2521 = vdwg.mxu0
    %2522 = vmatprep.subr.mxu0 0.0
    %2523 = vmatpush1.msra.mxu0 %v2419
    %2524 = vmatprep.subr.mxu0 0.0
    %2525 = vmatpush1.msra.mxu0 %v2420
    %2526 = vmatprep.subr.mxu0 0.0
    %2527 = vmatpush1.msra.mxu0 %v2421
    %2528 = vmatprep.subr.mxu0 0.0
    %2529 = vmatpush1.msra.mxu0 %v2422
    %2530 = vmatprep.subr.mxu0 0.0
    %2531 = vmatpush1.msra.mxu0 %v2423
    %2532 = vmatprep.subr.mxu0 0.0
    %2533 = vmatpush1.msra.mxu0 %v2424
    %2534 = vmatprep.subr.mxu0 0.0
    %2535 = vmatpush1.msra.mxu0 %v2425
    %2536 = vmatprep.subr.mxu0 0.0
    %2537 = vmatpush1.msra.mxu0 %v2426
    %2538 = vmatprep.subr.mxu0 0.0
    %2539 = vmatpush1.msra.mxu0 %v2427
    %2540 = vmatprep.subr.mxu0 0.0
    %2541 = vmatpush1.msra.mxu0 %v2428
    %2542 = vmatprep.subr.mxu0 0.0
    %2543 = vmatpush1.msra.mxu0 %v2429
    %2544 = vmatprep.subr.mxu0 0.0
    %2545 = vmatpush1.msra.mxu0 %v2430
    %2546 = vmatprep.subr.mxu0 0.0
    %2547 = vmatpush1.msra.mxu0 %v2431
    %2548 = vmatprep.subr.mxu0 0.0
    %2549 = vmatpush1.msra.mxu0 %v2432
    %2550 = vmatprep.subr.mxu0 0.0
    %2551 = vmatpush1.msra.mxu0 %v2433
    %2552 = vmatprep.subr.mxu0 0.0
    %2553 = vmatpush1.msra.mxu0 %v2434
    %2554 = vmatprep.subr.mxu0 0.0
    %2555 = vmatpush1.msra.mxu0 %v2435
    %2556 = vmatprep.subr.mxu0 0.0
    %2557 = vmatpush1.msra.mxu0 %v2436
    %2558 = vmatprep.subr.mxu0 0.0
    %2559 = vmatpush1.msra.mxu0 %v2437
    %2560 = vmatprep.subr.mxu0 0.0
    %2561 = vmatpush1.msra.mxu0 %v2438
    %2562 = vmatprep.subr.mxu0 0.0
    %2563 = vmatpush1.msra.mxu0 %v2439
    %2564 = vmatprep.subr.mxu0 0.0
    %2565 = vmatpush1.msra.mxu0 %v2440
    %2566 = vmatprep.subr.mxu0 0.0
    %2567 = vmatpush1.msra.mxu0 %v2441
    %2568 = vmatprep.subr.mxu0 0.0
    %2569 = vmatpush1.msra.mxu0 %v2442
    %2570 = vmatprep.subr.mxu0 0.0
    %2571 = vmatpush1.msra.mxu0 %v2443
    %2572 = vmatprep.subr.mxu0 0.0
    %2573 = vmatpush1.msra.mxu0 %v2444
    %2574 = vmatprep.subr.mxu0 0.0
    %2575 = vmatpush1.msra.mxu0 %v2445
    %2576 = vmatprep.subr.mxu0 0.0
    %2577 = vmatpush1.msra.mxu0 %v2446
    %2578 = vmatprep.subr.mxu0 0.0
    %2579 = vmatpush1.msra.mxu0 %v2447
    %2580 = vmatprep.subr.mxu0 0.0
    %2581 = vmatpush1.msra.mxu0 %v2448
    %2582 = vmatprep.subr.mxu0 0.0
    %2583 = vmatpush1.msra.mxu0 %v2449
    %2584 = vmatprep.subr.mxu0 0.0
    %2585 = vmatpush1.msra.mxu0 %v2450
    %2586 = vmatprep.mubr.f32.mxu0 %v2386
    %2587 = vmatmul.mubr.f32.gmra.mrb[0].mxu0 %v2384
    %v2588 = vpop.f32.mrb[0].mxu0
    %v2589 = vadd.f32 %v2519, %v2588
    %v2590 = vpop.f32.mrb[0].mxu0
    %2591 = vdwg.mxu0
    %v2592 = vmax.f32 %v2589, 0.0
    %v2593 = vld [vmem:[%s3 + $0x200] sm:$0xff]
    %v2594 = vld [vmem:[%s3 + $0x208] sm:$0xff]
    %v2595 = vld [vmem:[%s3 + $0x210] sm:$0xff]
    %v2596 = vld [vmem:[%s3 + $0x218] sm:$0xff]
    %v2597 = vld [vmem:[%s3 + $0x220] sm:$0xff]
    %v2598 = vld [vmem:[%s3 + $0x228] sm:$0xff]
    %v2599 = vld [vmem:[%s3 + $0x230] sm:$0xff]
    %v2600 = vld [vmem:[%s3 + $0x238] sm:$0xff]
    %v2601 = vld [vmem:[%s3 + $0x240] sm:$0xff]
    %v2602 = vld [vmem:[%s3 + $0x248] sm:$0xff]
    %v2603 = vld [vmem:[%s3 + $0x250] sm:$0xff]
    %v2604 = vld [vmem:[%s3 + $0x258] sm:$0xff]
    %v2605 = vld [vmem:[%s3 + $0x260] sm:$0xff]
    %v2606 = vld [vmem:[%s3 + $0x268] sm:$0xff]
    %v2607 = vld [vmem:[%s3 + $0x270] sm:$0xff]
    %v2608 = vld [vmem:[%s3 + $0x278] sm:$0xff]
    %v2609 = vld [vmem:[#allocation5 + $0x3] ss:$0 sm:$0xff]
    %2610 = vmatprep.subr.mxu0 0.0
    %2611 = vmatpush1.msra.mxu0 %v2593
    %2612 = vmatprep.subr.mxu0 0.0
    %2613 = vmatpush1.msra.mxu0 %v2594
    %2614 = vmatprep.subr.mxu0 0.0
    %2615 = vmatpush1.msra.mxu0 %v2595
    %2616 = vmatprep.subr.mxu0 0.0
    %2617 = vmatpush1.msra.mxu0 %v2596
    %2618 = vmatprep.subr.mxu0 0.0
    %2619 = vmatpush1.msra.mxu0 %v2597
    %2620 = vmatprep.subr.mxu0 0.0
    %2621 = vmatpush1.msra.mxu0 %v2598
    %2622 = vmatprep.subr.mxu0 0.0
    %2623 = vmatpush1.msra.mxu0 %v2599
    %2624 = vmatprep.subr.mxu0 0.0
    %2625 = vmatpush1.msra.mxu0 %v2600
    %2626 = vmatprep.subr.mxu0 0.0
    %2627 = vmatpush1.msra.mxu0 %v2601
    %2628 = vmatprep.subr.mxu0 0.0
    %2629 = vmatpush1.msra.mxu0 %v2602
    %2630 = vmatprep.subr.mxu0 0.0
    %2631 = vmatpush1.msra.mxu0 %v2603
    %2632 = vmatprep.subr.mxu0 0.0
    %2633 = vmatpush1.msra.mxu0 %v2604
    %2634 = vmatprep.subr.mxu0 0.0
    %2635 = vmatpush1.msra.mxu0 %v2605
    %2636 = vmatprep.subr.mxu0 0.0
    %2637 = vmatpush1.msra.mxu0 %v2606
    %2638 = vmatprep.subr.mxu0 0.0
    %2639 = vmatpush1.msra.mxu0 %v2607
    %2640 = vmatprep.subr.mxu0 0.0
    %2641 = vmatpush1.msra.mxu0 %v2608
    %2642 = vmatprep.subr.mxu0 0.0
    %2643 = vmatpush1.msra.mxu0 0.0
    %2644 = vmatprep.subr.mxu0 0.0
    %2645 = vmatpush1.msra.mxu0 0.0
    %2646 = vmatprep.subr.mxu0 0.0
    %2647 = vmatpush1.msra.mxu0 0.0
    %2648 = vmatprep.subr.mxu0 0.0
    %2649 = vmatpush1.msra.mxu0 0.0
    %2650 = vmatprep.subr.mxu0 0.0
    %2651 = vmatpush1.msra.mxu0 0.0
    %2652 = vmatprep.subr.mxu0 0.0
    %2653 = vmatpush1.msra.mxu0 0.0
    %2654 = vmatprep.subr.mxu0 0.0
    %2655 = vmatpush1.msra.mxu0 0.0
    %2656 = vmatprep.subr.mxu0 0.0
    %2657 = vmatpush1.msra.mxu0 0.0
    %2658 = vmatprep.subr.mxu0 0.0
    %2659 = vmatpush1.msra.mxu0 0.0
    %2660 = vmatprep.subr.mxu0 0.0
    %2661 = vmatpush1.msra.mxu0 0.0
    %2662 = vmatprep.subr.mxu0 0.0
    %2663 = vmatpush1.msra.mxu0 0.0
    %2664 = vmatprep.subr.mxu0 0.0
    %2665 = vmatpush1.msra.mxu0 0.0
    %2666 = vmatprep.subr.mxu0 0.0
    %2667 = vmatpush1.msra.mxu0 0.0
    %2668 = vmatprep.subr.mxu0 0.0
    %2669 = vmatpush1.msra.mxu0 0.0
    %2670 = vmatprep.subr.mxu0 0.0
    %2671 = vmatpush1.msra.mxu0 0.0
    %2672 = vmatprep.subr.mxu0 0.0
    %2673 = vmatpush1.msra.mxu0 0.0
    %2674 = vmatprep.mubr.f32.mxu0 0.0
    %2675 = vmatmul.mubr.f32.gmra.mrb[0].mxu0 %v2592
    %v2676 = vpop.f32.mrb[0].mxu0
    %v2677 = vadd.f32 %v2609, %v2676
    %v2678 = vpop.f32.mrb[0].mxu0
    %2679 = vdwg.mxu0
    %v2680 = vmax.f32 %v2677, 0.0
    %2682 = vset.pattern.permute.xlu0 120
    %2683 = vperm.xlu0 %2682, %v2592
    %v2684 = vpop.permute.xlu0 %2683
    %v2686 = vmul.f32 %v2684, %v2680
    %2687 = vset.pattern.permute.xlu0 121
    %2688 = vperm.xlu0 %2687, %v2592
    %v2689 = vpop.permute.xlu0 %2688
    %v2691 = vmul.f32 %v2689, %v2680
    %2692 = vset.pattern.permute.xlu0 122
    %2693 = vperm.xlu0 %2692, %v2592
    %v2694 = vpop.permute.xlu0 %2693
    %v2696 = vmul.f32 %v2694, %v2680
    %v2697 = vld [vmem:[%s3 + $0x280] sm:$0xff]
    %v2698 = vld [vmem:[%s3 + $0x288] sm:$0xff]
    %v2699 = vld [vmem:[%s3 + $0x290] sm:$0xff]
    %v2700 = vld [vmem:[%s3 + $0x298] sm:$0xff]
    %v2701 = vld [vmem:[%s3 + $0x2a0] sm:$0xff]
    %v2702 = vld [vmem:[%s3 + $0x2a8] sm:$0xff]
    %v2703 = vld [vmem:[%s3 + $0x2b0] sm:$0xff]
    %v2704 = vld [vmem:[%s3 + $0x2b8] sm:$0xff]
    %v2705 = vld [vmem:[%s3 + $0x2c0] sm:$0xff]
    %v2706 = vld [vmem:[%s3 + $0x2c8] sm:$0xff]
    %v2707 = vld [vmem:[%s3 + $0x2d0] sm:$0xff]
    %v2708 = vld [vmem:[%s3 + $0x2d8] sm:$0xff]
    %v2709 = vld [vmem:[%s3 + $0x2e0] sm:$0xff]
    %v2710 = vld [vmem:[%s3 + $0x2e8] sm:$0xff]
    %v2711 = vld [vmem:[%s3 + $0x2f0] sm:$0xff]
    %v2712 = vld [vmem:[%s3 + $0x2f8] sm:$0xff]
    %v2713 = vld [vmem:[%s3 + $0x300] sm:$0xff]
    %v2714 = vld [vmem:[%s3 + $0x308] sm:$0xff]
    %v2715 = vld [vmem:[%s3 + $0x310] sm:$0xff]
    %v2716 = vld [vmem:[%s3 + $0x318] sm:$0xff]
    %v2717 = vld [vmem:[%s3 + $0x320] sm:$0xff]
    %v2718 = vld [vmem:[%s3 + $0x328] sm:$0xff]
    %v2719 = vld [vmem:[%s3 + $0x330] sm:$0xff]
    %v2720 = vld [vmem:[%s3 + $0x338] sm:$0xff]
    %v2721 = vld [vmem:[%s3 + $0x340] sm:$0xff]
    %v2722 = vld [vmem:[%s3 + $0x348] sm:$0xff]
    %v2723 = vld [vmem:[%s3 + $0x350] sm:$0xff]
    %v2724 = vld [vmem:[%s3 + $0x358] sm:$0xff]
    %v2725 = vld [vmem:[%s3 + $0x360] sm:$0xff]
    %v2726 = vld [vmem:[%s3 + $0x368] sm:$0xff]
    %v2727 = vld [vmem:[%s3 + $0x370] sm:$0xff]
    %v2728 = vld [vmem:[%s3 + $0x378] sm:$0xff]
    %v2729 = vld [vmem:[%s3 + $0x380] sm:$0xff]
    %v2730 = vld [vmem:[%s3 + $0x388] sm:$0xff]
    %v2731 = vld [vmem:[%s3 + $0x390] sm:$0xff]
    %v2732 = vld [vmem:[%s3 + $0x398] sm:$0xff]
    %v2733 = vld [vmem:[%s3 + $0x3a0] sm:$0xff]
    %v2734 = vld [vmem:[%s3 + $0x3a8] sm:$0xff]
    %v2735 = vld [vmem:[%s3 + $0x3b0] sm:$0xff]
    %v2736 = vld [vmem:[%s3 + $0x3b8] sm:$0xff]
    %v2737 = vld [vmem:[%s3 + $0x3c0] sm:$0xff]
    %v2738 = vld [vmem:[%s3 + $0x3c8] sm:$0xff]
    %v2739 = vld [vmem:[%s3 + $0x3d0] sm:$0xff]
    %v2740 = vld [vmem:[%s3 + $0x3d8] sm:$0xff]
    %v2741 = vld [vmem:[%s3 + $0x3e0] sm:$0xff]
    %v2742 = vld [vmem:[%s3 + $0x3e8] sm:$0xff]
    %v2743 = vld [vmem:[%s3 + $0x3f0] sm:$0xff]
    %v2744 = vld [vmem:[%s3 + $0x3f8] sm:$0xff]
    %v2745 = vld [vmem:[#allocation5 + $0x4] ss:$0 sm:$0xff]
    %2746 = vmatprep.subr.mxu0 0.0
    %2747 = vmatpush1.msra.mxu0 %v2697
    %2748 = vmatprep.subr.mxu0 0.0
    %2749 = vmatpush1.msra.mxu0 %v2698
    %2750 = vmatprep.subr.mxu0 0.0
    %2751 = vmatpush1.msra.mxu0 %v2699
    %2752 = vmatprep.subr.mxu0 0.0
    %2753 = vmatpush1.msra.mxu0 %v2700
    %2754 = vmatprep.subr.mxu0 0.0
    %2755 = vmatpush1.msra.mxu0 %v2701
    %2756 = vmatprep.subr.mxu0 0.0
    %2757 = vmatpush1.msra.mxu0 %v2702
    %2758 = vmatprep.subr.mxu0 0.0
    %2759 = vmatpush1.msra.mxu0 %v2703
    %2760 = vmatprep.subr.mxu0 0.0
    %2761 = vmatpush1.msra.mxu0 %v2704
    %2762 = vmatprep.subr.mxu0 0.0
    %2763 = vmatpush1.msra.mxu0 %v2705
    %2764 = vmatprep.subr.mxu0 0.0
    %2765 = vmatpush1.msra.mxu0 %v2706
    %2766 = vmatprep.subr.mxu0 0.0
    %2767 = vmatpush1.msra.mxu0 %v2707
    %2768 = vmatprep.subr.mxu0 0.0
    %2769 = vmatpush1.msra.mxu0 %v2708
    %2770 = vmatprep.subr.mxu0 0.0
    %2771 = vmatpush1.msra.mxu0 %v2709
    %2772 = vmatprep.subr.mxu0 0.0
    %2773 = vmatpush1.msra.mxu0 %v2710
    %2774 = vmatprep.subr.mxu0 0.0
    %2775 = vmatpush1.msra.mxu0 %v2711
    %2776 = vmatprep.subr.mxu0 0.0
    %2777 = vmatpush1.msra.mxu0 %v2712
    %2778 = vmatprep.subr.mxu0 0.0
    %2779 = vmatpush1.msra.mxu0 %v2713
    %2780 = vmatprep.subr.mxu0 0.0
    %2781 = vmatpush1.msra.mxu0 %v2714
    %2782 = vmatprep.subr.mxu0 0.0
    %2783 = vmatpush1.msra.mxu0 %v2715
    %2784 = vmatprep.subr.mxu0 0.0
    %2785 = vmatpush1.msra.mxu0 %v2716
    %2786 = vmatprep.subr.mxu0 0.0
    %2787 = vmatpush1.msra.mxu0 %v2717
    %2788 = vmatprep.subr.mxu0 0.0
    %2789 = vmatpush1.msra.mxu0 %v2718
    %2790 = vmatprep.subr.mxu0 0.0
    %2791 = vmatpush1.msra.mxu0 %v2719
    %2792 = vmatprep.subr.mxu0 0.0
    %2793 = vmatpush1.msra.mxu0 %v2720
    %2794 = vmatprep.subr.mxu0 0.0
    %2795 = vmatpush1.msra.mxu0 %v2721
    %2796 = vmatprep.subr.mxu0 0.0
    %2797 = vmatpush1.msra.mxu0 %v2722
    %2798 = vmatprep.subr.mxu0 0.0
    %2799 = vmatpush1.msra.mxu0 %v2723
    %2800 = vmatprep.subr.mxu0 0.0
    %2801 = vmatpush1.msra.mxu0 %v2724
    %2802 = vmatprep.subr.mxu0 0.0
    %2803 = vmatpush1.msra.mxu0 %v2725
    %2804 = vmatprep.subr.mxu0 0.0
    %2805 = vmatpush1.msra.mxu0 %v2726
    %2806 = vmatprep.subr.mxu0 0.0
    %2807 = vmatpush1.msra.mxu0 %v2727
    %2808 = vmatprep.subr.mxu0 0.0
    %2809 = vmatpush1.msra.mxu0 %v2728
    %2810 = vmatprep.mubr.f32.mxu0 %v2691
    %2811 = vmatmul.mubr.f32.gmra.mrb[0].mxu0 %v2686
    %v2812 = vpop.f32.mrb[0].mxu0
    %v2813 = vadd.f32 %v2745, %v2812
    %v2814 = vpop.f32.mrb[0].mxu0
    %2815 = vdwg.mxu0
    %2816 = vmatprep.subr.mxu0 0.0
    %2817 = vmatpush1.msra.mxu0 %v2729
    %2818 = vmatprep.subr.mxu0 0.0
    %2819 = vmatpush1.msra.mxu0 %v2730
    %2820 = vmatprep.subr.mxu0 0.0
    %2821 = vmatpush1.msra.mxu0 %v2731
    %2822 = vmatprep.subr.mxu0 0.0
    %2823 = vmatpush1.msra.mxu0 %v2732
    %2824 = vmatprep.subr.mxu0 0.0
    %2825 = vmatpush1.msra.mxu0 %v2733
    %2826 = vmatprep.subr.mxu0 0.0
    %2827 = vmatpush1.msra.mxu0 %v2734
    %2828 = vmatprep.subr.mxu0 0.0
    %2829 = vmatpush1.msra.mxu0 %v2735
    %2830 = vmatprep.subr.mxu0 0.0
    %2831 = vmatpush1.msra.mxu0 %v2736
    %2832 = vmatprep.subr.mxu0 0.0
    %2833 = vmatpush1.msra.mxu0 %v2737
    %2834 = vmatprep.subr.mxu0 0.0
    %2835 = vmatpush1.msra.mxu0 %v2738
    %2836 = vmatprep.subr.mxu0 0.0
    %2837 = vmatpush1.msra.mxu0 %v2739
    %2838 = vmatprep.subr.mxu0 0.0
    %2839 = vmatpush1.msra.mxu0 %v2740
    %2840 = vmatprep.subr.mxu0 0.0
    %2841 = vmatpush1.msra.mxu0 %v2741
    %2842 = vmatprep.subr.mxu0 0.0
    %2843 = vmatpush1.msra.mxu0 %v2742
    %2844 = vmatprep.subr.mxu0 0.0
    %2845 = vmatpush1.msra.mxu0 %v2743
    %2846 = vmatprep.subr.mxu0 0.0
    %2847 = vmatpush1.msra.mxu0 %v2744
    %2848 = vmatprep.subr.mxu0 0.0
    %2849 = vmatpush1.msra.mxu0 0.0
    %2850 = vmatprep.subr.mxu0 0.0
    %2851 = vmatpush1.msra.mxu0 0.0
    %2852 = vmatprep.subr.mxu0 0.0
    %2853 = vmatpush1.msra.mxu0 0.0
    %2854 = vmatprep.subr.mxu0 0.0
    %2855 = vmatpush1.msra.mxu0 0.0
    %2856 = vmatprep.subr.mxu0 0.0
    %2857 = vmatpush1.msra.mxu0 0.0
    %2858 = vmatprep.subr.mxu0 0.0
    %2859 = vmatpush1.msra.mxu0 0.0
    %2860 = vmatprep.subr.mxu0 0.0
    %2861 = vmatpush1.msra.mxu0 0.0
    %2862 = vmatprep.subr.mxu0 0.0
    %2863 = vmatpush1.msra.mxu0 0.0
    %2864 = vmatprep.subr.mxu0 0.0
    %2865 = vmatpush1.msra.mxu0 0.0
    %2866 = vmatprep.subr.mxu0 0.0
    %2867 = vmatpush1.msra.mxu0 0.0
    %2868 = vmatprep.subr.mxu0 0.0
    %2869 = vmatpush1.msra.mxu0 0.0
    %2870 = vmatprep.subr.mxu0 0.0
    %2871 = vmatpush1.msra.mxu0 0.0
    %2872 = vmatprep.subr.mxu0 0.0
    %2873 = vmatpush1.msra.mxu0 0.0
    %2874 = vmatprep.subr.mxu0 0.0
    %2875 = vmatpush1.msra.mxu0 0.0
    %2876 = vmatprep.subr.mxu0 0.0
    %2877 = vmatpush1.msra.mxu0 0.0
    %2878 = vmatprep.subr.mxu0 0.0
    %2879 = vmatpush1.msra.mxu0 0.0
    %2880 = vmatprep.mubr.f32.mxu0 0.0
    %2881 = vmatmul.mubr.f32.gmra.mrb[0].mxu0 %v2696
    %v2882 = vpop.f32.mrb[0].mxu0
    %v2883 = vadd.f32 %v2813, %v2882
    %v2884 = vpop.f32.mrb[0].mxu0
    %2885 = vdwg.mxu0
    %v2886 = vmax.f32 %v2883, 0.0
    %v2887 = vld [vmem:[%s3 + $0x400] sm:$0xff]
    %v2888 = vld [vmem:[%s3 + $0x408] sm:$0xff]
    %v2889 = vld [vmem:[%s3 + $0x410] sm:$0xff]
    %v2890 = vld [vmem:[%s3 + $0x418] sm:$0xff]
    %v2891 = vld [vmem:[%s3 + $0x420] sm:$0xff]
    %v2892 = vld [vmem:[%s3 + $0x428] sm:$0xff]
    %v2893 = vld [vmem:[%s3 + $0x430] sm:$0xff]
    %v2894 = vld [vmem:[%s3 + $0x438] sm:$0xff]
    %v2895 = vld [vmem:[%s3 + $0x440] sm:$0xff]
    %v2896 = vld [vmem:[%s3 + $0x448] sm:$0xff]
    %v2897 = vld [vmem:[%s3 + $0x450] sm:$0xff]
    %v2898 = vld [vmem:[%s3 + $0x458] sm:$0xff]
    %v2899 = vld [vmem:[%s3 + $0x460] sm:$0xff]
    %v2900 = vld [vmem:[%s3 + $0x468] sm:$0xff]
    %v2901 = vld [vmem:[%s3 + $0x470] sm:$0xff]
    %v2902 = vld [vmem:[%s3 + $0x478] sm:$0xff]
    %v2903 = vld [vmem:[#allocation5 + $0x5] ss:$0 sm:$0xff]
    %2904 = vmatprep.subr.mxu0 0.0
    %2905 = vmatpush1.msra.mxu0 %v2887
    %2906 = vmatprep.subr.mxu0 0.0
    %2907 = vmatpush1.msra.mxu0 %v2888
    %2908 = vmatprep.subr.mxu0 0.0
    %2909 = vmatpush1.msra.mxu0 %v2889
    %2910 = vmatprep.subr.mxu0 0.0
    %2911 = vmatpush1.msra.mxu0 %v2890
    %2912 = vmatprep.subr.mxu0 0.0
    %2913 = vmatpush1.msra.mxu0 %v2891
    %2914 = vmatprep.subr.mxu0 0.0
    %2915 = vmatpush1.msra.mxu0 %v2892
    %2916 = vmatprep.subr.mxu0 0.0
    %2917 = vmatpush1.msra.mxu0 %v2893
    %2918 = vmatprep.subr.mxu0 0.0
    %2919 = vmatpush1.msra.mxu0 %v2894
    %2920 = vmatprep.subr.mxu0 0.0
    %2921 = vmatpush1.msra.mxu0 %v2895
    %2922 = vmatprep.subr.mxu0 0.0
    %2923 = vmatpush1.msra.mxu0 %v2896
    %2924 = vmatprep.subr.mxu0 0.0
    %2925 = vmatpush1.msra.mxu0 %v2897
    %2926 = vmatprep.subr.mxu0 0.0
    %2927 = vmatpush1.msra.mxu0 %v2898
    %2928 = vmatprep.subr.mxu0 0.0
    %2929 = vmatpush1.msra.mxu0 %v2899
    %2930 = vmatprep.subr.mxu0 0.0
    %2931 = vmatpush1.msra.mxu0 %v2900
    %2932 = vmatprep.subr.mxu0 0.0
    %2933 = vmatpush1.msra.mxu0 %v2901
    %2934 = vmatprep.subr.mxu0 0.0
    %2935 = vmatpush1.msra.mxu0 %v2902
    %2936 = vmatprep.subr.mxu0 0.0
    %2937 = vmatpush1.msra.mxu0 0.0
    %2938 = vmatprep.subr.mxu0 0.0
    %2939 = vmatpush1.msra.mxu0 0.0
    %2940 = vmatprep.subr.mxu0 0.0
    %2941 = vmatpush1.msra.mxu0 0.0
    %2942 = vmatprep.subr.mxu0 0.0
    %2943 = vmatpush1.msra.mxu0 0.0
    %2944 = vmatprep.subr.mxu0 0.0
    %2945 = vmatpush1.msra.mxu0 0.0
    %2946 = vmatprep.subr.mxu0 0.0
    %2947 = vmatpush1.msra.mxu0 0.0
    %2948 = vmatprep.subr.mxu0 0.0
    %2949 = vmatpush1.msra.mxu0 0.0
    %2950 = vmatprep.subr.mxu0 0.0
    %2951 = vmatpush1.msra.mxu0 0.0
    %2952 = vmatprep.subr.mxu0 0.0
    %2953 = vmatpush1.msra.mxu0 0.0
    %2954 = vmatprep.subr.mxu0 0.0
    %2955 = vmatpush1.msra.mxu0 0.0
    %2956 = vmatprep.subr.mxu0 0.0
    %2957 = vmatpush1.msra.mxu0 0.0
    %2958 = vmatprep.subr.mxu0 0.0
    %2959 = vmatpush1.msra.mxu0 0.0
    %2960 = vmatprep.subr.mxu0 0.0
    %2961 = vmatpush1.msra.mxu0 0.0
    %2962 = vmatprep.subr.mxu0 0.0
    %2963 = vmatpush1.msra.mxu0 0.0
    %2964 = vmatprep.subr.mxu0 0.0
    %2965 = vmatpush1.msra.mxu0 0.0
    %2966 = vmatprep.subr.mxu0 0.0
    %2967 = vmatpush1.msra.mxu0 0.0
    %2968 = vmatprep.mubr.f32.mxu0 0.0
    %2969 = vmatmul.mubr.f32.gmra.mrb[0].mxu0 %v2886
    %v2970 = vpop.f32.mrb[0].mxu0
    %v2971 = vadd.f32 %v2903, %v2970
    %v2972 = vpop.f32.mrb[0].mxu0
    %2973 = vdwg.mxu0
    %vm2974 = vcmask 17408
    %2975 = vst.msk [vmem:[#allocation7] sm:$0x3] %vm2974, %v2971
    // Predicated region
    $region30: #{forward_pallas.1} parent=1 // pred_check
      _
    $region31: #{forward_pallas.1} parent=1 // pred_check_branch
      %2977 = sbr.rel (0) target = $region33
    $region32: #{forward_pallas.1} parent=1 // pred_region
      %s2979 = ssub.s32 32, 32
      %2980 = vsyncadd [#allocation4], %s2979
      %s2982 = sshll.u32 [#allocation7], 4
      %s2983 = int_to_ptr.vmem [resolvable:$true] %s2982
      %2985 = dma.vmem_to_hbm [thread:$0]  %s2983, 32, %s5, [#allocation4]
    $region33: #{forward_pallas.1} parent=1 // pred_fallthru
      _
    // Predicated region
    $region34: #{forward_pallas.1} parent=1 // pred_check
      _
    $region35: #{forward_pallas.1} parent=1 // pred_check_branch
      %2987 = sbr.rel (0) target = $region37
    $region36: #{forward_pallas.1} parent=1 // pred_region
      %2988 = dma.done [#allocation4], 32
    $region37: #{forward_pallas.1} parent=1 // pred_fallthru
      _
    %2989 = vsyncpa [#allocation3], 1
    %2990 = vsyncpa [#allocation6], 1
    %2991 = vsyncpa [#allocation4], 1

</llo_original>
